<compile_context>
chip_gen: v6e
topology: v6e:2x2x1
jax: 0.10.0
libtpu: 0.0.40
codegen_flags: <defaults>
</compile_context>

<pallas_src>
import functools
import math

import jax
import jax.numpy as jnp
import numpy as np
from jax import lax
from jax.experimental import pallas as pl
from jax.experimental.pallas import tpu as pltpu


def _softplus(x):
    # identical formula used in-kernel and in the reference
    return jnp.where(x > 20.0, x, jnp.log1p(jnp.exp(x)))


# -----------------------------------------------------------------------------
# CrossScan / CrossMerge glue (VMamba convention).  The 4-direction versions
# below are only used by the pure-JAX reference; the kernel path materializes
# just the hw / wh layouts and handles the reversed directions in-kernel.
# -----------------------------------------------------------------------------
def cross_scan4(x):
    # x: (B, D, H, W) -> (B, 4, D, L)
    B, D, H, W = x.shape
    x_hw = x.reshape(B, D, H * W)
    x_wh = jnp.swapaxes(x, 2, 3).reshape(B, D, H * W)
    return jnp.stack([x_hw, x_wh, x_hw[..., ::-1], x_wh[..., ::-1]], axis=1)


def cross_merge4(ys, H, W):
    # ys: (B, 4, D, L) -> (B, D, L)
    B, K, D, L = ys.shape
    ys = ys[:, 0:2] + ys[:, 2:4][..., ::-1]
    y_wh = jnp.swapaxes(ys[:, 1].reshape(B, D, W, H), 2, 3).reshape(B, D, L)
    return ys[:, 0] + y_wh


# -----------------------------------------------------------------------------
# Main Pallas kernel: one (scan-direction k, batch b, L-chunk c) grid step.
# Cross selective scan (y_rgb uses C_e / D_2, y_e uses C_rgb / D_1).
# `reverse` (compile-time) selects forward (k=0,1) or backward (k=2,3) scan.
# -----------------------------------------------------------------------------
def _cross_ssm_kernel(reverse, N, Lc,
                      xr_ref, xe_ref, w1_ref, w2_ref, A_ref, cvec_ref,
                      yr_ref, ye_ref, h_carry):
    f32 = jnp.float32
    Dm = xr_ref.shape[0]

    # reset the carried SSM state at the start of every (k, b) sequence
    @pl.when(pl.program_id(2) == 0)
    def _init():
        h_carry[...] = jnp.zeros_like(h_carry)

    xr_bf = xr_ref[...]                                # (Dm, Lc) bf16
    xe_bf = xe_ref[...]
    xr = xr_bf.astype(f32)
    xe = xe_bf.astype(f32)

    # fused projection (bf16 in / f32 acc), one matmul per modality:
    #   rows [0:Dm]       -> folded dt path   (wdt @ wx[:R]) @ x
    #   rows [Dm:Dm+N]    -> B
    #   rows [Dm+N:Dm+2N] -> C
    xl_r = jnp.dot(w1_ref[...], xr_bf, preferred_element_type=f32)
    xl_e = jnp.dot(w2_ref[...], xe_bf, preferred_element_type=f32)

    bdt1 = cvec_ref[0]                                 # (Dm, 1) f32
    bdt2 = cvec_ref[1]
    dv1 = cvec_ref[2]
    dv2 = cvec_ref[3]

    delta_r = _softplus(xl_r[:Dm] + bdt1)              # (Dm, Lc) f32
    delta_e = _softplus(xl_e[:Dm] + bdt2)
    B_r, C_r = xl_r[Dm:Dm + N], xl_r[Dm + N:]          # (N, Lc)
    B_e, C_e = xl_e[Dm:Dm + N], xl_e[Dm + N:]
    du_r = delta_r * xr
    du_e = delta_e * xe

    # per-step recurrence coefficients, lane-dense (2*N*Dm, Lc)
    # row layout: [rgb n=0..N-1 | e n=0..N-1], Dm rows per block (matches A_ref)
    # NOTE: for very large 2*N*Dm this live tile should be sub-blocked over n.
    delta_all = jnp.concatenate([delta_r] * N + [delta_e] * N, axis=0)
    a = jnp.exp(delta_all * A_ref[...])                # one wide exp; dA in (0, 1]
    b = jnp.concatenate(
        [du_r * B_r[n:n + 1, :] for n in range(N)]
        + [du_e * B_e[n:n + 1, :] for n in range(N)], axis=0)

    # Hillis–Steele inclusive scan of the affine recurrence along lanes.
    #   forward : h[l] = a[l] * h[l-1] + b[l]
    #   reverse : h[l] = a[l] * h[l+1] + b[l]
    lane = lax.broadcasted_iota(jnp.int32, (1, Lc), 1)
    d = 1
    while d < Lc:
        if reverse:
            keep = lane <= (Lc - 1 - d)
            shift = Lc - d                             # circular roll "left" by d
        else:
            keep = lane >= d
            shift = d
        a_prev = jnp.where(keep, pltpu.roll(a, shift=shift, axis=1), 1.0)
        b_prev = jnp.where(keep, pltpu.roll(b, shift=shift, axis=1), 0.0)
        b = a * b_prev + b                             # uses the *old* a
        a = a * a_prev
        d *= 2

    # fold in the carry from previously processed chunks, then update it
    h = a * h_carry[...] + b                           # (2*N*Dm, Lc)
    h_carry[...] = h[:, 0:1] if reverse else h[:, Lc - 1:Lc]

    # cross-attention readout: y_rgb <- C_e, D_2 ; y_e <- C_rgb, D_1
    y_r = dv2 * xr
    y_e = dv1 * xe
    for n in range(N):
        y_r = y_r + h[n * Dm:(n + 1) * Dm, :] * C_e[n:n + 1, :]
        y_e = y_e + h[(N + n) * Dm:(N + n + 1) * Dm, :] * C_r[n:n + 1, :]

    yr_ref[...] = y_r.astype(yr_ref.dtype)
    ye_ref[...] = y_e.astype(ye_ref.dtype)


# -----------------------------------------------------------------------------
# Host-side weight packing (done once, outside the grid)
# -----------------------------------------------------------------------------
def _prep_weights(p):
    f32, bf16 = jnp.float32, jnp.bfloat16
    K = p["wx1"].shape[0]
    R = int(p["dt_rank"])
    N = int(p["d_state"])
    Dm = p["wdt1"].shape[1]

    def pack_proj(wx, wdt):
        # fold the dt-rank projection into x_proj: W_delta = wdt @ wx[:R]
        w_delta = jnp.einsum("kdr,krm->kdm", wdt.astype(f32), wx[:, :R, :].astype(f32))
        return jnp.concatenate([w_delta, wx[:, R:, :].astype(f32)], axis=1).astype(bf16)

    w1 = pack_proj(p["wx1"], p["wdt1"])                # (K, Dm+2N, Dm) bf16
    w2 = pack_proj(p["wx2"], p["wdt2"])

    def a_scan(alog):                                  # -> (K, N*Dm), scan row layout
        A = -jnp.exp(alog.astype(f32))                 # (K, Dm, N)
        return jnp.transpose(A, (0, 2, 1)).reshape(K, N * Dm)

    A_all = jnp.concatenate([a_scan(p["alog1"]), a_scan(p["alog2"])],
                            axis=1)[..., None]         # (K, 2N*Dm, 1) f32
    cvec = jnp.stack([p["bdt1"], p["bdt2"], p["dvec1"], p["dvec2"]],
                     axis=1).astype(f32)[..., None]    # (K, 4, Dm, 1) f32
    return w1, w2, A_all, cvec


def _run_cross_ssm(xs_rgb, xs_e, p, chunk=256):
    # xs_*: (B, 2, Dm, L) bf16 — only the hw / wh layouts.
    B, _, Dm, L = xs_rgb.shape
    N = int(p["d_state"])
    f32, bf16 = jnp.float32, jnp.bfloat16
    assert chunk % 128 == 0

    Lc = min(chunk, pl.cdiv(L, 128) * 128)
    Lpad = pl.cdiv(L, Lc) * Lc
    if Lpad != L:
        # zero padding is exact for both scan directions: dBu == 0 on the pad,
        # so the carried SSM state is unchanged across padded positions.
        pad = ((0, 0), (0, 0), (0, 0), (0, Lpad - L))
        xs_rgb = jnp.pad(xs_rgb, pad)
        xs_e = jnp.pad(xs_e, pad)
    NC = Lpad // Lc

    w1, w2, A_all, cvec = _prep_weights(p)

    def run(ksl, reverse):
        kernel = functools.partial(_cross_ssm_kernel, reverse, N, Lc)
        if reverse:
            x_map = lambda k, b, c: (b, k, 0, NC - 1 - c)   # walk chunks right->left
        else:
            x_map = lambda k, b, c: (b, k, 0, c)
        w_map3 = lambda k, b, c: (k, 0, 0)
        w_map4 = lambda k, b, c: (k, 0, 0, 0)

        grid_spec = pltpu.PrefetchScalarGridSpec(
            num_scalar_prefetch=0,
            # k outermost, b middle, chunk innermost -> per-k weights stay resident
            grid=(2, B, NC),
            in_specs=[
                pl.BlockSpec((None, None, Dm, Lc), x_map),       # x_rgb (bf16)
                pl.BlockSpec((None, None, Dm, Lc), x_map),       # x_e   (bf16)
                pl.BlockSpec((None, Dm + 2 * N, Dm), w_map3),    # packed proj rgb
                pl.BlockSpec((None, Dm + 2 * N, Dm), w_map3),    # packed proj e
                pl.BlockSpec((None, 2 * N * Dm, 1), w_map3),     # A (scan layout)
                pl.BlockSpec((None, 4, Dm, 1), w_map4),          # [bdt1,bdt2,D1,D2]
            ],
            out_specs=[
                pl.BlockSpec((None, None, Dm, Lc), x_map),
                pl.BlockSpec((None, None, Dm, Lc), x_map),
            ],
            # only the fused (rgb|e) SSM state is carried across chunks
            scratch_shapes=[pltpu.VMEM((2 * N * Dm, 1), f32)],
        )
        return pl.pallas_call(
            kernel,
            grid_spec=grid_spec,
            out_shape=(jax.ShapeDtypeStruct((B, 2, Dm, Lpad), bf16),
                       jax.ShapeDtypeStruct((B, 2, Dm, Lpad), bf16)),
            compiler_params=pltpu.CompilerParams(
                dimension_semantics=("parallel", "parallel", "arbitrary"),
                # headroom under v7x's 64 MiB VMEM; actual use is far lower
                vmem_limit_bytes=48 * 1024 * 1024),
        )(xs_rgb, xs_e, w1[ksl], w2[ksl], A_all[ksl], cvec[ksl])

    yf_r, yf_e = run(slice(0, 2), False)      # directions k = 0, 1 (forward)
    yb_r, yb_e = run(slice(2, 4), True)       # directions k = 2, 3 (reversed)
    if Lpad != L:
        yf_r, yf_e = yf_r[..., :L], yf_e[..., :L]
        yb_r, yb_e = yb_r[..., :L], yb_e[..., :L]
    return yf_r, yf_e, yb_r, yb_e


# -----------------------------------------------------------------------------
# Lane-dense LayerNorm over the last axis (literal reproduction of
# nn.LayerNorm(d_inner) applied to an NCHW tensor, which needs W == d_inner).
# g rows of width W are packed into one (rt, P = g*W >= 128) tile and the
# segmented mean/var are computed with a block-diagonal matmul on the MXU.
# -----------------------------------------------------------------------------
def _layernorm_kernel(eps, x_ref, s_ref, g_ref, b_ref, o_ref):
    x = x_ref[...].astype(jnp.float32)                 # (rt, P)
    s = s_ref[...]                                     # (P, P) block-diag averaging
    mean = jnp.dot(x, s, preferred_element_type=jnp.float32)
    xc = x - mean
    var = jnp.dot(xc * xc, s, preferred_element_type=jnp.float32)
    y = xc * lax.rsqrt(var + eps) * g_ref[...] + b_ref[...]
    o_ref[...] = y.astype(o_ref.dtype)


def _pick_row_tile(rows, target=1024):
    if rows % 8 != 0:
        return rows
    rt = min(rows, target)
    rt -= rt % 8
    while rows % rt:
        rt -= 8
    return max(rt, 8)


def layernorm_lastdim(x, gamma, beta, eps=1e-5):
    shp = x.shape
    W = shp[-1]
    rows = int(np.prod(shp[:-1]))
    g = 1
    if W < 128 and 128 % W == 0:
        for cand in (512 // W, 256 // W, 128 // W):
            if cand >= 1 and rows % cand == 0:
                g = cand
                break
    P = g * W
    rows_p = rows // g
    x2 = x.reshape(rows_p, P)
    seg = jnp.kron(jnp.eye(g, dtype=jnp.float32),
                   jnp.full((W, W), 1.0 / W, dtype=jnp.float32))     # (P, P)
    gam = jnp.tile(gamma.astype(jnp.float32), g).reshape(1, P)
    bet = jnp.tile(beta.astype(jnp.float32), g).reshape(1, P)
    rt = _pick_row_tile(rows_p)
    out = pl.pallas_call(
        functools.partial(_layernorm_kernel, eps),
        grid=(rows_p // rt,),
        in_specs=[pl.BlockSpec((rt, P), lambda i: (i, 0)),
                  pl.BlockSpec((P, P), lambda i: (0, 0)),
                  pl.BlockSpec((1, P), lambda i: (0, 0)),
                  pl.BlockSpec((1, P), lambda i: (0, 0))],
        out_specs=pl.BlockSpec((rt, P), lambda i: (i, 0)),
        out_shape=jax.ShapeDtypeStruct((rows_p, P), x.dtype),
        compiler_params=pltpu.CompilerParams(dimension_semantics=("parallel",)),
    )(x2, seg, gam, bet)
    return out.reshape(shp)


# -----------------------------------------------------------------------------
# Full forward (Pallas-backed)
# -----------------------------------------------------------------------------
def cross_mamba_attention_ssm(x_rgb, x_e, params, chunk=256):
    B, Dm, H, W = x_rgb.shape
    L = H * W
    assert W == params["ln1_g"].shape[0], \
        "LayerNorm(d_inner) on an NCHW tensor only typechecks when W == d_inner"

    # TODO(synk): the hw/wh flatten and the final (W,H)->(H,W) swap stay as
    # plain-JAX layout ops (no compute); the reversed directions never hit HBM.
    def scan2(x):
        x_hw = x.reshape(B, Dm, L)
        x_wh = jnp.swapaxes(x, 2, 3).reshape(B, Dm, L)
        return jnp.stack([x_hw, x_wh], axis=1).astype(jnp.bfloat16)

    xs_rgb = scan2(x_rgb)
    xs_e = scan2(x_e)
    yf_r, yf_e, yb_r, yb_e = _run_cross_ssm(xs_rgb, xs_e, params, chunk=chunk)

    def merge(yf, yb):
        y = yf.astype(jnp.float32) + yb.astype(jnp.float32)   # (B, 2, Dm, L)
        y_wh = jnp.swapaxes(y[:, 1].reshape(B, Dm, W, H), 2, 3).reshape(B, Dm, L)
        return (y[:, 0] + y_wh).reshape(B, Dm, H, W)

    y_rgb = merge(yf_r, yb_r)
    y_e = merge(yf_e, yb_e)
    y_rgb = layernorm_lastdim(y_rgb, params["ln1_g"], params["ln1_b"])
    y_e = layernorm_lastdim(y_e, params["ln2_g"], params["ln2_b"])
    return y_rgb, y_e


# -----------------------------------------------------------------------------
# Deterministic parameter init (mirrors the module's __init__ shapes / scheme)
# -----------------------------------------------------------------------------
def init_params(key, d_inner, d_state, dt_rank, k_group,
                dt_min=0.001, dt_max=0.1, dt_init_floor=1e-4, dt_scale=1.0):
    ks = jax.random.split(key, 6)
    C = dt_rank + 2 * d_state
    f32 = jnp.float32
    lim = 1.0 / math.sqrt(d_inner)
    # x_proj weights rounded to bf16-representable values (the kernel feeds the
    # MXU in bf16); keeps the f32 reference comparable apart from acc order.
    wx1 = jax.random.uniform(ks[0], (k_group, C, d_inner), f32, -lim, lim)
    wx2 = jax.random.uniform(ks[1], (k_group, C, d_inner), f32, -lim, lim)
    wx1 = wx1.astype(jnp.bfloat16).astype(f32)
    wx2 = wx2.astype(jnp.bfloat16).astype(f32)
    dt_std = dt_rank ** (-0.5) * dt_scale
    wdt1 = jax.random.uniform(ks[2], (k_group, d_inner, dt_rank), f32, -dt_std, dt_std)
    wdt2 = jax.random.uniform(ks[3], (k_group, d_inner, dt_rank), f32, -dt_std, dt_std)

    def dt_bias(k):
        u = jax.random.uniform(k, (k_group, d_inner), f32)
        dt = jnp.exp(u * (math.log(dt_max) - math.log(dt_min)) + math.log(dt_min))
        dt = jnp.maximum(dt, dt_init_floor)
        return dt + jnp.log(-jnp.expm1(-dt))

    bdt1 = dt_bias(ks[4])
    bdt2 = dt_bias(ks[5])
    a_log = jnp.broadcast_to(jnp.log(jnp.arange(1, d_state + 1, dtype=f32)),
                             (k_group, d_inner, d_state))
    return {
        "wx1": wx1, "wx2": wx2,
        "wdt1": wdt1, "wdt2": wdt2,
        "bdt1": bdt1, "bdt2": bdt2,
        "alog1": a_log, "alog2": a_log,
        "dvec1": jnp.ones((k_group, d_inner), f32),
        "dvec2": jnp.ones((k_group, d_inner), f32),
        "ln1_g": jnp.ones((d_inner,), f32), "ln1_b": jnp.zeros((d_inner,), f32),
        "ln2_g": jnp.ones((d_inner,), f32), "ln2_b": jnp.zeros((d_inner,), f32),
        "dt_rank": dt_rank, "d_state": d_state,
    }


# -----------------------------------------------------------------------------
# Pure-JAX reference (mirrors selective_scan_ref semantics) for validation.
# -----------------------------------------------------------------------------
def _ref_selective_scan(u, delta, A, Bmat, Cmat, Dvec, delta_bias):
    Bsz, KD, L = u.shape
    K = Bmat.shape[1]
    Din = KD // K
    N = A.shape[1]
    delta = _softplus(delta + delta_bias[None, :, None])
    Bx = jnp.repeat(Bmat, Din, axis=1)                # (B, KD, N, L)
    Cx = jnp.repeat(Cmat, Din, axis=1)
    dA = jnp.exp(jnp.einsum("bdl,dn->bdln", delta, A))
    dBu = jnp.einsum("bdl,bdnl,bdl->bdln", delta, Bx, u)

    def step(h, inp):
        dA_l, dBu_l = inp
        h = dA_l * h + dBu_l
        return h, h

    _, hs = lax.scan(step,
                     jnp.zeros((Bsz, KD, N), jnp.float32),
                     (jnp.moveaxis(dA, 2, 0), jnp.moveaxis(dBu, 2, 0)))
    y = jnp.einsum("lbdn,bdnl->bdl", hs, Cx) + Dvec[None, :, None] * u
    return y


def reference_forward(x_rgb, x_e, p):
    B, Dm, H, W = x_rgb.shape
    K = p["wx1"].shape[0]
    R, N = int(p["dt_rank"]), int(p["d_state"])
    L = H * W
    xs_r = cross_scan4(x_rgb)
    xs_e = cross_scan4(x_e)
    xl_r = jnp.einsum("kcd,bkdl->bkcl", p["wx1"], xs_r)
    xl_e = jnp.einsum("kcd,bkdl->bkcl", p["wx2"], xs_e)
    dt_r, B_r, C_r = xl_r[:, :, :R], xl_r[:, :, R:R + N], xl_r[:, :, R + N:]
    dt_e, B_e, C_e = xl_e[:, :, :R], xl_e[:, :, R:R + N], xl_e[:, :, R + N:]
    delta_r = jnp.einsum("kdr,bkrl->bkdl", p["wdt1"], dt_r).reshape(B, K * Dm, L)
    delta_e = jnp.einsum("kdr,bkrl->bkdl", p["wdt2"], dt_e).reshape(B, K * Dm, L)
    u_r = xs_r.reshape(B, K * Dm, L)
    u_e = xs_e.reshape(B, K * Dm, L)
    A_r = -jnp.exp(p["alog1"].reshape(K * Dm, N))
    A_e = -jnp.exp(p["alog2"].reshape(K * Dm, N))
    y_r = _ref_selective_scan(u_r, delta_r, A_r, B_r, C_e,
                              p["dvec2"].reshape(-1), p["bdt1"].reshape(-1))
    y_e = _ref_selective_scan(u_e, delta_e, A_e, B_e, C_r,
                              p["dvec1"].reshape(-1), p["bdt2"].reshape(-1))
    y_r = cross_merge4(y_r.reshape(B, K, Dm, L), H, W).reshape(B, Dm, H, W)
    y_e = cross_merge4(y_e.reshape(B, K, Dm, L), H, W).reshape(B, Dm, H, W)

    def ln(x, g, b, eps=1e-5):
        m = jnp.mean(x, axis=-1, keepdims=True)
        v = jnp.mean((x - m) ** 2, axis=-1, keepdims=True)
        return (x - m) / jnp.sqrt(v + eps) * g + b

    return ln(y_r, p["ln1_g"], p["ln1_b"]), ln(y_e, p["ln2_g"], p["ln2_b"])


if __name__ == "__main__":
    key = jax.random.PRNGKey(0)
    # W == d_inner so the literal nn.LayerNorm(d_inner)-on-NCHW typechecks.
    # L = H*W = 512 -> two 256-lane chunks, exercising the cross-chunk state
    # carry in both the forward and the backward scan passes.
    B, d_inner, H, W = 2, 16, 32, 16
    d_state, dt_rank, k_group = 4, 4, 4

    kx, ke, kp = jax.random.split(key, 3)
    x_rgb = jax.random.normal(kx, (B, d_inner, H, W), jnp.float32)
    x_e = jax.random.normal(ke, (B, d_inner, H, W), jnp.float32)
    # inputs rounded to bf16-representable values (kernel consumes them as bf16)
    x_rgb = x_rgb.astype(jnp.bfloat16).astype(jnp.float32)
    x_e = x_e.astype(jnp.bfloat16).astype(jnp.float32)
    params = init_params(kp, d_inner, d_state, dt_rank, k_group)

    y_rgb, y_e = cross_mamba_attention_ssm(x_rgb, x_e, params)
    jax.block_until_ready((y_rgb, y_e))

    yr_ref, ye_ref = reference_forward(x_rgb, x_e, params)
    np.testing.assert_allclose(np.asarray(y_rgb), np.asarray(yr_ref), rtol=2e-2, atol=2e-2)
    np.testing.assert_allclose(np.asarray(y_e), np.asarray(ye_ref), rtol=2e-2, atol=2e-2)
    assert y_rgb.shape == (B, d_inner, H, W) and y_e.shape == (B, d_inner, H, W)
    print("KERNEL_OK")
</pallas_src>

<mosaic_0001>
module attributes {stable_mosaic.version = 11 : i64} {
  func.func @_cross_ssm_kernel(%arg0: i32, %arg1: i32, %arg2: i32, %arg3: memref<1x1x16x256xbf16, #tpu.memory_space<vmem>>, %arg4: memref<1x1x16x256xbf16, #tpu.memory_space<vmem>>, %arg5: memref<1x24x16xbf16, #tpu.memory_space<vmem>>, %arg6: memref<1x24x16xbf16, #tpu.memory_space<vmem>>, %arg7: memref<1x128x1xf32, #tpu.memory_space<vmem>>, %arg8: memref<1x4x16x1xf32, #tpu.memory_space<vmem>>, %arg9: memref<1x1x16x256xbf16, #tpu.memory_space<vmem>>, %arg10: memref<1x1x16x256xbf16, #tpu.memory_space<vmem>>, %arg11: memref<128x1xf32, #tpu.memory_space<vmem>>) attributes {dimension_semantics = [#tpu.dimension_semantics<parallel>, #tpu.dimension_semantics<parallel>, #tpu.dimension_semantics<arbitrary>], iteration_bounds = array<i64: 2, 2, 2>, scalar_prefetch = 0 : i64, scratch_operands = 1 : i64, tpu.core_type = #tpu.core_type<tc>, window_params = [{transform_indices = @transform_0, window_bounds = array<i64: 1, 1, 16, 256>}, {transform_indices = @transform_1, window_bounds = array<i64: 1, 1, 16, 256>}, {transform_indices = @transform_2, window_bounds = array<i64: 1, 24, 16>}, {transform_indices = @transform_3, window_bounds = array<i64: 1, 24, 16>}, {transform_indices = @transform_4, window_bounds = array<i64: 1, 128, 1>}, {transform_indices = @transform_5, window_bounds = array<i64: 1, 4, 16, 1>}, {transform_indices = @transform_6, window_bounds = array<i64: 1, 1, 16, 256>}, {transform_indices = @transform_7, window_bounds = array<i64: 1, 1, 16, 256>}]} {
    %c0_i32 = arith.constant 0 : i32
    %0 = arith.cmpi eq, %arg2, %c0_i32 : i32
    %1 = arith.extui %0 : i1 to i32
    %c0_i32_0 = arith.constant 0 : i32
    %2 = arith.cmpi ne, %1, %c0_i32_0 : i32
    scf.if %2 {
      %cst_77 = arith.constant 0.000000e+00 : f32
      %255 = vector.broadcast %cst_77 : f32 to vector<128x1xf32>
      %c0_78 = arith.constant 0 : index
      %c0_79 = arith.constant 0 : index
      %256 = vector.load %arg11[%c0_78, %c0_79] : memref<128x1xf32, #tpu.memory_space<vmem>>, vector<128x1xf32>
      tpu.vector_store %arg11[%c0_78, %c0_79], %255 {strides = array<i32>} : memref<128x1xf32, #tpu.memory_space<vmem>>, vector<128x1xf32>,
    } else {
    }
    %c0 = arith.constant 0 : index
    %c0_1 = arith.constant 0 : index
    %c0_2 = arith.constant 0 : index
    %c0_3 = arith.constant 0 : index
    %3 = vector.load %arg3[%c0, %c0_1, %c0_2, %c0_3] : memref<1x1x16x256xbf16, #tpu.memory_space<vmem>>, vector<1x1x16x256xbf16>
    %4 = vector.shape_cast %3 : vector<1x1x16x256xbf16> to vector<16x256xbf16>
    %c0_4 = arith.constant 0 : index
    %c0_5 = arith.constant 0 : index
    %c0_6 = arith.constant 0 : index
    %c0_7 = arith.constant 0 : index
    %5 = vector.load %arg4[%c0_4, %c0_5, %c0_6, %c0_7] : memref<1x1x16x256xbf16, #tpu.memory_space<vmem>>, vector<1x1x16x256xbf16>
    %6 = vector.shape_cast %5 : vector<1x1x16x256xbf16> to vector<16x256xbf16>
    %7 = arith.extf %4 : vector<16x256xbf16> to vector<16x256xf32>
    %8 = arith.extf %6 : vector<16x256xbf16> to vector<16x256xf32>
    %c0_8 = arith.constant 0 : index
    %c0_9 = arith.constant 0 : index
    %c0_10 = arith.constant 0 : index
    %9 = vector.load %arg5[%c0_8, %c0_9, %c0_10] : memref<1x24x16xbf16, #tpu.memory_space<vmem>>, vector<1x24x16xbf16>
    %10 = vector.shape_cast %9 : vector<1x24x16xbf16> to vector<24x16xbf16>
    %cst = arith.constant dense<0.000000e+00> : vector<24x256xf32>
    %11 = tpu.matmul %10, %4, %cst {dimension_numbers = #tpu.dot_dimension_numbers<[1], [0], [0], [1], [0, 0, 1, 1], [], []>} : vector<24x16xbf16>, vector<16x256xbf16>, vector<24x256xf32> -> vector<24x256xf32>
    %c0_11 = arith.constant 0 : index
    %c0_12 = arith.constant 0 : index
    %c0_13 = arith.constant 0 : index
    %12 = vector.load %arg6[%c0_11, %c0_12, %c0_13] : memref<1x24x16xbf16, #tpu.memory_space<vmem>>, vector<1x24x16xbf16>
    %13 = vector.shape_cast %12 : vector<1x24x16xbf16> to vector<24x16xbf16>
    %cst_14 = arith.constant dense<0.000000e+00> : vector<24x256xf32>
    %14 = tpu.matmul %13, %6, %cst_14 {dimension_numbers = #tpu.dot_dimension_numbers<[1], [0], [0], [1], [0, 0, 1, 1], [], []>} : vector<24x16xbf16>, vector<16x256xbf16>, vector<24x256xf32> -> vector<24x256xf32>
    %c0_15 = arith.constant 0 : index
    %c0_16 = arith.constant 0 : index
    %c0_17 = arith.constant 0 : index
    %c0_18 = arith.constant 0 : index
    %15 = vector.load %arg8[%c0_15, %c0_16, %c0_17, %c0_18] : memref<1x4x16x1xf32, #tpu.memory_space<vmem>>, vector<1x1x16x1xf32>
    %16 = vector.shape_cast %15 : vector<1x1x16x1xf32> to vector<16x1xf32>
    %c0_19 = arith.constant 0 : index
    %c1 = arith.constant 1 : index
    %c0_20 = arith.constant 0 : index
    %c0_21 = arith.constant 0 : index
    %17 = vector.load %arg8[%c0_19, %c1, %c0_20, %c0_21] : memref<1x4x16x1xf32, #tpu.memory_space<vmem>>, vector<1x1x16x1xf32>
    %18 = vector.shape_cast %17 : vector<1x1x16x1xf32> to vector<16x1xf32>
    %c0_22 = arith.constant 0 : index
    %c2 = arith.constant 2 : index
    %c0_23 = arith.constant 0 : index
    %c0_24 = arith.constant 0 : index
    %19 = vector.load %arg8[%c0_22, %c2, %c0_23, %c0_24] : memref<1x4x16x1xf32, #tpu.memory_space<vmem>>, vector<1x1x16x1xf32>
    %20 = vector.shape_cast %19 : vector<1x1x16x1xf32> to vector<16x1xf32>
    %c0_25 = arith.constant 0 : index
    %c3 = arith.constant 3 : index
    %c0_26 = arith.constant 0 : index
    %c0_27 = arith.constant 0 : index
    %21 = vector.load %arg8[%c0_25, %c3, %c0_26, %c0_27] : memref<1x4x16x1xf32, #tpu.memory_space<vmem>>, vector<1x1x16x1xf32>
    %22 = vector.shape_cast %21 : vector<1x1x16x1xf32> to vector<16x1xf32>
    %23 = vector.extract_strided_slice %11 {offsets = [0, 0], sizes = [16, 256], strides = [1, 1]} : vector<24x256xf32> to vector<16x256xf32>
    %24 = vector.broadcast %16 : vector<16x1xf32> to vector<16x256xf32>
    %25 = arith.addf %23, %24 : vector<16x256xf32>
    %cst_28 = arith.constant 2.000000e+01 : f32
    %26 = vector.broadcast %cst_28 : f32 to vector<16x256xf32>
    %27 = arith.cmpf ogt, %25, %26 : vector<16x256xf32>
    %28 = math.exp %25 : vector<16x256xf32>
    %29 = math.log1p %28 : vector<16x256xf32>
    %30 = arith.select %27, %25, %29 : vector<16x256xi1>, vector<16x256xf32>
    %31 = vector.extract_strided_slice %14 {offsets = [0, 0], sizes = [16, 256], strides = [1, 1]} : vector<24x256xf32> to vector<16x256xf32>
    %32 = vector.broadcast %18 : vector<16x1xf32> to vector<16x256xf32>
    %33 = arith.addf %31, %32 : vector<16x256xf32>
    %cst_29 = arith.constant 2.000000e+01 : f32
    %34 = vector.broadcast %cst_29 : f32 to vector<16x256xf32>
    %35 = arith.cmpf ogt, %33, %34 : vector<16x256xf32>
    %36 = math.exp %33 : vector<16x256xf32>
    %37 = math.log1p %36 : vector<16x256xf32>
    %38 = arith.select %35, %33, %37 : vector<16x256xi1>, vector<16x256xf32>
    %39 = vector.extract_strided_slice %11 {offsets = [16, 0], sizes = [4, 256], strides = [1, 1]} : vector<24x256xf32> to vector<4x256xf32>
    %40 = vector.extract_strided_slice %11 {offsets = [20, 0], sizes = [4, 256], strides = [1, 1]} : vector<24x256xf32> to vector<4x256xf32>
    %41 = vector.extract_strided_slice %14 {offsets = [16, 0], sizes = [4, 256], strides = [1, 1]} : vector<24x256xf32> to vector<4x256xf32>
    %42 = vector.extract_strided_slice %14 {offsets = [20, 0], sizes = [4, 256], strides = [1, 1]} : vector<24x256xf32> to vector<4x256xf32>
    %43 = arith.mulf %30, %7 : vector<16x256xf32>
    %44 = arith.mulf %38, %8 : vector<16x256xf32>
    %45 = tpu.concatenate %30, %30, %30, %30, %38, %38, %38, %38 in 0 : vector<16x256xf32>, vector<16x256xf32>, vector<16x256xf32>, vector<16x256xf32>, vector<16x256xf32>, vector<16x256xf32>, vector<16x256xf32>, vector<16x256xf32> -> vector<128x256xf32>
    %c0_30 = arith.constant 0 : index
    %c0_31 = arith.constant 0 : index
    %c0_32 = arith.constant 0 : index
    %46 = vector.load %arg7[%c0_30, %c0_31, %c0_32] : memref<1x128x1xf32, #tpu.memory_space<vmem>>, vector<1x128x1xf32>
    %47 = vector.shape_cast %46 : vector<1x128x1xf32> to vector<128x1xf32>
    %48 = vector.broadcast %47 : vector<128x1xf32> to vector<128x256xf32>
    %49 = arith.mulf %45, %48 : vector<128x256xf32>
    %50 = math.exp %49 : vector<128x256xf32>
    %51 = vector.extract_strided_slice %39 {offsets = [0, 0], sizes = [1, 256], strides = [1, 1]} : vector<4x256xf32> to vector<1x256xf32>
    %52 = vector.broadcast %51 : vector<1x256xf32> to vector<16x256xf32>
    %53 = arith.mulf %43, %52 : vector<16x256xf32>
    %54 = vector.extract_strided_slice %39 {offsets = [1, 0], sizes = [1, 256], strides = [1, 1]} : vector<4x256xf32> to vector<1x256xf32>
    %55 = vector.broadcast %54 : vector<1x256xf32> to vector<16x256xf32>
    %56 = arith.mulf %43, %55 : vector<16x256xf32>
    %57 = vector.extract_strided_slice %39 {offsets = [2, 0], sizes = [1, 256], strides = [1, 1]} : vector<4x256xf32> to vector<1x256xf32>
    %58 = vector.broadcast %57 : vector<1x256xf32> to vector<16x256xf32>
    %59 = arith.mulf %43, %58 : vector<16x256xf32>
    %60 = vector.extract_strided_slice %39 {offsets = [3, 0], sizes = [1, 256], strides = [1, 1]} : vector<4x256xf32> to vector<1x256xf32>
    %61 = vector.broadcast %60 : vector<1x256xf32> to vector<16x256xf32>
    %62 = arith.mulf %43, %61 : vector<16x256xf32>
    %63 = vector.extract_strided_slice %41 {offsets = [0, 0], sizes = [1, 256], strides = [1, 1]} : vector<4x256xf32> to vector<1x256xf32>
    %64 = vector.broadcast %63 : vector<1x256xf32> to vector<16x256xf32>
    %65 = arith.mulf %44, %64 : vector<16x256xf32>
    %66 = vector.extract_strided_slice %41 {offsets = [1, 0], sizes = [1, 256], strides = [1, 1]} : vector<4x256xf32> to vector<1x256xf32>
    %67 = vector.broadcast %66 : vector<1x256xf32> to vector<16x256xf32>
    %68 = arith.mulf %44, %67 : vector<16x256xf32>
    %69 = vector.extract_strided_slice %41 {offsets = [2, 0], sizes = [1, 256], strides = [1, 1]} : vector<4x256xf32> to vector<1x256xf32>
    %70 = vector.broadcast %69 : vector<1x256xf32> to vector<16x256xf32>
    %71 = arith.mulf %44, %70 : vector<16x256xf32>
    %72 = vector.extract_strided_slice %41 {offsets = [3, 0], sizes = [1, 256], strides = [1, 1]} : vector<4x256xf32> to vector<1x256xf32>
    %73 = vector.broadcast %72 : vector<1x256xf32> to vector<16x256xf32>
    %74 = arith.mulf %44, %73 : vector<16x256xf32>
    %75 = tpu.concatenate %53, %56, %59, %62, %65, %68, %71, %74 in 0 : vector<16x256xf32>, vector<16x256xf32>, vector<16x256xf32>, vector<16x256xf32>, vector<16x256xf32>, vector<16x256xf32>, vector<16x256xf32>, vector<16x256xf32> -> vector<128x256xf32>
    %76 = tpu.iota {dimensions = array<i32: 1>} : vector<1x256xi32>
    %c1_i32 = arith.constant 1 : i32
    %77 = vector.broadcast %c1_i32 : i32 to vector<1x256xi32>
    %78 = arith.cmpi sge, %76, %77 : vector<1x256xi32>
    %c1_i32_33 = arith.constant 1 : i32
    %79 = tpu.dynamic_rotate %50 by %c1_i32_33 dim 1 : vector<128x256xf32>, i32 -> vector<128x256xf32>
    %cst_34 = arith.constant 1.000000e+00 : f32
    %80 = vector.shape_cast %78 : vector<1x256xi1> to vector<1x256xi1>
    %81 = vector.broadcast %80 : vector<1x256xi1> to vector<128x256xi1>
    %82 = vector.broadcast %cst_34 : f32 to vector<128x256xf32>
    %83 = arith.select %81, %79, %82 : vector<128x256xi1>, vector<128x256xf32>
    %c1_i32_35 = arith.constant 1 : i32
    %84 = tpu.dynamic_rotate %75 by %c1_i32_35 dim 1 : vector<128x256xf32>, i32 -> vector<128x256xf32>
    %cst_36 = arith.constant 0.000000e+00 : f32
    %85 = vector.shape_cast %78 : vector<1x256xi1> to vector<1x256xi1>
    %86 = vector.broadcast %85 : vector<1x256xi1> to vector<128x256xi1>
    %87 = vector.broadcast %cst_36 : f32 to vector<128x256xf32>
    %88 = arith.select %86, %84, %87 : vector<128x256xi1>, vector<128x256xf32>
    %89 = arith.mulf %50, %88 : vector<128x256xf32>
    %90 = arith.addf %89, %75 : vector<128x256xf32>
    %91 = arith.mulf %50, %83 : vector<128x256xf32>
    %c2_i32 = arith.constant 2 : i32
    %92 = vector.broadcast %c2_i32 : i32 to vector<1x256xi32>
    %93 = arith.cmpi sge, %76, %92 : vector<1x256xi32>
    %c2_i32_37 = arith.constant 2 : i32
    %94 = tpu.dynamic_rotate %91 by %c2_i32_37 dim 1 : vector<128x256xf32>, i32 -> vector<128x256xf32>
    %cst_38 = arith.constant 1.000000e+00 : f32
    %95 = vector.shape_cast %93 : vector<1x256xi1> to vector<1x256xi1>
    %96 = vector.broadcast %95 : vector<1x256xi1> to vector<128x256xi1>
    %97 = vector.broadcast %cst_38 : f32 to vector<128x256xf32>
    %98 = arith.select %96, %94, %97 : vector<128x256xi1>, vector<128x256xf32>
    %c2_i32_39 = arith.constant 2 : i32
    %99 = tpu.dynamic_rotate %90 by %c2_i32_39 dim 1 : vector<128x256xf32>, i32 -> vector<128x256xf32>
    %cst_40 = arith.constant 0.000000e+00 : f32
    %100 = vector.shape_cast %93 : vector<1x256xi1> to vector<1x256xi1>
    %101 = vector.broadcast %100 : vector<1x256xi1> to vector<128x256xi1>
    %102 = vector.broadcast %cst_40 : f32 to vector<128x256xf32>
    %103 = arith.select %101, %99, %102 : vector<128x256xi1>, vector<128x256xf32>
    %104 = arith.mulf %91, %103 : vector<128x256xf32>
    %105 = arith.addf %104, %90 : vector<128x256xf32>
    %106 = arith.mulf %91, %98 : vector<128x256xf32>
    %c4_i32 = arith.constant 4 : i32
    %107 = vector.broadcast %c4_i32 : i32 to vector<1x256xi32>
    %108 = arith.cmpi sge, %76, %107 : vector<1x256xi32>
    %c4_i32_41 = arith.constant 4 : i32
    %109 = tpu.dynamic_rotate %106 by %c4_i32_41 dim 1 : vector<128x256xf32>, i32 -> vector<128x256xf32>
    %cst_42 = arith.constant 1.000000e+00 : f32
    %110 = vector.shape_cast %108 : vector<1x256xi1> to vector<1x256xi1>
    %111 = vector.broadcast %110 : vector<1x256xi1> to vector<128x256xi1>
    %112 = vector.broadcast %cst_42 : f32 to vector<128x256xf32>
    %113 = arith.select %111, %109, %112 : vector<128x256xi1>, vector<128x256xf32>
    %c4_i32_43 = arith.constant 4 : i32
    %114 = tpu.dynamic_rotate %105 by %c4_i32_43 dim 1 : vector<128x256xf32>, i32 -> vector<128x256xf32>
    %cst_44 = arith.constant 0.000000e+00 : f32
    %115 = vector.shape_cast %108 : vector<1x256xi1> to vector<1x256xi1>
    %116 = vector.broadcast %115 : vector<1x256xi1> to vector<128x256xi1>
    %117 = vector.broadcast %cst_44 : f32 to vector<128x256xf32>
    %118 = arith.select %116, %114, %117 : vector<128x256xi1>, vector<128x256xf32>
    %119 = arith.mulf %106, %118 : vector<128x256xf32>
    %120 = arith.addf %119, %105 : vector<128x256xf32>
    %121 = arith.mulf %106, %113 : vector<128x256xf32>
    %c8_i32 = arith.constant 8 : i32
    %122 = vector.broadcast %c8_i32 : i32 to vector<1x256xi32>
    %123 = arith.cmpi sge, %76, %122 : vector<1x256xi32>
    %c8_i32_45 = arith.constant 8 : i32
    %124 = tpu.dynamic_rotate %121 by %c8_i32_45 dim 1 : vector<128x256xf32>, i32 -> vector<128x256xf32>
    %cst_46 = arith.constant 1.000000e+00 : f32
    %125 = vector.shape_cast %123 : vector<1x256xi1> to vector<1x256xi1>
    %126 = vector.broadcast %125 : vector<1x256xi1> to vector<128x256xi1>
    %127 = vector.broadcast %cst_46 : f32 to vector<128x256xf32>
    %128 = arith.select %126, %124, %127 : vector<128x256xi1>, vector<128x256xf32>
    %c8_i32_47 = arith.constant 8 : i32
    %129 = tpu.dynamic_rotate %120 by %c8_i32_47 dim 1 : vector<128x256xf32>, i32 -> vector<128x256xf32>
    %cst_48 = arith.constant 0.000000e+00 : f32
    %130 = vector.shape_cast %123 : vector<1x256xi1> to vector<1x256xi1>
    %131 = vector.broadcast %130 : vector<1x256xi1> to vector<128x256xi1>
    %132 = vector.broadcast %cst_48 : f32 to vector<128x256xf32>
    %133 = arith.select %131, %129, %132 : vector<128x256xi1>, vector<128x256xf32>
    %134 = arith.mulf %121, %133 : vector<128x256xf32>
    %135 = arith.addf %134, %120 : vector<128x256xf32>
    %136 = arith.mulf %121, %128 : vector<128x256xf32>
    %c16_i32 = arith.constant 16 : i32
    %137 = vector.broadcast %c16_i32 : i32 to vector<1x256xi32>
    %138 = arith.cmpi sge, %76, %137 : vector<1x256xi32>
    %c16_i32_49 = arith.constant 16 : i32
    %139 = tpu.dynamic_rotate %136 by %c16_i32_49 dim 1 : vector<128x256xf32>, i32 -> vector<128x256xf32>
    %cst_50 = arith.constant 1.000000e+00 : f32
    %140 = vector.shape_cast %138 : vector<1x256xi1> to vector<1x256xi1>
    %141 = vector.broadcast %140 : vector<1x256xi1> to vector<128x256xi1>
    %142 = vector.broadcast %cst_50 : f32 to vector<128x256xf32>
    %143 = arith.select %141, %139, %142 : vector<128x256xi1>, vector<128x256xf32>
    %c16_i32_51 = arith.constant 16 : i32
    %144 = tpu.dynamic_rotate %135 by %c16_i32_51 dim 1 : vector<128x256xf32>, i32 -> vector<128x256xf32>
    %cst_52 = arith.constant 0.000000e+00 : f32
    %145 = vector.shape_cast %138 : vector<1x256xi1> to vector<1x256xi1>
    %146 = vector.broadcast %145 : vector<1x256xi1> to vector<128x256xi1>
    %147 = vector.broadcast %cst_52 : f32 to vector<128x256xf32>
    %148 = arith.select %146, %144, %147 : vector<128x256xi1>, vector<128x256xf32>
    %149 = arith.mulf %136, %148 : vector<128x256xf32>
    %150 = arith.addf %149, %135 : vector<128x256xf32>
    %151 = arith.mulf %136, %143 : vector<128x256xf32>
    %c32_i32 = arith.constant 32 : i32
    %152 = vector.broadcast %c32_i32 : i32 to vector<1x256xi32>
    %153 = arith.cmpi sge, %76, %152 : vector<1x256xi32>
    %c32_i32_53 = arith.constant 32 : i32
    %154 = tpu.dynamic_rotate %151 by %c32_i32_53 dim 1 : vector<128x256xf32>, i32 -> vector<128x256xf32>
    %cst_54 = arith.constant 1.000000e+00 : f32
    %155 = vector.shape_cast %153 : vector<1x256xi1> to vector<1x256xi1>
    %156 = vector.broadcast %155 : vector<1x256xi1> to vector<128x256xi1>
    %157 = vector.broadcast %cst_54 : f32 to vector<128x256xf32>
    %158 = arith.select %156, %154, %157 : vector<128x256xi1>, vector<128x256xf32>
    %c32_i32_55 = arith.constant 32 : i32
    %159 = tpu.dynamic_rotate %150 by %c32_i32_55 dim 1 : vector<128x256xf32>, i32 -> vector<128x256xf32>
    %cst_56 = arith.constant 0.000000e+00 : f32
    %160 = vector.shape_cast %153 : vector<1x256xi1> to vector<1x256xi1>
    %161 = vector.broadcast %160 : vector<1x256xi1> to vector<128x256xi1>
    %162 = vector.broadcast %cst_56 : f32 to vector<128x256xf32>
    %163 = arith.select %161, %159, %162 : vector<128x256xi1>, vector<128x256xf32>
    %164 = arith.mulf %151, %163 : vector<128x256xf32>
    %165 = arith.addf %164, %150 : vector<128x256xf32>
    %166 = arith.mulf %151, %158 : vector<128x256xf32>
    %c64_i32 = arith.constant 64 : i32
    %167 = vector.broadcast %c64_i32 : i32 to vector<1x256xi32>
    %168 = arith.cmpi sge, %76, %167 : vector<1x256xi32>
    %c64_i32_57 = arith.constant 64 : i32
    %169 = tpu.dynamic_rotate %166 by %c64_i32_57 dim 1 : vector<128x256xf32>, i32 -> vector<128x256xf32>
    %cst_58 = arith.constant 1.000000e+00 : f32
    %170 = vector.shape_cast %168 : vector<1x256xi1> to vector<1x256xi1>
    %171 = vector.broadcast %170 : vector<1x256xi1> to vector<128x256xi1>
    %172 = vector.broadcast %cst_58 : f32 to vector<128x256xf32>
    %173 = arith.select %171, %169, %172 : vector<128x256xi1>, vector<128x256xf32>
    %c64_i32_59 = arith.constant 64 : i32
    %174 = tpu.dynamic_rotate %165 by %c64_i32_59 dim 1 : vector<128x256xf32>, i32 -> vector<128x256xf32>
    %cst_60 = arith.constant 0.000000e+00 : f32
    %175 = vector.shape_cast %168 : vector<1x256xi1> to vector<1x256xi1>
    %176 = vector.broadcast %175 : vector<1x256xi1> to vector<128x256xi1>
    %177 = vector.broadcast %cst_60 : f32 to vector<128x256xf32>
    %178 = arith.select %176, %174, %177 : vector<128x256xi1>, vector<128x256xf32>
    %179 = arith.mulf %166, %178 : vector<128x256xf32>
    %180 = arith.addf %179, %165 : vector<128x256xf32>
    %181 = arith.mulf %166, %173 : vector<128x256xf32>
    %c128_i32 = arith.constant 128 : i32
    %182 = vector.broadcast %c128_i32 : i32 to vector<1x256xi32>
    %183 = arith.cmpi sge, %76, %182 : vector<1x256xi32>
    %c128_i32_61 = arith.constant 128 : i32
    %184 = tpu.dynamic_rotate %181 by %c128_i32_61 dim 1 : vector<128x256xf32>, i32 -> vector<128x256xf32>
    %cst_62 = arith.constant 1.000000e+00 : f32
    %185 = vector.shape_cast %183 : vector<1x256xi1> to vector<1x256xi1>
    %186 = vector.broadcast %185 : vector<1x256xi1> to vector<128x256xi1>
    %187 = vector.broadcast %cst_62 : f32 to vector<128x256xf32>
    %188 = arith.select %186, %184, %187 : vector<128x256xi1>, vector<128x256xf32>
    %c128_i32_63 = arith.constant 128 : i32
    %189 = tpu.dynamic_rotate %180 by %c128_i32_63 dim 1 : vector<128x256xf32>, i32 -> vector<128x256xf32>
    %cst_64 = arith.constant 0.000000e+00 : f32
    %190 = vector.shape_cast %183 : vector<1x256xi1> to vector<1x256xi1>
    %191 = vector.broadcast %190 : vector<1x256xi1> to vector<128x256xi1>
    %192 = vector.broadcast %cst_64 : f32 to vector<128x256xf32>
    %193 = arith.select %191, %189, %192 : vector<128x256xi1>, vector<128x256xf32>
    %194 = arith.mulf %181, %193 : vector<128x256xf32>
    %195 = arith.addf %194, %180 : vector<128x256xf32>
    %196 = arith.mulf %181, %188 : vector<128x256xf32>
    %c0_65 = arith.constant 0 : index
    %c0_66 = arith.constant 0 : index
    %197 = vector.load %arg11[%c0_65, %c0_66] : memref<128x1xf32, #tpu.memory_space<vmem>>, vector<128x1xf32>
    %198 = vector.broadcast %197 : vector<128x1xf32> to vector<128x256xf32>
    %199 = arith.mulf %196, %198 : vector<128x256xf32>
    %200 = arith.addf %199, %195 : vector<128x256xf32>
    %201 = vector.extract_strided_slice %200 {offsets = [0, 255], sizes = [128, 1], strides = [1, 1]} : vector<128x256xf32> to vector<128x1xf32>
    %c0_67 = arith.constant 0 : index
    %c0_68 = arith.constant 0 : index
    %202 = vector.load %arg11[%c0_67, %c0_68] : memref<128x1xf32, #tpu.memory_space<vmem>>, vector<128x1xf32>
    tpu.vector_store %arg11[%c0_67, %c0_68], %201 {strides = array<i32>} : memref<128x1xf32, #tpu.memory_space<vmem>>, vector<128x1xf32>,
    %203 = vector.broadcast %22 : vector<16x1xf32> to vector<16x256xf32>
    %204 = arith.mulf %203, %7 : vector<16x256xf32>
    %205 = vector.broadcast %20 : vector<16x1xf32> to vector<16x256xf32>
    %206 = arith.mulf %205, %8 : vector<16x256xf32>
    %207 = vector.extract_strided_slice %200 {offsets = [0, 0], sizes = [16, 256], strides = [1, 1]} : vector<128x256xf32> to vector<16x256xf32>
    %208 = vector.extract_strided_slice %42 {offsets = [0, 0], sizes = [1, 256], strides = [1, 1]} : vector<4x256xf32> to vector<1x256xf32>
    %209 = vector.broadcast %208 : vector<1x256xf32> to vector<16x256xf32>
    %210 = arith.mulf %207, %209 : vector<16x256xf32>
    %211 = arith.addf %204, %210 : vector<16x256xf32>
    %212 = vector.extract_strided_slice %200 {offsets = [64, 0], sizes = [16, 256], strides = [1, 1]} : vector<128x256xf32> to vector<16x256xf32>
    %213 = vector.extract_strided_slice %40 {offsets = [0, 0], sizes = [1, 256], strides = [1, 1]} : vector<4x256xf32> to vector<1x256xf32>
    %214 = vector.broadcast %213 : vector<1x256xf32> to vector<16x256xf32>
    %215 = arith.mulf %212, %214 : vector<16x256xf32>
    %216 = arith.addf %206, %215 : vector<16x256xf32>
    %217 = vector.extract_strided_slice %200 {offsets = [16, 0], sizes = [16, 256], strides = [1, 1]} : vector<128x256xf32> to vector<16x256xf32>
    %218 = vector.extract_strided_slice %42 {offsets = [1, 0], sizes = [1, 256], strides = [1, 1]} : vector<4x256xf32> to vector<1x256xf32>
    %219 = vector.broadcast %218 : vector<1x256xf32> to vector<16x256xf32>
    %220 = arith.mulf %217, %219 : vector<16x256xf32>
    %221 = arith.addf %211, %220 : vector<16x256xf32>
    %222 = vector.extract_strided_slice %200 {offsets = [80, 0], sizes = [16, 256], strides = [1, 1]} : vector<128x256xf32> to vector<16x256xf32>
    %223 = vector.extract_strided_slice %40 {offsets = [1, 0], sizes = [1, 256], strides = [1, 1]} : vector<4x256xf32> to vector<1x256xf32>
    %224 = vector.broadcast %223 : vector<1x256xf32> to vector<16x256xf32>
    %225 = arith.mulf %222, %224 : vector<16x256xf32>
    %226 = arith.addf %216, %225 : vector<16x256xf32>
    %227 = vector.extract_strided_slice %200 {offsets = [32, 0], sizes = [16, 256], strides = [1, 1]} : vector<128x256xf32> to vector<16x256xf32>
    %228 = vector.extract_strided_slice %42 {offsets = [2, 0], sizes = [1, 256], strides = [1, 1]} : vector<4x256xf32> to vector<1x256xf32>
    %229 = vector.broadcast %228 : vector<1x256xf32> to vector<16x256xf32>
    %230 = arith.mulf %227, %229 : vector<16x256xf32>
    %231 = arith.addf %221, %230 : vector<16x256xf32>
    %232 = vector.extract_strided_slice %200 {offsets = [96, 0], sizes = [16, 256], strides = [1, 1]} : vector<128x256xf32> to vector<16x256xf32>
    %233 = vector.extract_strided_slice %40 {offsets = [2, 0], sizes = [1, 256], strides = [1, 1]} : vector<4x256xf32> to vector<1x256xf32>
    %234 = vector.broadcast %233 : vector<1x256xf32> to vector<16x256xf32>
    %235 = arith.mulf %232, %234 : vector<16x256xf32>
    %236 = arith.addf %226, %235 : vector<16x256xf32>
    %237 = vector.extract_strided_slice %200 {offsets = [48, 0], sizes = [16, 256], strides = [1, 1]} : vector<128x256xf32> to vector<16x256xf32>
    %238 = vector.extract_strided_slice %42 {offsets = [3, 0], sizes = [1, 256], strides = [1, 1]} : vector<4x256xf32> to vector<1x256xf32>
    %239 = vector.broadcast %238 : vector<1x256xf32> to vector<16x256xf32>
    %240 = arith.mulf %237, %239 : vector<16x256xf32>
    %241 = arith.addf %231, %240 : vector<16x256xf32>
    %242 = vector.extract_strided_slice %200 {offsets = [112, 0], sizes = [16, 256], strides = [1, 1]} : vector<128x256xf32> to vector<16x256xf32>
    %243 = vector.extract_strided_slice %40 {offsets = [3, 0], sizes = [1, 256], strides = [1, 1]} : vector<4x256xf32> to vector<1x256xf32>
    %244 = vector.broadcast %243 : vector<1x256xf32> to vector<16x256xf32>
    %245 = arith.mulf %242, %244 : vector<16x256xf32>
    %246 = arith.addf %236, %245 : vector<16x256xf32>
    %247 = arith.truncf %241 : vector<16x256xf32> to vector<16x256xbf16>
    %c0_69 = arith.constant 0 : index
    %c0_70 = arith.constant 0 : index
    %c0_71 = arith.constant 0 : index
    %c0_72 = arith.constant 0 : index
    %248 = vector.load %arg9[%c0_69, %c0_70, %c0_71, %c0_72] : memref<1x1x16x256xbf16, #tpu.memory_space<vmem>>, vector<1x1x16x256xbf16>
    %249 = vector.shape_cast %248 : vector<1x1x16x256xbf16> to vector<16x256xbf16>
    %250 = vector.shape_cast %247 : vector<16x256xbf16> to vector<1x1x16x256xbf16>
    tpu.vector_store %arg9[%c0_69, %c0_70, %c0_71, %c0_72], %250 {strides = array<i32>} : memref<1x1x16x256xbf16, #tpu.memory_space<vmem>>, vector<1x1x16x256xbf16>,
    %251 = arith.truncf %246 : vector<16x256xf32> to vector<16x256xbf16>
    %c0_73 = arith.constant 0 : index
    %c0_74 = arith.constant 0 : index
    %c0_75 = arith.constant 0 : index
    %c0_76 = arith.constant 0 : index
    %252 = vector.load %arg10[%c0_73, %c0_74, %c0_75, %c0_76] : memref<1x1x16x256xbf16, #tpu.memory_space<vmem>>, vector<1x1x16x256xbf16>
    %253 = vector.shape_cast %252 : vector<1x1x16x256xbf16> to vector<16x256xbf16>
    %254 = vector.shape_cast %251 : vector<16x256xbf16> to vector<1x1x16x256xbf16>
    tpu.vector_store %arg10[%c0_73, %c0_74, %c0_75, %c0_76], %254 {strides = array<i32>} : memref<1x1x16x256xbf16, #tpu.memory_space<vmem>>, vector<1x1x16x256xbf16>,
    return
  }
  func.func @transform_0(%arg0: i32, %arg1: i32, %arg2: i32) -> (i32, i32, i32, i32) {
    %c0_i32 = arith.constant 0 : i32
    %c0_i32_0 = arith.constant 0 : i32
    return %arg1, %arg0, %c0_i32, %arg2 : i32, i32, i32, i32
  }
  func.func @transform_1(%arg0: i32, %arg1: i32, %arg2: i32) -> (i32, i32, i32, i32) {
    %c0_i32 = arith.constant 0 : i32
    %c0_i32_0 = arith.constant 0 : i32
    return %arg1, %arg0, %c0_i32, %arg2 : i32, i32, i32, i32
  }
  func.func @transform_2(%arg0: i32, %arg1: i32, %arg2: i32) -> (i32, i32, i32) {
    %c0_i32 = arith.constant 0 : i32
    %c0_i32_0 = arith.constant 0 : i32
    %c0_i32_1 = arith.constant 0 : i32
    return %arg0, %c0_i32, %c0_i32_0 : i32, i32, i32
  }
  func.func @transform_3(%arg0: i32, %arg1: i32, %arg2: i32) -> (i32, i32, i32) {
    %c0_i32 = arith.constant 0 : i32
    %c0_i32_0 = arith.constant 0 : i32
    %c0_i32_1 = arith.constant 0 : i32
    return %arg0, %c0_i32, %c0_i32_0 : i32, i32, i32
  }
  func.func @transform_4(%arg0: i32, %arg1: i32, %arg2: i32) -> (i32, i32, i32) {
    %c0_i32 = arith.constant 0 : i32
    %c0_i32_0 = arith.constant 0 : i32
    %c0_i32_1 = arith.constant 0 : i32
    return %arg0, %c0_i32, %c0_i32_0 : i32, i32, i32
  }
  func.func @transform_5(%arg0: i32, %arg1: i32, %arg2: i32) -> (i32, i32, i32, i32) {
    %c0_i32 = arith.constant 0 : i32
    %c0_i32_0 = arith.constant 0 : i32
    %c0_i32_1 = arith.constant 0 : i32
    %c0_i32_2 = arith.constant 0 : i32
    return %arg0, %c0_i32, %c0_i32_0, %c0_i32_1 : i32, i32, i32, i32
  }
  func.func @transform_6(%arg0: i32, %arg1: i32, %arg2: i32) -> (i32, i32, i32, i32) {
    %c0_i32 = arith.constant 0 : i32
    %c0_i32_0 = arith.constant 0 : i32
    return %arg1, %arg0, %c0_i32, %arg2 : i32, i32, i32, i32
  }
  func.func @transform_7(%arg0: i32, %arg1: i32, %arg2: i32) -> (i32, i32, i32, i32) {
    %c0_i32 = arith.constant 0 : i32
    %c0_i32_0 = arith.constant 0 : i32
    return %arg1, %arg0, %c0_i32, %arg2 : i32, i32, i32, i32
  }
}

</mosaic_0001>

<llo_original>
// kernel: tpu_custom_call.1
$region0: #{tpu_custom_call.1}
  #allocation0 [shape = 'u32[]', space=smem, size = 0x4, offset = 0x4, fixed_abs, tag = 'smem constant byte address 0x4 - core index']
  #allocation1 [shape = 'u32[144,128]{1,0:T(1,128)}', space=vmem, size = 0x12000, scoped, tag = 'internal scratch']
  #allocation2 [shape = 'f32[128,1]{1,0:T(8,128)}', space=vmem, size = 0x10000, scoped, tag = 'scratch operand']
  %s0 = inlined_call_operand.vmem [shape: bf16[2,2,16,512], index: 0, kind: input, shape index: {}]
  %s1 = inlined_call_operand.vmem [shape: bf16[2,2,16,512], index: 1, kind: input, shape index: {}]
  %s2 = inlined_call_operand.vmem [shape: bf16[2,24,16], index: 2, kind: input, shape index: {}]
  %s3 = inlined_call_operand.vmem [shape: bf16[2,24,16], index: 3, kind: input, shape index: {}]
  %s4 = inlined_call_operand.vmem [shape: f32[2,128,1], index: 4, kind: input, shape index: {}]
  %s5 = inlined_call_operand.vmem [shape: f32[2,4,16,1], index: 5, kind: input, shape index: {}]
  %s6 = inlined_call_operand.hbm [shape: bf16[2,2,16,512], index: 6, kind: output, shape index: {0}]
  %s7 = inlined_call_operand.hbm [shape: bf16[2,2,16,512], index: 7, kind: output, shape index: {1}]
  %8 = xla_tuple %s6, %s7
  %s9 = sld [smem:[#allocation0]]
  $region145: #{tpu_custom_call.1} parent=0
    _
  %s11 = ssub.s32 1, %s9
  %s12 = scalar_select 0, %s11, %s9
  $region1: #{tpu_custom_call.1} parent=0
    #allocation3 [shape = 'u8[16384]{0}', space=vmem, size = 0x4000, scoped, tag = 'input window, operand 0']
    #allocation4 [shape = 'u8[16384]{0}', space=vmem, size = 0x4000, scoped, tag = 'input window, operand 1']
    #allocation5 [shape = 'u8[16384]{0}', space=vmem, size = 0x4000, scoped, tag = 'output window, operand 0']
    #allocation6 [shape = 's32[2]{0}', space=sflag, size = 0x8, scoped, tag = 'scoped memory for tpu_custom_call.1']
    #allocation7 [shape = 'u8[16384]{0}', space=vmem, size = 0x4000, scoped, tag = 'output window, operand 1']
    #allocation8 [shape = 's32[2]{0}', space=sflag, size = 0x8, scoped, tag = 'scoped memory for tpu_custom_call.1']
    %13 = vsyncpa [#allocation6], 0
    %s14 = scalar_lea.sflag [#allocation6], 1
    %15 = vsyncpa %s14, 0
    %16 = vsyncpa [#allocation8], 0
    %s17 = scalar_lea.sflag [#allocation8], 1
    %18 = vsyncpa %s17, 0
    loop: start=0, step=1, limit=10
    $region2: #{tpu_custom_call.1} parent=1 // loop_pre_header
      _
    $region3: #{tpu_custom_call.1} parent=1 // loop_header
      %s20 = sphi 0, %s24
      %p21 = scmp.ge.s32.totalorder %s20, 10
      %s27 = sphi 0, %s46
      %s28 = sphi 0, %s42
      %s29 = sphi 0, %s38
      %s30 = sphi 0, %s27
      %s31 = sphi 0, %s28
      %s32 = sphi 0, %s29
      %s33 = sphi 0, %s30
      %s34 = sphi 0, %s31
      %s35 = sphi 0, %s32
      %s53 = sphi 0, %s55
      %s56 = sphi 0, %s53
      %s57 = sphi 0, %s56
      %s73 = sphi 0, %s57
      %s83 = sphi 0, %s85
      %s86 = sphi 0, %s83
      %s87 = sphi 0, %s86
      %s103 = sphi 0, %s87
      %s109 = sphi 0, %s111
      %s112 = sphi 0, %s109
      %s113 = sphi 0, %s112
      %s129 = sphi 0, %s113
      %s135 = sphi 0, %s137
      %s138 = sphi 0, %s135
      %s139 = sphi 0, %s138
      %s155 = sphi 0, %s139
      %s161 = sphi 0, %s163
      %s164 = sphi 0, %s161
      %s165 = sphi 0, %s164
      %s181 = sphi 0, %s165
      %s187 = sphi 0, %s189
      %s190 = sphi 0, %s187
      %s191 = sphi 0, %s190
      %s207 = sphi 0, %s191
      %s217 = sphi 0, %s219
      %s220 = sphi 0, %s217
      %s221 = sphi 0, %s220
      %s237 = sphi 0, %s221
      %s247 = sphi 0, %s249
      %s250 = sphi 0, %s247
      %s251 = sphi 0, %s250
      %s267 = sphi 0, %s251
    $region4: #{tpu_custom_call.1} parent=1 // loop_header_branch
      %23 = sbr.rel (%p21) target = $region8
    $region5: #{tpu_custom_call.1} parent=1 // loop_body
      %s25 = ssub.s32 %s20, 1
      %s26 = ssub.s32 %s20, 2
      %s36 = sadd.s32 1, %s29
      %p37 = scmp.ge.s32.totalorder %s36, 2
      %s38 = scalar_select %p37, 0, %s36
      %s39 = sadd.s32 1, %s28
      %s40 = scalar_select %p37, %s39, %s28
      %p41 = scmp.ge.s32.totalorder %s40, 2
      %s42 = scalar_select %p41, 0, %s40
      %s43 = sadd.s32 1, %s27
      %s44 = scalar_select %p41, %s43, %s27
      %p45 = scmp.ge.s32.totalorder %s44, 2
      %s46 = scalar_select %p45, 0, %s44
      %s47 = ssub.s32 %s28, %s42
      %s48 = ssub.s32 %s27, %s46
      %s49 = sor.u32 %s47, %s48
      %s50 = ssub.s32 %s29, %s38
      %s51 = sor.u32 %s49, %s50
      %p52 = scmp.eq.s32.totalorder %s51, 0
      %s54 = sadd.s32 %s53, 1
      %s55 = scalar_select %p52, %s53, %s54
      %p58 = pneg %p52
      %p59 = scmp.eq.s32.totalorder %s20, 7
      %p60 = por %p58, %p59
      %p61 = scmp.ne.s32.totalorder %s53, %s56
      %p62 = scmp.eq.s32.totalorder %s20, 0
      %p63 = por %p61, %p62
      %p64 = scmp.ne.s32.totalorder %s53, %s56
      %p65 = scmp.eq.s32.totalorder %s25, 7
      %p66 = por %p64, %p65
      %p67 = scmp.ne.s32.totalorder %s56, %s57
      %p68 = scmp.eq.s32.totalorder %s25, 0
      %p69 = por %p67, %p68
      %p70 = scmp.ne.s32.totalorder %s56, %s57
      %p71 = scmp.eq.s32.totalorder %s26, 7
      %p72 = por %p70, %p71
      %p74 = scmp.ne.s32.totalorder %s57, %s73
      %p75 = scmp.eq.s32.totalorder %s26, 0
      %p76 = por %p74, %p75
      %s77 = ssub.s32 %s28, %s42
      %s78 = ssub.s32 %s27, %s46
      %s79 = sor.u32 %s77, %s78
      %s80 = ssub.s32 %s29, %s38
      %s81 = sor.u32 %s79, %s80
      %p82 = scmp.eq.s32.totalorder %s81, 0
      %s84 = sadd.s32 %s83, 1
      %s85 = scalar_select %p82, %s83, %s84
      %p88 = pneg %p82
      %p89 = scmp.eq.s32.totalorder %s20, 7
      %p90 = por %p88, %p89
      %p91 = scmp.ne.s32.totalorder %s83, %s86
      %p92 = scmp.eq.s32.totalorder %s20, 0
      %p93 = por %p91, %p92
      %p94 = scmp.ne.s32.totalorder %s83, %s86
      %p95 = scmp.eq.s32.totalorder %s25, 7
      %p96 = por %p94, %p95
      %p97 = scmp.ne.s32.totalorder %s86, %s87
      %p98 = scmp.eq.s32.totalorder %s25, 0
      %p99 = por %p97, %p98
      %p100 = scmp.ne.s32.totalorder %s86, %s87
      %p101 = scmp.eq.s32.totalorder %s26, 7
      %p102 = por %p100, %p101
      %p104 = scmp.ne.s32.totalorder %s87, %s103
      %p105 = scmp.eq.s32.totalorder %s26, 0
      %p106 = por %p104, %p105
      %s107 = ssub.s32 %s27, %s46
      %p108 = scmp.eq.s32.totalorder %s107, 0
      %s110 = sadd.s32 %s109, 1
      %s111 = scalar_select %p108, %s109, %s110
      %p114 = pneg %p108
      %p115 = scmp.eq.s32.totalorder %s20, 7
      %p116 = por %p114, %p115
      %p117 = scmp.ne.s32.totalorder %s109, %s112
      %p118 = scmp.eq.s32.totalorder %s20, 0
      %p119 = por %p117, %p118
      %p120 = scmp.ne.s32.totalorder %s109, %s112
      %p121 = scmp.eq.s32.totalorder %s25, 7
      %p122 = por %p120, %p121
      %p123 = scmp.ne.s32.totalorder %s112, %s113
      %p124 = scmp.eq.s32.totalorder %s25, 0
      %p125 = por %p123, %p124
      %p126 = scmp.ne.s32.totalorder %s112, %s113
      %p127 = scmp.eq.s32.totalorder %s26, 7
      %p128 = por %p126, %p127
      %p130 = scmp.ne.s32.totalorder %s113, %s129
      %p131 = scmp.eq.s32.totalorder %s26, 0
      %p132 = por %p130, %p131
      %s133 = ssub.s32 %s27, %s46
      %p134 = scmp.eq.s32.totalorder %s133, 0
      %s136 = sadd.s32 %s135, 1
      %s137 = scalar_select %p134, %s135, %s136
      %p140 = pneg %p134
      %p141 = scmp.eq.s32.totalorder %s20, 7
      %p142 = por %p140, %p141
      %p143 = scmp.ne.s32.totalorder %s135, %s138
      %p144 = scmp.eq.s32.totalorder %s20, 0
      %p145 = por %p143, %p144
      %p146 = scmp.ne.s32.totalorder %s135, %s138
      %p147 = scmp.eq.s32.totalorder %s25, 7
      %p148 = por %p146, %p147
      %p149 = scmp.ne.s32.totalorder %s138, %s139
      %p150 = scmp.eq.s32.totalorder %s25, 0
      %p151 = por %p149, %p150
      %p152 = scmp.ne.s32.totalorder %s138, %s139
      %p153 = scmp.eq.s32.totalorder %s26, 7
      %p154 = por %p152, %p153
      %p156 = scmp.ne.s32.totalorder %s139, %s155
      %p157 = scmp.eq.s32.totalorder %s26, 0
      %p158 = por %p156, %p157
      %s159 = ssub.s32 %s27, %s46
      %p160 = scmp.eq.s32.totalorder %s159, 0
      %s162 = sadd.s32 %s161, 1
      %s163 = scalar_select %p160, %s161, %s162
      %p166 = pneg %p160
      %p167 = scmp.eq.s32.totalorder %s20, 7
      %p168 = por %p166, %p167
      %p169 = scmp.ne.s32.totalorder %s161, %s164
      %p170 = scmp.eq.s32.totalorder %s20, 0
      %p171 = por %p169, %p170
      %p172 = scmp.ne.s32.totalorder %s161, %s164
      %p173 = scmp.eq.s32.totalorder %s25, 7
      %p174 = por %p172, %p173
      %p175 = scmp.ne.s32.totalorder %s164, %s165
      %p176 = scmp.eq.s32.totalorder %s25, 0
      %p177 = por %p175, %p176
      %p178 = scmp.ne.s32.totalorder %s164, %s165
      %p179 = scmp.eq.s32.totalorder %s26, 7
      %p180 = por %p178, %p179
      %p182 = scmp.ne.s32.totalorder %s165, %s181
      %p183 = scmp.eq.s32.totalorder %s26, 0
      %p184 = por %p182, %p183
      %s185 = ssub.s32 %s27, %s46
      %p186 = scmp.eq.s32.totalorder %s185, 0
      %s188 = sadd.s32 %s187, 1
      %s189 = scalar_select %p186, %s187, %s188
      %p192 = pneg %p186
      %p193 = scmp.eq.s32.totalorder %s20, 7
      %p194 = por %p192, %p193
      %p195 = scmp.ne.s32.totalorder %s187, %s190
      %p196 = scmp.eq.s32.totalorder %s20, 0
      %p197 = por %p195, %p196
      %p198 = scmp.ne.s32.totalorder %s187, %s190
      %p199 = scmp.eq.s32.totalorder %s25, 7
      %p200 = por %p198, %p199
      %p201 = scmp.ne.s32.totalorder %s190, %s191
      %p202 = scmp.eq.s32.totalorder %s25, 0
      %p203 = por %p201, %p202
      %p204 = scmp.ne.s32.totalorder %s190, %s191
      %p205 = scmp.eq.s32.totalorder %s26, 7
      %p206 = por %p204, %p205
      %p208 = scmp.ne.s32.totalorder %s191, %s207
      %p209 = scmp.eq.s32.totalorder %s26, 0
      %p210 = por %p208, %p209
      %s211 = ssub.s32 %s28, %s42
      %s212 = ssub.s32 %s27, %s46
      %s213 = sor.u32 %s211, %s212
      %s214 = ssub.s32 %s29, %s38
      %s215 = sor.u32 %s213, %s214
      %p216 = scmp.eq.s32.totalorder %s215, 0
      %s218 = sadd.s32 %s217, 1
      %s219 = scalar_select %p216, %s217, %s218
      %p222 = pneg %p216
      %p223 = scmp.eq.s32.totalorder %s20, 7
      %p224 = por %p222, %p223
      %p225 = scmp.ne.s32.totalorder %s217, %s220
      %p226 = scmp.eq.s32.totalorder %s20, 0
      %p227 = por %p225, %p226
      %p228 = scmp.ne.s32.totalorder %s217, %s220
      %p229 = scmp.eq.s32.totalorder %s25, 7
      %p230 = por %p228, %p229
      %p231 = scmp.ne.s32.totalorder %s220, %s221
      %p232 = scmp.eq.s32.totalorder %s25, 0
      %p233 = por %p231, %p232
      %p234 = scmp.ne.s32.totalorder %s220, %s221
      %p235 = scmp.eq.s32.totalorder %s26, 7
      %p236 = por %p234, %p235
      %p238 = scmp.ne.s32.totalorder %s221, %s237
      %p239 = scmp.eq.s32.totalorder %s26, 0
      %p240 = por %p238, %p239
      %s241 = ssub.s32 %s28, %s42
      %s242 = ssub.s32 %s27, %s46
      %s243 = sor.u32 %s241, %s242
      %s244 = ssub.s32 %s29, %s38
      %s245 = sor.u32 %s243, %s244
      %p246 = scmp.eq.s32.totalorder %s245, 0
      %s248 = sadd.s32 %s247, 1
      %s249 = scalar_select %p246, %s247, %s248
      %p252 = pneg %p246
      %p253 = scmp.eq.s32.totalorder %s20, 7
      %p254 = por %p252, %p253
      %p255 = scmp.ne.s32.totalorder %s247, %s250
      %p256 = scmp.eq.s32.totalorder %s20, 0
      %p257 = por %p255, %p256
      %p258 = scmp.ne.s32.totalorder %s247, %s250
      %p259 = scmp.eq.s32.totalorder %s25, 7
      %p260 = por %p258, %p259
      %p261 = scmp.ne.s32.totalorder %s250, %s251
      %p262 = scmp.eq.s32.totalorder %s25, 0
      %p263 = por %p261, %p262
      %p264 = scmp.ne.s32.totalorder %s250, %s251
      %p265 = scmp.eq.s32.totalorder %s26, 7
      %p266 = por %p264, %p265
      %p268 = scmp.ne.s32.totalorder %s251, %s267
      %p269 = scmp.eq.s32.totalorder %s26, 0
      %p270 = por %p268, %p269
      %p271 = scmp.le.s32.totalorder 1, %s20
      %p272 = scmp.lt.s32.totalorder %s20, 9
      %p273 = pnand %p271, %p272
      %p274 = pneg %p273
      // Predicated region
      $region9: #{tpu_custom_call.1} parent=5 // pred_check
        _
      $region10: #{tpu_custom_call.1} parent=5 // pred_check_branch
        %276 = sbr.rel (%p273) target = $region12
      $region11: #{tpu_custom_call.1} parent=5 // pred_region
        %s277 = ssub.s32 %s20, 1
      $region12: #{tpu_custom_call.1} parent=5 // pred_fallthru
        _
      %p278 = scmp.lt.s32.totalorder %s20, 8
      // Predicated region
      $region13: #{tpu_custom_call.1} parent=5 // pred_check
        %p279 = pneg %p278
      $region14: #{tpu_custom_call.1} parent=5 // pred_check_branch
        %281 = sbr.rel (%p279) target = $region16
      $region15: #{tpu_custom_call.1} parent=5 // pred_region
        // Predicated region
        $region17: #{tpu_custom_call.1} parent=15 // pred_check
          %p282 = pneg %p63
        $region18: #{tpu_custom_call.1} parent=15 // pred_check_branch
          %284 = sbr.rel (%p282) target = $region20
        $region19: #{tpu_custom_call.1} parent=15 // pred_region
          %s285 = sand.u32 %s53, 1
          %s286 = sand.u32 %s53, 1
          %s287 = smul.addr %s286, 16
          %s288 = scalar_lea.vmem [#allocation3], %s287
          %s289 = smul.u32 2, %s29
          %s290 = smul.addr %s27, 8
          %s291 = sadd.s32 %s289, %s290
          %s292 = smul.addr %s28, 16
          %s293 = sadd.s32 %s291, %s292
          %s294 = smul.addr %s293, 4
          %s295 = scalar_lea.vmem %s0, %s294
          // Predicated region
          $region21: #{tpu_custom_call.1} parent=19 // pred_check
            _
          $region22: #{tpu_custom_call.1} parent=19 // pred_check_branch
            %297 = sbr.rel (0) target = $region24
          $region23: #{tpu_custom_call.1} parent=19 // pred_region
            // Predicated region
            $region25: #{tpu_custom_call.1} parent=23 // pred_check
              _
            $region26: #{tpu_custom_call.1} parent=23 // pred_check_branch
              %299 = sbr.rel (0) target = $region28
            $region27: #{tpu_custom_call.1} parent=23 // pred_region
              // Predicated region
              $region40: #{tpu_custom_call.1} parent=27 // pred_check
                _
              $region41: #{tpu_custom_call.1} parent=27 // pred_check_branch
                %317 = sbr.rel (0) target = $region43
              $region42: #{tpu_custom_call.1} parent=27 // pred_region
                loop: start=0, step=1, limit=1
                $region44: #{tpu_custom_call.1} parent=42 // loop_pre_header
                  _
                $region45: #{tpu_custom_call.1} parent=42 // loop_header
                  %s319 = sphi 0, %s323
                  %p320 = scmp.ge.s32.totalorder %s319, 1
                  %s324 = sphi %s295, %s295
                  %s325 = sphi %s288, %s288
                $region46: #{tpu_custom_call.1} parent=42 // loop_header_branch
                  %322 = sbr.rel (%p320) target = $region50
                $region47: #{tpu_custom_call.1} parent=42 // loop_body
                  %v326 = vld [vmem:[%s324] sm:$0xff]
                  %327 = vst [vmem:[%s325] sm:$0xff] %v326
                  %v328 = vld [vmem:[%s324 + $0x10] sm:$0xff]
                  %329 = vst [vmem:[%s325 + $0x8] sm:$0xff] %v328
                $region48: #{tpu_custom_call.1} parent=42 // loop_footer
                  %s323 = sadd.s32 1, %s319
                $region49: #{tpu_custom_call.1} parent=42 // loop_footer_branch
                  %318 = sbr.rel target = $region45
                $region50: #{tpu_custom_call.1} parent=42 // loop_exit
                  _
              $region43: #{tpu_custom_call.1} parent=27 // pred_fallthru
                _
              // Predicated region
              $region51: #{tpu_custom_call.1} parent=27 // pred_check
                _
              $region52: #{tpu_custom_call.1} parent=27 // pred_check_branch
                %331 = sbr.rel target = $region54
              $region53: #{tpu_custom_call.1} parent=27 // pred_region
                _
              $region54: #{tpu_custom_call.1} parent=27 // pred_fallthru
                _
            $region28: #{tpu_custom_call.1} parent=23 // pred_fallthru
              _
            // Predicated region
            $region29: #{tpu_custom_call.1} parent=23 // pred_check
              _
            $region30: #{tpu_custom_call.1} parent=23 // pred_check_branch
              %301 = sbr.rel target = $region32
            $region31: #{tpu_custom_call.1} parent=23 // pred_region
              %s303 = ssub.s32 256, 1
              loop: start=0, step=1, limit=1
              $region33: #{tpu_custom_call.1} parent=31 // loop_pre_header
                _
              $region34: #{tpu_custom_call.1} parent=31 // loop_header
                %s305 = sphi 0, %s309
                %p306 = scmp.ge.s32.totalorder %s305, 1
                %s310 = sphi %s295, %s295
                %s311 = sphi %s288, %s288
              $region35: #{tpu_custom_call.1} parent=31 // loop_header_branch
                %308 = sbr.rel (%p306) target = $region39
              $region36: #{tpu_custom_call.1} parent=31 // loop_body
                %v312 = vld [vmem:[%s310] sm:%s303]
                %313 = vst [vmem:[%s311] sm:%s303] %v312
                %v314 = vld [vmem:[%s310 + $0x10] sm:%s303]
                %315 = vst [vmem:[%s311 + $0x8] sm:%s303] %v314
              $region37: #{tpu_custom_call.1} parent=31 // loop_footer
                %s309 = sadd.s32 1, %s305
              $region38: #{tpu_custom_call.1} parent=31 // loop_footer_branch
                %304 = sbr.rel target = $region34
              $region39: #{tpu_custom_call.1} parent=31 // loop_exit
                _
            $region32: #{tpu_custom_call.1} parent=23 // pred_fallthru
              _
          $region24: #{tpu_custom_call.1} parent=19 // pred_fallthru
            _
          %332 = vnop
        $region20: #{tpu_custom_call.1} parent=15 // pred_fallthru
          _
        // Predicated region
        $region55: #{tpu_custom_call.1} parent=15 // pred_check
          %p333 = pneg %p93
        $region56: #{tpu_custom_call.1} parent=15 // pred_check_branch
          %335 = sbr.rel (%p333) target = $region58
        $region57: #{tpu_custom_call.1} parent=15 // pred_region
          %s336 = sand.u32 %s83, 1
          %s337 = sand.u32 %s83, 1
          %s338 = smul.addr %s337, 16
          %s339 = scalar_lea.vmem [#allocation4], %s338
          %s340 = smul.u32 2, %s29
          %s341 = smul.addr %s27, 8
          %s342 = sadd.s32 %s340, %s341
          %s343 = smul.addr %s28, 16
          %s344 = sadd.s32 %s342, %s343
          %s345 = smul.addr %s344, 4
          %s346 = scalar_lea.vmem %s1, %s345
          // Predicated region
          $region59: #{tpu_custom_call.1} parent=57 // pred_check
            _
          $region60: #{tpu_custom_call.1} parent=57 // pred_check_branch
            %348 = sbr.rel (0) target = $region62
          $region61: #{tpu_custom_call.1} parent=57 // pred_region
            // Predicated region
            $region63: #{tpu_custom_call.1} parent=61 // pred_check
              _
            $region64: #{tpu_custom_call.1} parent=61 // pred_check_branch
              %350 = sbr.rel (0) target = $region66
            $region65: #{tpu_custom_call.1} parent=61 // pred_region
              // Predicated region
              $region78: #{tpu_custom_call.1} parent=65 // pred_check
                _
              $region79: #{tpu_custom_call.1} parent=65 // pred_check_branch
                %368 = sbr.rel (0) target = $region81
              $region80: #{tpu_custom_call.1} parent=65 // pred_region
                loop: start=0, step=1, limit=1
                $region82: #{tpu_custom_call.1} parent=80 // loop_pre_header
                  _
                $region83: #{tpu_custom_call.1} parent=80 // loop_header
                  %s370 = sphi 0, %s374
                  %p371 = scmp.ge.s32.totalorder %s370, 1
                  %s375 = sphi %s346, %s346
                  %s376 = sphi %s339, %s339
                $region84: #{tpu_custom_call.1} parent=80 // loop_header_branch
                  %373 = sbr.rel (%p371) target = $region88
                $region85: #{tpu_custom_call.1} parent=80 // loop_body
                  %v377 = vld [vmem:[%s375] sm:$0xff]
                  %378 = vst [vmem:[%s376] sm:$0xff] %v377
                  %v379 = vld [vmem:[%s375 + $0x10] sm:$0xff]
                  %380 = vst [vmem:[%s376 + $0x8] sm:$0xff] %v379
                $region86: #{tpu_custom_call.1} parent=80 // loop_footer
                  %s374 = sadd.s32 1, %s370
                $region87: #{tpu_custom_call.1} parent=80 // loop_footer_branch
                  %369 = sbr.rel target = $region83
                $region88: #{tpu_custom_call.1} parent=80 // loop_exit
                  _
              $region81: #{tpu_custom_call.1} parent=65 // pred_fallthru
                _
              // Predicated region
              $region89: #{tpu_custom_call.1} parent=65 // pred_check
                _
              $region90: #{tpu_custom_call.1} parent=65 // pred_check_branch
                %382 = sbr.rel target = $region92
              $region91: #{tpu_custom_call.1} parent=65 // pred_region
                _
              $region92: #{tpu_custom_call.1} parent=65 // pred_fallthru
                _
            $region66: #{tpu_custom_call.1} parent=61 // pred_fallthru
              _
            // Predicated region
            $region67: #{tpu_custom_call.1} parent=61 // pred_check
              _
            $region68: #{tpu_custom_call.1} parent=61 // pred_check_branch
              %352 = sbr.rel target = $region70
            $region69: #{tpu_custom_call.1} parent=61 // pred_region
              %s354 = ssub.s32 256, 1
              loop: start=0, step=1, limit=1
              $region71: #{tpu_custom_call.1} parent=69 // loop_pre_header
                _
              $region72: #{tpu_custom_call.1} parent=69 // loop_header
                %s356 = sphi 0, %s360
                %p357 = scmp.ge.s32.totalorder %s356, 1
                %s361 = sphi %s346, %s346
                %s362 = sphi %s339, %s339
              $region73: #{tpu_custom_call.1} parent=69 // loop_header_branch
                %359 = sbr.rel (%p357) target = $region77
              $region74: #{tpu_custom_call.1} parent=69 // loop_body
                %v363 = vld [vmem:[%s361] sm:%s354]
                %364 = vst [vmem:[%s362] sm:%s354] %v363
                %v365 = vld [vmem:[%s361 + $0x10] sm:%s354]
                %366 = vst [vmem:[%s362 + $0x8] sm:%s354] %v365
              $region75: #{tpu_custom_call.1} parent=69 // loop_footer
                %s360 = sadd.s32 1, %s356
              $region76: #{tpu_custom_call.1} parent=69 // loop_footer_branch
                %355 = sbr.rel target = $region72
              $region77: #{tpu_custom_call.1} parent=69 // loop_exit
                _
            $region70: #{tpu_custom_call.1} parent=61 // pred_fallthru
              _
          $region62: #{tpu_custom_call.1} parent=57 // pred_fallthru
            _
          %383 = vnop
        $region58: #{tpu_custom_call.1} parent=15 // pred_fallthru
          _
        // Predicated region
        $region93: #{tpu_custom_call.1} parent=15 // pred_check
          %p384 = pneg %p119
        $region94: #{tpu_custom_call.1} parent=15 // pred_check_branch
          %386 = sbr.rel (%p384) target = $region96
        $region95: #{tpu_custom_call.1} parent=15 // pred_region
          %p387 = scmp.lt.s32.totalorder %s27, 1
          %s388 = scalar_select %p387, %s27, 1
          %s389 = smul.addr %s388, 3
          %s390 = smul.addr %s389, 4
          %s391 = scalar_lea.vmem %s2, %s390
        $region96: #{tpu_custom_call.1} parent=15 // pred_fallthru
          _
        // Predicated region
        $region97: #{tpu_custom_call.1} parent=15 // pred_check
          %p392 = pneg %p145
        $region98: #{tpu_custom_call.1} parent=15 // pred_check_branch
          %394 = sbr.rel (%p392) target = $region100
        $region99: #{tpu_custom_call.1} parent=15 // pred_region
          %p395 = scmp.lt.s32.totalorder %s27, 1
          %s396 = scalar_select %p395, %s27, 1
          %s397 = smul.addr %s396, 3
          %s398 = smul.addr %s397, 4
          %s399 = scalar_lea.vmem %s3, %s398
        $region100: #{tpu_custom_call.1} parent=15 // pred_fallthru
          _
        // Predicated region
        $region101: #{tpu_custom_call.1} parent=15 // pred_check
          %p400 = pneg %p171
        $region102: #{tpu_custom_call.1} parent=15 // pred_check_branch
          %402 = sbr.rel (%p400) target = $region104
        $region103: #{tpu_custom_call.1} parent=15 // pred_region
          %p403 = scmp.lt.s32.totalorder %s27, 1
          %s404 = scalar_select %p403, %s27, 1
          %s405 = smul.addr %s404, 16
          %s406 = smul.addr %s405, 8
          %s407 = scalar_lea.vmem %s4, %s406
        $region104: #{tpu_custom_call.1} parent=15 // pred_fallthru
          _
        // Predicated region
        $region105: #{tpu_custom_call.1} parent=15 // pred_check
          %p408 = pneg %p197
        $region106: #{tpu_custom_call.1} parent=15 // pred_check_branch
          %410 = sbr.rel (%p408) target = $region108
        $region107: #{tpu_custom_call.1} parent=15 // pred_region
          %p411 = scmp.lt.s32.totalorder %s27, 1
          %s412 = scalar_select %p411, %s27, 1
          %s413 = smul.addr %s412, 8
          %s414 = smul.addr %s413, 8
          %s415 = scalar_lea.vmem %s5, %s414
        $region108: #{tpu_custom_call.1} parent=15 // pred_fallthru
          _
      $region16: #{tpu_custom_call.1} parent=5 // pred_fallthru
        _
      %p416 = scmp.le.s32.totalorder 1, %s20
      %p417 = scmp.lt.s32.totalorder %s20, 9
      %p418 = pnand %p416, %p417
      %p419 = pneg %p418
      // Predicated region
      $region109: #{tpu_custom_call.1} parent=5 // pred_check
        _
      $region110: #{tpu_custom_call.1} parent=5 // pred_check_branch
        %421 = sbr.rel (%p418) target = $region112
      $region111: #{tpu_custom_call.1} parent=5 // pred_region
        %s422 = ssub.s32 %s20, 1
        %s423 = sand.u32 %s56, 1
        %s424 = sand.u32 %s56, 1
        %s425 = smul.addr %s424, 16
        %s426 = scalar_lea.vmem [#allocation3], %s425
        // Predicated region
        $region113: #{tpu_custom_call.1} parent=111 // pred_check
          %p427 = pneg %p69
        $region114: #{tpu_custom_call.1} parent=111 // pred_check_branch
          %429 = sbr.rel (%p427) target = $region116
        $region115: #{tpu_custom_call.1} parent=111 // pred_region
          _
        $region116: #{tpu_custom_call.1} parent=111 // pred_fallthru
          _
        %s430 = sand.u32 %s86, 1
        %s431 = sand.u32 %s86, 1
        %s432 = smul.addr %s431, 16
        %s433 = scalar_lea.vmem [#allocation4], %s432
        // Predicated region
        $region117: #{tpu_custom_call.1} parent=111 // pred_check
          %p434 = pneg %p99
        $region118: #{tpu_custom_call.1} parent=111 // pred_check_branch
          %436 = sbr.rel (%p434) target = $region120
        $region119: #{tpu_custom_call.1} parent=111 // pred_region
          _
        $region120: #{tpu_custom_call.1} parent=111 // pred_fallthru
          _
        %s437 = sand.u32 %s56, 1
        %s438 = sand.u32 %s56, 1
        %s439 = smul.addr %s438, 16
        %s440 = scalar_lea.vmem [#allocation3], %s439
        %p441 = pneg %p69
        %p442 = pneg %p66
        %s443 = sand.u32 %s86, 1
        %s444 = sand.u32 %s86, 1
        %s445 = smul.addr %s444, 16
        %s446 = scalar_lea.vmem [#allocation4], %s445
        %p447 = pneg %p99
        %p448 = pneg %p96
        %p449 = scmp.lt.s32.totalorder %s30, 1
        %s450 = scalar_select %p449, %s30, 1
        %s451 = smul.addr %s450, 3
        %s452 = smul.addr %s451, 4
        %s453 = scalar_lea.vmem %s2, %s452
        %p454 = pneg %p125
        %p455 = pneg %p122
        %p456 = scmp.lt.s32.totalorder %s30, 1
        %s457 = scalar_select %p456, %s30, 1
        %s458 = smul.addr %s457, 3
        %s459 = smul.addr %s458, 4
        %s460 = scalar_lea.vmem %s3, %s459
        %p461 = pneg %p151
        %p462 = pneg %p148
        %p463 = scmp.lt.s32.totalorder %s30, 1
        %s464 = scalar_select %p463, %s30, 1
        %s465 = smul.addr %s464, 16
        %s466 = smul.addr %s465, 8
        %s467 = scalar_lea.vmem %s4, %s466
        %p468 = pneg %p177
        %p469 = pneg %p174
        %p470 = scmp.lt.s32.totalorder %s30, 1
        %s471 = scalar_select %p470, %s30, 1
        %s472 = smul.addr %s471, 8
        %s473 = smul.addr %s472, 8
        %s474 = scalar_lea.vmem %s5, %s473
        %p475 = pneg %p203
        %p476 = pneg %p200
        %p477 = pneg %p233
        %p478 = pneg %p230
        %s479 = sand.u32 %s220, 1
        %s480 = scalar_lea.sflag [#allocation6], %s479
        %s481 = sand.u32 %s220, 1
        %s482 = smul.addr %s481, 16
        %s483 = scalar_lea.vmem [#allocation5], %s482
        %p484 = pneg %p263
        %p485 = pneg %p260
        %s486 = sand.u32 %s250, 1
        %s487 = scalar_lea.sflag [#allocation8], %s486
        %s488 = sand.u32 %s250, 1
        %s489 = smul.addr %s488, 16
        %s490 = scalar_lea.vmem [#allocation7], %s489
        %s491 = smul.u32 2, %s32
        %s492 = smul.u32 2, %s32
        %p493 = scmp.lt.s32.totalorder %s30, 1
        %s494 = scalar_select %p493, %s30, 1
        %s495 = smul.addr %s494, 3
        %s496 = smul.addr %s495, 4
        %s497 = scalar_lea.vmem %s2, %s496
        %p498 = scmp.lt.s32.totalorder %s30, 1
        %s499 = scalar_select %p498, %s30, 1
        %s500 = smul.addr %s499, 3
        %s501 = smul.addr %s500, 4
        %s502 = scalar_lea.vmem %s3, %s501
        %p503 = scmp.lt.s32.totalorder %s30, 1
        %s504 = scalar_select %p503, %s30, 1
        %s505 = smul.addr %s504, 16
        %s506 = smul.addr %s505, 8
        %s507 = scalar_lea.vmem %s4, %s506
        %p508 = scmp.lt.s32.totalorder %s30, 1
        %s509 = scalar_select %p508, %s30, 1
        %s510 = smul.addr %s509, 8
        %s511 = smul.addr %s510, 8
        %s512 = scalar_lea.vmem %s5, %s511
        %s513 = smul.u32 2, %s32
        %s514 = smul.u32 2, %s32
        %p516 = scmp.eq.s32.totalorder %s32, 0
        // Predicated region
        $region121: #{tpu_custom_call.1} parent=111 // pred_check
          %p517 = pneg %p516
        $region122: #{tpu_custom_call.1} parent=111 // pred_check_branch
          %519 = sbr.rel (%p517) target = $region124
        $region123: #{tpu_custom_call.1} parent=111 // pred_region
          %vm520 = vcmask 7168
          %521 = vst.msk [vmem:[#allocation2] sm:$0xff] %vm520, 0.0
          %522 = vst.msk [vmem:[#allocation2 + $0x8] sm:$0xff] %vm520, 0.0
          %523 = vst.msk [vmem:[#allocation2 + $0x10] sm:$0xff] %vm520, 0.0
          %524 = vst.msk [vmem:[#allocation2 + $0x18] sm:$0xff] %vm520, 0.0
          %525 = vst.msk [vmem:[#allocation2 + $0x20] sm:$0xff] %vm520, 0.0
          %526 = vst.msk [vmem:[#allocation2 + $0x28] sm:$0xff] %vm520, 0.0
          %527 = vst.msk [vmem:[#allocation2 + $0x30] sm:$0xff] %vm520, 0.0
          %528 = vst.msk [vmem:[#allocation2 + $0x38] sm:$0xff] %vm520, 0.0
          %529 = vst.msk [vmem:[#allocation2 + $0x40] sm:$0xff] %vm520, 0.0
          %530 = vst.msk [vmem:[#allocation2 + $0x48] sm:$0xff] %vm520, 0.0
          %531 = vst.msk [vmem:[#allocation2 + $0x50] sm:$0xff] %vm520, 0.0
          %532 = vst.msk [vmem:[#allocation2 + $0x58] sm:$0xff] %vm520, 0.0
          %533 = vst.msk [vmem:[#allocation2 + $0x60] sm:$0xff] %vm520, 0.0
          %534 = vst.msk [vmem:[#allocation2 + $0x68] sm:$0xff] %vm520, 0.0
          %535 = vst.msk [vmem:[#allocation2 + $0x70] sm:$0xff] %vm520, 0.0
          %536 = vst.msk [vmem:[#allocation2 + $0x78] sm:$0xff] %vm520, 0.0
        $region124: #{tpu_custom_call.1} parent=111 // pred_fallthru
          _
        %v537 = vld [vmem:[%s426] sm:$0xff]
        %v538 = vld [vmem:[%s426 + $0x8] sm:$0xff]
        %v539 = vld [vmem:[%s433] sm:$0xff]
        %v540 = vld [vmem:[%s433 + $0x8] sm:$0xff]
        %v541 = vunpack.c.l.bf16 %v537
        %v542 = vunpack.c.h.bf16 %v537
        %v543 = vunpack.c.l.bf16 %v538
        %v544 = vunpack.c.h.bf16 %v538
        %v545 = vunpack.c.l.bf16 %v539
        %v546 = vunpack.c.h.bf16 %v539
        %v547 = vunpack.c.l.bf16 %v540
        %v548 = vunpack.c.h.bf16 %v540
        %v549 = vld [vmem:[%s497] sm:$0xf]
        %v550 = vld [vmem:[%s497 + $0x4] sm:$0xf]
        %v551 = vld [vmem:[%s497 + $0x8] sm:$0xf]
        %v555 = vunpack.c.l.b16 %v549
        %v556 = vunpack.c.l.b16 %v550
        %v557 = vunpack.c.l.b16 %v551
        %v558 = vpack.c.b16 %v556, %v555
        %v559 = vpack.c.b16 %v557, %v557
        %v562 = vunpack.c.l.b16 %v537
        %v563 = vunpack.c.h.b16 %v537
        %v564 = vunpack.c.l.b16 %v538
        %v565 = vunpack.c.h.b16 %v538
        %v566 = vpack.c.b16 %v564, %v562
        %v567 = vpack.c.b16 %v565, %v563
        %vm570 = vcmask 130048
        %v572 = vsel %vm570, %v558, 0
        %v575 = vsel %vm570, %v559, 0
        %577 = vmatprep.subr.bf16.mxu0 0
        %578 = vmatpush1.bf16.msra.mxu0 0
        %579 = vmatprep.subr.bf16.mxu0 0
        %580 = vmatpush1.bf16.msra.mxu0 0
        %581 = vmatprep.subr.bf16.mxu0 0
        %582 = vmatpush1.bf16.msra.mxu0 0
        %583 = vmatprep.subr.bf16.mxu0 0
        %584 = vmatpush1.bf16.msra.mxu0 0
        %585 = vmatprep.subr.bf16.mxu0 0
        %586 = vmatpush1.bf16.msra.mxu0 0
        %587 = vmatprep.subr.bf16.mxu0 0
        %588 = vmatpush1.bf16.msra.mxu0 0
        %589 = vmatprep.subr.bf16.mxu0 0
        %590 = vmatpush1.bf16.msra.mxu0 0
        %591 = vmatprep.subr.bf16.mxu0 %v567
        %592 = vmatpush1.bf16.msra.mxu0 %v566
        %593 = vmatprep.subr.bf16.mxu0 0
        %594 = vmatpush2.bf16.msra.mxu0 0
        %595 = vmatprep.subr.bf16.mxu0 0
        %596 = vmatpush2.bf16.msra.mxu0 0
        %597 = vmatprep.subr.bf16.mxu0 0
        %598 = vmatpush2.bf16.msra.mxu0 0
        %599 = vmatprep.subr.bf16.mxu0 0
        %600 = vmatpush2.bf16.msra.mxu0 0
        %601 = vmatprep.subr.bf16.mxu0 0
        %602 = vmatpush2.bf16.msra.mxu0 0
        %603 = vmatprep.subr.bf16.mxu0 0
        %604 = vmatpush2.bf16.msra.mxu0 0
        %605 = vmatprep.subr.bf16.mxu0 0
        %606 = vmatpush2.bf16.msra.mxu0 0
        %607 = vmatprep.subr.bf16.mxu0 0
        %608 = vmatpush2.bf16.msra.mxu0 0
        %609 = vmatprep.mubr.bf16.mxu0 0
        %610 = vmatmul.mubr.bf16.gmra.mxu0 %v572
        %v611 = vpop.f32.mrf.mxu0
        %v612 = vadd.f32 0.0, %v611
        %v613 = vpop.f32.mrf.mxu0
        %v614 = vadd.f32 0.0, %v613
        %v615 = vpop.f32.mrf.mxu0
        %v616 = vadd.f32 0.0, %v615
        %v617 = vpop.f32.mrf.mxu0
        %v618 = vadd.f32 0.0, %v617
        %619 = vmatprep.mubr.bf16.mxu0 0
        %620 = vmatmul.mubr.bf16.gmra.mxu0 %v575
        %v621 = vpop.f32.mrf.mxu0
        %v622 = vadd.f32 0.0, %v621
        %v623 = vpop.f32.mrf.mxu0
        %v624 = vadd.f32 0.0, %v623
        %v625 = vpop.f32.mrf.mxu0
        %v626 = vpop.f32.mrf.mxu0
        %627 = vdwg.mxu0
        %v628 = vld [vmem:[%s502] sm:$0xf]
        %v629 = vld [vmem:[%s502 + $0x4] sm:$0xf]
        %v630 = vld [vmem:[%s502 + $0x8] sm:$0xf]
        %v634 = vunpack.c.l.b16 %v628
        %v635 = vunpack.c.l.b16 %v629
        %v636 = vunpack.c.l.b16 %v630
        %v637 = vpack.c.b16 %v635, %v634
        %v638 = vpack.c.b16 %v636, %v636
        %v641 = vunpack.c.l.b16 %v539
        %v642 = vunpack.c.h.b16 %v539
        %v643 = vunpack.c.l.b16 %v540
        %v644 = vunpack.c.h.b16 %v540
        %v645 = vpack.c.b16 %v643, %v641
        %v646 = vpack.c.b16 %v644, %v642
        %v650 = vsel %vm570, %v637, 0
        %v653 = vsel %vm570, %v638, 0
        %655 = vmatprep.subr.bf16.mxu0 0
        %656 = vmatpush1.bf16.msra.mxu0 0
        %657 = vmatprep.subr.bf16.mxu0 0
        %658 = vmatpush1.bf16.msra.mxu0 0
        %659 = vmatprep.subr.bf16.mxu0 0
        %660 = vmatpush1.bf16.msra.mxu0 0
        %661 = vmatprep.subr.bf16.mxu0 0
        %662 = vmatpush1.bf16.msra.mxu0 0
        %663 = vmatprep.subr.bf16.mxu0 0
        %664 = vmatpush1.bf16.msra.mxu0 0
        %665 = vmatprep.subr.bf16.mxu0 0
        %666 = vmatpush1.bf16.msra.mxu0 0
        %667 = vmatprep.subr.bf16.mxu0 0
        %668 = vmatpush1.bf16.msra.mxu0 0
        %669 = vmatprep.subr.bf16.mxu0 %v646
        %670 = vmatpush1.bf16.msra.mxu0 %v645
        %671 = vmatprep.subr.bf16.mxu0 0
        %672 = vmatpush2.bf16.msra.mxu0 0
        %673 = vmatprep.subr.bf16.mxu0 0
        %674 = vmatpush2.bf16.msra.mxu0 0
        %675 = vmatprep.subr.bf16.mxu0 0
        %676 = vmatpush2.bf16.msra.mxu0 0
        %677 = vmatprep.subr.bf16.mxu0 0
        %678 = vmatpush2.bf16.msra.mxu0 0
        %679 = vmatprep.subr.bf16.mxu0 0
        %680 = vmatpush2.bf16.msra.mxu0 0
        %681 = vmatprep.subr.bf16.mxu0 0
        %682 = vmatpush2.bf16.msra.mxu0 0
        %683 = vmatprep.subr.bf16.mxu0 0
        %684 = vmatpush2.bf16.msra.mxu0 0
        %685 = vmatprep.subr.bf16.mxu0 0
        %686 = vmatpush2.bf16.msra.mxu0 0
        %687 = vmatprep.mubr.bf16.mxu0 0
        %688 = vmatmul.mubr.bf16.gmra.mxu0 %v650
        %v689 = vpop.f32.mrf.mxu0
        %v690 = vadd.f32 0.0, %v689
        %v691 = vpop.f32.mrf.mxu0
        %v692 = vadd.f32 0.0, %v691
        %v693 = vpop.f32.mrf.mxu0
        %v694 = vadd.f32 0.0, %v693
        %v695 = vpop.f32.mrf.mxu0
        %v696 = vadd.f32 0.0, %v695
        %697 = vmatprep.mubr.bf16.mxu0 0
        %698 = vmatmul.mubr.bf16.gmra.mxu0 %v653
        %v699 = vpop.f32.mrf.mxu0
        %v700 = vadd.f32 0.0, %v699
        %v701 = vpop.f32.mrf.mxu0
        %v702 = vadd.f32 0.0, %v701
        %v703 = vpop.f32.mrf.mxu0
        %v704 = vpop.f32.mrf.mxu0
        %705 = vdwg.mxu0
        %v706 = vld [vmem:[%s512] sm:$0xff]
        %v707 = vld [vmem:[%s512 + $0x8] sm:$0xff]
        %s708 = scalar_lea.vmem %s512, 16
        %v709 = vld [vmem:[%s708] sm:$0xff]
        %v710 = vld [vmem:[%s708 + $0x8] sm:$0xff]
        %s711 = scalar_lea.vmem %s512, 32
        %v712 = vld [vmem:[%s711] sm:$0xff]
        %v713 = vld [vmem:[%s711 + $0x8] sm:$0xff]
        %s714 = scalar_lea.vmem %s512, 48
        %v715 = vld [vmem:[%s714] sm:$0xff]
        %v716 = vld [vmem:[%s714 + $0x8] sm:$0xff]
        %718 = vset.pattern.permute.xlu0 0
        %719 = vperm.xlu0 %718, %v706
        %v720 = vpop.permute.xlu0 %719
        %723 = vset.pattern.permute.xlu0 0
        %724 = vperm.xlu0 %723, %v707
        %v725 = vpop.permute.xlu0 %724
        %v727 = vadd.f32 %v612, %v720
        %v728 = vadd.f32 %v614, %v720
        %v729 = vadd.f32 %v616, %v725
        %v730 = vadd.f32 %v618, %v725
        %vm731 = vcmp.gt.f32.partialorder %v727, 20.0
        %vm732 = vcmp.gt.f32.partialorder %v728, 20.0
        %vm733 = vcmp.gt.f32.partialorder %v729, 20.0
        %vm734 = vcmp.gt.f32.partialorder %v730, 20.0
        %v735 = vmul.f32 %v727, 1.442695
        %v736 = vpow.pop %v735
        %v737 = vmul.f32 %v728, 1.442695
        %v738 = vpow.pop %v737
        %v739 = vmul.f32 %v729, 1.442695
        %v740 = vpow.pop %v739
        %v741 = vmul.f32 %v730, 1.442695
        %v742 = vpow.pop %v741
        %v743 = vadd.f32 %v736, 1.0
        %v744 = vlog2.pop %v743
        %v745 = vmul.f32 %v744, 0.6931472
        %v746 = vmul.f32 -0.5, %v736
        %v747 = vadd.f32 %v746, 1.0
        %v748 = vmul.f32 %v747, %v736
        %v749 = vand.u32 2147483647, %v736
        %vm750 = vcmp.lt.f32.partialorder %v749, 0.0004427343
        %v751 = vsel %vm750, %v748, %v745
        %v752 = vadd.f32 %v738, 1.0
        %v753 = vlog2.pop %v752
        %v754 = vmul.f32 %v753, 0.6931472
        %v755 = vmul.f32 -0.5, %v738
        %v756 = vadd.f32 %v755, 1.0
        %v757 = vmul.f32 %v756, %v738
        %v758 = vand.u32 2147483647, %v738
        %vm759 = vcmp.lt.f32.partialorder %v758, 0.0004427343
        %v760 = vsel %vm759, %v757, %v754
        %v761 = vadd.f32 %v740, 1.0
        %v762 = vlog2.pop %v761
        %v763 = vmul.f32 %v762, 0.6931472
        %v764 = vmul.f32 -0.5, %v740
        %v765 = vadd.f32 %v764, 1.0
        %v766 = vmul.f32 %v765, %v740
        %v767 = vand.u32 2147483647, %v740
        %vm768 = vcmp.lt.f32.partialorder %v767, 0.0004427343
        %v769 = vsel %vm768, %v766, %v763
        %v770 = vadd.f32 %v742, 1.0
        %v771 = vlog2.pop %v770
        %v772 = vmul.f32 %v771, 0.6931472
        %v773 = vmul.f32 -0.5, %v742
        %v774 = vadd.f32 %v773, 1.0
        %v775 = vmul.f32 %v774, %v742
        %v776 = vand.u32 2147483647, %v742
        %vm777 = vcmp.lt.f32.partialorder %v776, 0.0004427343
        %v778 = vsel %vm777, %v775, %v772
        %v779 = vsel %vm731, %v727, %v751
        %v780 = vsel %vm732, %v728, %v760
        %v781 = vsel %vm733, %v729, %v769
        %v782 = vsel %vm734, %v730, %v778
        %784 = vset.pattern.permute.xlu0 0
        %785 = vperm.xlu0 %784, %v709
        %v786 = vpop.permute.xlu0 %785
        %789 = vset.pattern.permute.xlu0 0
        %790 = vperm.xlu0 %789, %v710
        %v791 = vpop.permute.xlu0 %790
        %v793 = vadd.f32 %v690, %v786
        %v794 = vadd.f32 %v692, %v786
        %v795 = vadd.f32 %v694, %v791
        %v796 = vadd.f32 %v696, %v791
        %vm797 = vcmp.gt.f32.partialorder %v793, 20.0
        %vm798 = vcmp.gt.f32.partialorder %v794, 20.0
        %vm799 = vcmp.gt.f32.partialorder %v795, 20.0
        %vm800 = vcmp.gt.f32.partialorder %v796, 20.0
        %v801 = vmul.f32 %v793, 1.442695
        %v802 = vpow.pop %v801
        %v803 = vmul.f32 %v794, 1.442695
        %v804 = vpow.pop %v803
        %v805 = vmul.f32 %v795, 1.442695
        %v806 = vpow.pop %v805
        %v807 = vmul.f32 %v796, 1.442695
        %v808 = vpow.pop %v807
        %v809 = vadd.f32 %v802, 1.0
        %v810 = vlog2.pop %v809
        %v811 = vmul.f32 %v810, 0.6931472
        %v812 = vmul.f32 -0.5, %v802
        %v813 = vadd.f32 %v812, 1.0
        %v814 = vmul.f32 %v813, %v802
        %v815 = vand.u32 2147483647, %v802
        %vm816 = vcmp.lt.f32.partialorder %v815, 0.0004427343
        %v817 = vsel %vm816, %v814, %v811
        %v818 = vadd.f32 %v804, 1.0
        %v819 = vlog2.pop %v818
        %v820 = vmul.f32 %v819, 0.6931472
        %v821 = vmul.f32 -0.5, %v804
        %v822 = vadd.f32 %v821, 1.0
        %v823 = vmul.f32 %v822, %v804
        %v824 = vand.u32 2147483647, %v804
        %vm825 = vcmp.lt.f32.partialorder %v824, 0.0004427343
        %v826 = vsel %vm825, %v823, %v820
        %v827 = vadd.f32 %v806, 1.0
        %v828 = vlog2.pop %v827
        %v829 = vmul.f32 %v828, 0.6931472
        %v830 = vmul.f32 -0.5, %v806
        %v831 = vadd.f32 %v830, 1.0
        %v832 = vmul.f32 %v831, %v806
        %v833 = vand.u32 2147483647, %v806
        %vm834 = vcmp.lt.f32.partialorder %v833, 0.0004427343
        %v835 = vsel %vm834, %v832, %v829
        %v836 = vadd.f32 %v808, 1.0
        %v837 = vlog2.pop %v836
        %v838 = vmul.f32 %v837, 0.6931472
        %v839 = vmul.f32 -0.5, %v808
        %v840 = vadd.f32 %v839, 1.0
        %v841 = vmul.f32 %v840, %v808
        %v842 = vand.u32 2147483647, %v808
        %vm843 = vcmp.lt.f32.partialorder %v842, 0.0004427343
        %v844 = vsel %vm843, %v841, %v838
        %v845 = vsel %vm797, %v793, %v817
        %v846 = vsel %vm798, %v794, %v826
        %v847 = vsel %vm799, %v795, %v835
        %v848 = vsel %vm800, %v796, %v844
        %v849 = vmul.f32 %v779, %v541
        %v850 = vmul.f32 %v780, %v542
        %v851 = vmul.f32 %v781, %v543
        %v852 = vmul.f32 %v782, %v544
        %v853 = vmul.f32 %v845, %v545
        %v854 = vmul.f32 %v846, %v546
        %v855 = vmul.f32 %v847, %v547
        %v856 = vmul.f32 %v848, %v548
        %v857 = vld [vmem:[%s507] sm:$0xff]
        %v858 = vld [vmem:[%s507 + $0x8] sm:$0xff]
        %v859 = vld [vmem:[%s507 + $0x10] sm:$0xff]
        %v860 = vld [vmem:[%s507 + $0x18] sm:$0xff]
        %v861 = vld [vmem:[%s507 + $0x20] sm:$0xff]
        %v862 = vld [vmem:[%s507 + $0x28] sm:$0xff]
        %v863 = vld [vmem:[%s507 + $0x30] sm:$0xff]
        %v864 = vld [vmem:[%s507 + $0x38] sm:$0xff]
        %v865 = vld [vmem:[%s507 + $0x40] sm:$0xff]
        %v866 = vld [vmem:[%s507 + $0x48] sm:$0xff]
        %v867 = vld [vmem:[%s507 + $0x50] sm:$0xff]
        %v868 = vld [vmem:[%s507 + $0x58] sm:$0xff]
        %v869 = vld [vmem:[%s507 + $0x60] sm:$0xff]
        %v870 = vld [vmem:[%s507 + $0x68] sm:$0xff]
        %v871 = vld [vmem:[%s507 + $0x70] sm:$0xff]
        %v872 = vld [vmem:[%s507 + $0x78] sm:$0xff]
        %874 = vset.pattern.permute.xlu0 0
        %875 = vperm.xlu0 %874, %v857
        %v876 = vpop.permute.xlu0 %875
        %879 = vset.pattern.permute.xlu0 0
        %880 = vperm.xlu0 %879, %v858
        %v881 = vpop.permute.xlu0 %880
        %884 = vset.pattern.permute.xlu0 0
        %885 = vperm.xlu0 %884, %v859
        %v886 = vpop.permute.xlu0 %885
        %889 = vset.pattern.permute.xlu0 0
        %890 = vperm.xlu0 %889, %v860
        %v891 = vpop.permute.xlu0 %890
        %894 = vset.pattern.permute.xlu0 0
        %895 = vperm.xlu0 %894, %v861
        %v896 = vpop.permute.xlu0 %895
        %899 = vset.pattern.permute.xlu0 0
        %900 = vperm.xlu0 %899, %v862
        %v901 = vpop.permute.xlu0 %900
        %904 = vset.pattern.permute.xlu0 0
        %905 = vperm.xlu0 %904, %v863
        %v906 = vpop.permute.xlu0 %905
        %909 = vset.pattern.permute.xlu0 0
        %910 = vperm.xlu0 %909, %v864
        %v911 = vpop.permute.xlu0 %910
        %914 = vset.pattern.permute.xlu0 0
        %915 = vperm.xlu0 %914, %v865
        %v916 = vpop.permute.xlu0 %915
        %919 = vset.pattern.permute.xlu0 0
        %920 = vperm.xlu0 %919, %v866
        %v921 = vpop.permute.xlu0 %920
        %924 = vset.pattern.permute.xlu0 0
        %925 = vperm.xlu0 %924, %v867
        %v926 = vpop.permute.xlu0 %925
        %929 = vset.pattern.permute.xlu0 0
        %930 = vperm.xlu0 %929, %v868
        %v931 = vpop.permute.xlu0 %930
        %934 = vset.pattern.permute.xlu0 0
        %935 = vperm.xlu0 %934, %v869
        %v936 = vpop.permute.xlu0 %935
        %939 = vset.pattern.permute.xlu0 0
        %940 = vperm.xlu0 %939, %v870
        %v941 = vpop.permute.xlu0 %940
        %944 = vset.pattern.permute.xlu0 0
        %945 = vperm.xlu0 %944, %v871
        %v946 = vpop.permute.xlu0 %945
        %949 = vset.pattern.permute.xlu0 0
        %950 = vperm.xlu0 %949, %v872
        %v951 = vpop.permute.xlu0 %950
        %v953 = vmul.f32 %v779, %v876
        %v954 = vmul.f32 %v780, %v876
        %v955 = vmul.f32 %v781, %v881
        %v956 = vmul.f32 %v782, %v881
        %v957 = vmul.f32 %v779, %v886
        %v958 = vmul.f32 %v780, %v886
        %v959 = vmul.f32 %v781, %v891
        %v960 = vmul.f32 %v782, %v891
        %v961 = vmul.f32 %v779, %v896
        %v962 = vmul.f32 %v780, %v896
        %v963 = vmul.f32 %v781, %v901
        %v964 = vmul.f32 %v782, %v901
        %v965 = vmul.f32 %v779, %v906
        %v966 = vmul.f32 %v780, %v906
        %v967 = vmul.f32 %v781, %v911
        %v968 = vmul.f32 %v782, %v911
        %v969 = vmul.f32 %v845, %v916
        %v970 = vmul.f32 %v846, %v916
        %v971 = vmul.f32 %v847, %v921
        %v972 = vmul.f32 %v848, %v921
        %v973 = vmul.f32 %v845, %v926
        %v974 = vmul.f32 %v846, %v926
        %v975 = vmul.f32 %v847, %v931
        %v976 = vmul.f32 %v848, %v931
        %v977 = vmul.f32 %v845, %v936
        %v978 = vmul.f32 %v846, %v936
        %v979 = vmul.f32 %v847, %v941
        %v980 = vmul.f32 %v848, %v941
        %v981 = vmul.f32 %v845, %v946
        %v982 = vmul.f32 %v846, %v946
        %v983 = vmul.f32 %v847, %v951
        %v984 = vmul.f32 %v848, %v951
        %v985 = vmul.f32 %v953, 1.442695
        %v986 = vpow.pop %v985
        %v987 = vmul.f32 %v954, 1.442695
        %v988 = vpow.pop %v987
        %v989 = vmul.f32 %v955, 1.442695
        %v990 = vpow.pop %v989
        %v991 = vmul.f32 %v956, 1.442695
        %v992 = vpow.pop %v991
        %v993 = vmul.f32 %v957, 1.442695
        %v994 = vpow.pop %v993
        %v995 = vmul.f32 %v958, 1.442695
        %v996 = vpow.pop %v995
        %v997 = vmul.f32 %v959, 1.442695
        %v998 = vpow.pop %v997
        %v999 = vmul.f32 %v960, 1.442695
        %v1000 = vpow.pop %v999
        %v1001 = vmul.f32 %v961, 1.442695
        %v1002 = vpow.pop %v1001
        %v1003 = vmul.f32 %v962, 1.442695
        %v1004 = vpow.pop %v1003
        %v1005 = vmul.f32 %v963, 1.442695
        %v1006 = vpow.pop %v1005
        %v1007 = vmul.f32 %v964, 1.442695
        %v1008 = vpow.pop %v1007
        %v1009 = vmul.f32 %v965, 1.442695
        %v1010 = vpow.pop %v1009
        %v1011 = vmul.f32 %v966, 1.442695
        %v1012 = vpow.pop %v1011
        %v1013 = vmul.f32 %v967, 1.442695
        %v1014 = vpow.pop %v1013
        %v1015 = vmul.f32 %v968, 1.442695
        %v1016 = vpow.pop %v1015
        %v1017 = vmul.f32 %v969, 1.442695
        %v1018 = vpow.pop %v1017
        %v1019 = vmul.f32 %v970, 1.442695
        %v1020 = vpow.pop %v1019
        %v1021 = vmul.f32 %v971, 1.442695
        %v1022 = vpow.pop %v1021
        %v1023 = vmul.f32 %v972, 1.442695
        %v1024 = vpow.pop %v1023
        %v1025 = vmul.f32 %v973, 1.442695
        %v1026 = vpow.pop %v1025
        %v1027 = vmul.f32 %v974, 1.442695
        %v1028 = vpow.pop %v1027
        %v1029 = vmul.f32 %v975, 1.442695
        %v1030 = vpow.pop %v1029
        %v1031 = vmul.f32 %v976, 1.442695
        %v1032 = vpow.pop %v1031
        %v1033 = vmul.f32 %v977, 1.442695
        %v1034 = vpow.pop %v1033
        %v1035 = vmul.f32 %v978, 1.442695
        %v1036 = vpow.pop %v1035
        %v1037 = vmul.f32 %v979, 1.442695
        %v1038 = vpow.pop %v1037
        %v1039 = vmul.f32 %v980, 1.442695
        %v1040 = vpow.pop %v1039
        %v1041 = vmul.f32 %v981, 1.442695
        %v1042 = vpow.pop %v1041
        %v1043 = vmul.f32 %v982, 1.442695
        %v1044 = vpow.pop %v1043
        %v1045 = vmul.f32 %v983, 1.442695
        %v1046 = vpow.pop %v1045
        %v1047 = vmul.f32 %v984, 1.442695
        %v1048 = vpow.pop %v1047
        %v1049 = vlaneseq
        %v1050 = vshrl.u32 %v1049, 7
        %v1051 = vsub.s32 0, %v1050
        %v1052 = vrot.slane %v622, %v1051
        %v1053 = vlaneseq
        %v1054 = vshrl.u32 %v1053, 7
        %v1055 = vsub.s32 0, %v1054
        %v1056 = vrot.slane %v624, %v1055
        %v1057 = vmul.f32 %v849, %v1052
        %v1058 = vmul.f32 %v850, %v1056
        %v1059 = vmul.f32 %v851, %v1052
        %v1060 = vmul.f32 %v852, %v1056
        %v1061 = vlaneseq
        %v1062 = vshrl.u32 %v1061, 7
        %v1063 = vsub.s32 1, %v1062
        %v1064 = vrot.slane %v622, %v1063
        %v1065 = vlaneseq
        %v1066 = vshrl.u32 %v1065, 7
        %v1067 = vsub.s32 1, %v1066
        %v1068 = vrot.slane %v624, %v1067
        %v1069 = vmul.f32 %v849, %v1064
        %v1070 = vmul.f32 %v850, %v1068
        %v1071 = vmul.f32 %v851, %v1064
        %v1072 = vmul.f32 %v852, %v1068
        %v1073 = vlaneseq
        %v1074 = vshrl.u32 %v1073, 7
        %v1075 = vsub.s32 2, %v1074
        %v1076 = vrot.slane %v622, %v1075
        %v1077 = vlaneseq
        %v1078 = vshrl.u32 %v1077, 7
        %v1079 = vsub.s32 2, %v1078
        %v1080 = vrot.slane %v624, %v1079
        %v1081 = vmul.f32 %v849, %v1076
        %v1082 = vmul.f32 %v850, %v1080
        %v1083 = vmul.f32 %v851, %v1076
        %v1084 = vmul.f32 %v852, %v1080
        %v1085 = vlaneseq
        %v1086 = vshrl.u32 %v1085, 7
        %v1087 = vsub.s32 3, %v1086
        %v1088 = vrot.slane %v622, %v1087
        %v1089 = vlaneseq
        %v1090 = vshrl.u32 %v1089, 7
        %v1091 = vsub.s32 3, %v1090
        %v1092 = vrot.slane %v624, %v1091
        %v1093 = vmul.f32 %v849, %v1088
        %v1094 = vmul.f32 %v850, %v1092
        %v1095 = vmul.f32 %v851, %v1088
        %v1096 = vmul.f32 %v852, %v1092
        %v1097 = vlaneseq
        %v1098 = vshrl.u32 %v1097, 7
        %v1099 = vsub.s32 0, %v1098
        %v1100 = vrot.slane %v700, %v1099
        %v1101 = vlaneseq
        %v1102 = vshrl.u32 %v1101, 7
        %v1103 = vsub.s32 0, %v1102
        %v1104 = vrot.slane %v702, %v1103
        %v1105 = vmul.f32 %v853, %v1100
        %v1106 = vmul.f32 %v854, %v1104
        %v1107 = vmul.f32 %v855, %v1100
        %v1108 = vmul.f32 %v856, %v1104
        %v1109 = vlaneseq
        %v1110 = vshrl.u32 %v1109, 7
        %v1111 = vsub.s32 1, %v1110
        %v1112 = vrot.slane %v700, %v1111
        %v1113 = vlaneseq
        %v1114 = vshrl.u32 %v1113, 7
        %v1115 = vsub.s32 1, %v1114
        %v1116 = vrot.slane %v702, %v1115
        %v1117 = vmul.f32 %v853, %v1112
        %v1118 = vmul.f32 %v854, %v1116
        %v1119 = vmul.f32 %v855, %v1112
        %v1120 = vmul.f32 %v856, %v1116
        %v1121 = vlaneseq
        %v1122 = vshrl.u32 %v1121, 7
        %v1123 = vsub.s32 2, %v1122
        %v1124 = vrot.slane %v700, %v1123
        %v1125 = vlaneseq
        %v1126 = vshrl.u32 %v1125, 7
        %v1127 = vsub.s32 2, %v1126
        %v1128 = vrot.slane %v702, %v1127
        %v1129 = vmul.f32 %v853, %v1124
        %v1130 = vmul.f32 %v854, %v1128
        %v1131 = vmul.f32 %v855, %v1124
        %v1132 = vmul.f32 %v856, %v1128
        %v1133 = vlaneseq
        %v1134 = vshrl.u32 %v1133, 7
        %v1135 = vsub.s32 3, %v1134
        %v1136 = vrot.slane %v700, %v1135
        %v1137 = vlaneseq
        %v1138 = vshrl.u32 %v1137, 7
        %v1139 = vsub.s32 3, %v1138
        %v1140 = vrot.slane %v702, %v1139
        %v1141 = vmul.f32 %v853, %v1136
        %v1142 = vmul.f32 %v854, %v1140
        %v1143 = vmul.f32 %v855, %v1136
        %v1144 = vmul.f32 %v856, %v1140
        %v1145 = vlaneseq
        %v1146 = vand.u32 %v1145, 127
        %v1147 = vadd.s32 %v1146, 128
        %vm1148 = vcmp.ge.s32.totalorder %v1146, 1
        %vm1149 = vcmp.ge.s32.totalorder %v1147, 1
        %1150 = vrot.lane.b32.xlu0 %v986, 1
        %v1151 = vpop.permute.xlu0 %1150
        %1152 = vrot.lane.b32.xlu0 %v990, 1
        %v1153 = vpop.permute.xlu0 %1152
        %1154 = vrot.lane.b32.xlu0 %v994, 1
        %v1155 = vpop.permute.xlu0 %1154
        %1156 = vrot.lane.b32.xlu0 %v998, 1
        %v1157 = vpop.permute.xlu0 %1156
        %1158 = vrot.lane.b32.xlu0 %v1002, 1
        %v1159 = vpop.permute.xlu0 %1158
        %1160 = vrot.lane.b32.xlu0 %v1006, 1
        %v1161 = vpop.permute.xlu0 %1160
        %1162 = vrot.lane.b32.xlu0 %v1010, 1
        %v1163 = vpop.permute.xlu0 %1162
        %1164 = vrot.lane.b32.xlu0 %v1014, 1
        %v1165 = vpop.permute.xlu0 %1164
        %1166 = vrot.lane.b32.xlu0 %v1018, 1
        %v1167 = vpop.permute.xlu0 %1166
        %1168 = vrot.lane.b32.xlu0 %v1022, 1
        %v1169 = vpop.permute.xlu0 %1168
        %1170 = vrot.lane.b32.xlu0 %v1026, 1
        %v1171 = vpop.permute.xlu0 %1170
        %1172 = vrot.lane.b32.xlu0 %v1030, 1
        %v1173 = vpop.permute.xlu0 %1172
        %1174 = vrot.lane.b32.xlu0 %v1034, 1
        %v1175 = vpop.permute.xlu0 %1174
        %1176 = vrot.lane.b32.xlu0 %v1038, 1
        %v1177 = vpop.permute.xlu0 %1176
        %1178 = vrot.lane.b32.xlu0 %v1042, 1
        %v1179 = vpop.permute.xlu0 %1178
        %1180 = vrot.lane.b32.xlu0 %v1046, 1
        %v1181 = vpop.permute.xlu0 %1180
        %1182 = vrot.lane.b32.xlu0 %v988, 1
        %v1183 = vpop.permute.xlu0 %1182
        %1184 = vrot.lane.b32.xlu0 %v992, 1
        %v1185 = vpop.permute.xlu0 %1184
        %1186 = vrot.lane.b32.xlu0 %v996, 1
        %v1187 = vpop.permute.xlu0 %1186
        %1188 = vrot.lane.b32.xlu0 %v1000, 1
        %v1189 = vpop.permute.xlu0 %1188
        %1190 = vrot.lane.b32.xlu0 %v1004, 1
        %v1191 = vpop.permute.xlu0 %1190
        %1192 = vrot.lane.b32.xlu0 %v1008, 1
        %v1193 = vpop.permute.xlu0 %1192
        %1194 = vrot.lane.b32.xlu0 %v1012, 1
        %v1195 = vpop.permute.xlu0 %1194
        %1196 = vrot.lane.b32.xlu0 %v1016, 1
        %v1197 = vpop.permute.xlu0 %1196
        %1198 = vrot.lane.b32.xlu0 %v1020, 1
        %v1199 = vpop.permute.xlu0 %1198
        %1200 = vrot.lane.b32.xlu0 %v1024, 1
        %v1201 = vpop.permute.xlu0 %1200
        %1202 = vrot.lane.b32.xlu0 %v1028, 1
        %v1203 = vpop.permute.xlu0 %1202
        %1204 = vrot.lane.b32.xlu0 %v1032, 1
        %v1205 = vpop.permute.xlu0 %1204
        %1206 = vrot.lane.b32.xlu0 %v1036, 1
        %v1207 = vpop.permute.xlu0 %1206
        %1208 = vrot.lane.b32.xlu0 %v1040, 1
        %v1209 = vpop.permute.xlu0 %1208
        %1210 = vrot.lane.b32.xlu0 %v1044, 1
        %v1211 = vpop.permute.xlu0 %1210
        %1212 = vrot.lane.b32.xlu0 %v1048, 1
        %v1213 = vpop.permute.xlu0 %1212
        %vm1214 = vcmp.lt.s32.totalorder %v1146, 1
        %v1215 = vsel %vm1214, %v1151, %v1183
        %v1216 = vsel %vm1214, %v1153, %v1185
        %v1217 = vsel %vm1214, %v1155, %v1187
        %v1218 = vsel %vm1214, %v1157, %v1189
        %v1219 = vsel %vm1214, %v1159, %v1191
        %v1220 = vsel %vm1214, %v1161, %v1193
        %v1221 = vsel %vm1214, %v1163, %v1195
        %v1222 = vsel %vm1214, %v1165, %v1197
        %v1223 = vsel %vm1214, %v1167, %v1199
        %v1224 = vsel %vm1214, %v1169, %v1201
        %v1225 = vsel %vm1214, %v1171, %v1203
        %v1226 = vsel %vm1214, %v1173, %v1205
        %v1227 = vsel %vm1214, %v1175, %v1207
        %v1228 = vsel %vm1214, %v1177, %v1209
        %v1229 = vsel %vm1214, %v1179, %v1211
        %v1230 = vsel %vm1214, %v1181, %v1213
        %v1231 = vsel %vm1214, %v1183, %v1151
        %v1232 = vsel %vm1214, %v1185, %v1153
        %v1233 = vsel %vm1214, %v1187, %v1155
        %v1234 = vsel %vm1214, %v1189, %v1157
        %v1235 = vsel %vm1214, %v1191, %v1159
        %v1236 = vsel %vm1214, %v1193, %v1161
        %v1237 = vsel %vm1214, %v1195, %v1163
        %v1238 = vsel %vm1214, %v1197, %v1165
        %v1239 = vsel %vm1214, %v1199, %v1167
        %v1240 = vsel %vm1214, %v1201, %v1169
        %v1241 = vsel %vm1214, %v1203, %v1171
        %v1242 = vsel %vm1214, %v1205, %v1173
        %v1243 = vsel %vm1214, %v1207, %v1175
        %v1244 = vsel %vm1214, %v1209, %v1177
        %v1245 = vsel %vm1214, %v1211, %v1179
        %v1246 = vsel %vm1214, %v1213, %v1181
        %v1247 = vsel %vm1148, 1, 0
        %v1248 = vsel %vm1149, 1, 0
        %vm1249 = vcmp.eq.s32.totalorder %v1247, 1
        %vm1250 = vcmp.eq.s32.totalorder %v1248, 1
        %v1251 = vsel %vm1249, %v1231, 1.0
        %v1252 = vsel %vm1250, %v1215, 1.0
        %v1253 = vsel %vm1249, %v1232, 1.0
        %v1254 = vsel %vm1250, %v1216, 1.0
        %v1255 = vsel %vm1249, %v1233, 1.0
        %v1256 = vsel %vm1250, %v1217, 1.0
        %v1257 = vsel %vm1249, %v1234, 1.0
        %v1258 = vsel %vm1250, %v1218, 1.0
        %v1259 = vsel %vm1249, %v1235, 1.0
        %v1260 = vsel %vm1250, %v1219, 1.0
        %v1261 = vsel %vm1249, %v1236, 1.0
        %v1262 = vsel %vm1250, %v1220, 1.0
        %v1263 = vsel %vm1249, %v1237, 1.0
        %v1264 = vsel %vm1250, %v1221, 1.0
        %v1265 = vsel %vm1249, %v1238, 1.0
        %v1266 = vsel %vm1250, %v1222, 1.0
        %v1267 = vsel %vm1249, %v1239, 1.0
        %v1268 = vsel %vm1250, %v1223, 1.0
        %v1269 = vsel %vm1249, %v1240, 1.0
        %v1270 = vsel %vm1250, %v1224, 1.0
        %v1271 = vsel %vm1249, %v1241, 1.0
        %v1272 = vsel %vm1250, %v1225, 1.0
        %v1273 = vsel %vm1249, %v1242, 1.0
        %v1274 = vsel %vm1250, %v1226, 1.0
        %v1275 = vsel %vm1249, %v1243, 1.0
        %v1276 = vsel %vm1250, %v1227, 1.0
        %v1277 = vsel %vm1249, %v1244, 1.0
        %v1278 = vsel %vm1250, %v1228, 1.0
        %v1279 = vsel %vm1249, %v1245, 1.0
        %v1280 = vsel %vm1250, %v1229, 1.0
        %v1281 = vsel %vm1249, %v1246, 1.0
        %v1282 = vsel %vm1250, %v1230, 1.0
        %1283 = vrot.lane.b32.xlu0 %v1057, 1
        %v1284 = vpop.permute.xlu0 %1283
        %1285 = vrot.lane.b32.xlu0 %v1059, 1
        %v1286 = vpop.permute.xlu0 %1285
        %1287 = vrot.lane.b32.xlu0 %v1069, 1
        %v1288 = vpop.permute.xlu0 %1287
        %1289 = vrot.lane.b32.xlu0 %v1071, 1
        %v1290 = vpop.permute.xlu0 %1289
        %1291 = vrot.lane.b32.xlu0 %v1081, 1
        %v1292 = vpop.permute.xlu0 %1291
        %1293 = vrot.lane.b32.xlu0 %v1083, 1
        %v1294 = vpop.permute.xlu0 %1293
        %1295 = vrot.lane.b32.xlu0 %v1093, 1
        %v1296 = vpop.permute.xlu0 %1295
        %1297 = vrot.lane.b32.xlu0 %v1095, 1
        %v1298 = vpop.permute.xlu0 %1297
        %1299 = vrot.lane.b32.xlu0 %v1105, 1
        %v1300 = vpop.permute.xlu0 %1299
        %1301 = vrot.lane.b32.xlu0 %v1107, 1
        %v1302 = vpop.permute.xlu0 %1301
        %1303 = vrot.lane.b32.xlu0 %v1117, 1
        %v1304 = vpop.permute.xlu0 %1303
        %1305 = vrot.lane.b32.xlu0 %v1119, 1
        %v1306 = vpop.permute.xlu0 %1305
        %1307 = vrot.lane.b32.xlu0 %v1129, 1
        %v1308 = vpop.permute.xlu0 %1307
        %1309 = vrot.lane.b32.xlu0 %v1131, 1
        %v1310 = vpop.permute.xlu0 %1309
        %1311 = vrot.lane.b32.xlu0 %v1141, 1
        %v1312 = vpop.permute.xlu0 %1311
        %1313 = vrot.lane.b32.xlu0 %v1143, 1
        %v1314 = vpop.permute.xlu0 %1313
        %1315 = vrot.lane.b32.xlu0 %v1058, 1
        %v1316 = vpop.permute.xlu0 %1315
        %1317 = vrot.lane.b32.xlu0 %v1060, 1
        %v1318 = vpop.permute.xlu0 %1317
        %1319 = vrot.lane.b32.xlu0 %v1070, 1
        %v1320 = vpop.permute.xlu0 %1319
        %1321 = vrot.lane.b32.xlu0 %v1072, 1
        %v1322 = vpop.permute.xlu0 %1321
        %1323 = vrot.lane.b32.xlu0 %v1082, 1
        %v1324 = vpop.permute.xlu0 %1323
        %1325 = vrot.lane.b32.xlu0 %v1084, 1
        %v1326 = vpop.permute.xlu0 %1325
        %1327 = vrot.lane.b32.xlu0 %v1094, 1
        %v1328 = vpop.permute.xlu0 %1327
        %1329 = vrot.lane.b32.xlu0 %v1096, 1
        %v1330 = vpop.permute.xlu0 %1329
        %1331 = vrot.lane.b32.xlu0 %v1106, 1
        %v1332 = vpop.permute.xlu0 %1331
        %1333 = vrot.lane.b32.xlu0 %v1108, 1
        %v1334 = vpop.permute.xlu0 %1333
        %1335 = vrot.lane.b32.xlu0 %v1118, 1
        %v1336 = vpop.permute.xlu0 %1335
        %1337 = vrot.lane.b32.xlu0 %v1120, 1
        %v1338 = vpop.permute.xlu0 %1337
        %1339 = vrot.lane.b32.xlu0 %v1130, 1
        %v1340 = vpop.permute.xlu0 %1339
        %1341 = vrot.lane.b32.xlu0 %v1132, 1
        %v1342 = vpop.permute.xlu0 %1341
        %1343 = vrot.lane.b32.xlu0 %v1142, 1
        %v1344 = vpop.permute.xlu0 %1343
        %1345 = vrot.lane.b32.xlu0 %v1144, 1
        %v1346 = vpop.permute.xlu0 %1345
        %v1347 = vsel %vm1214, %v1284, %v1316
        %v1348 = vsel %vm1214, %v1286, %v1318
        %v1349 = vsel %vm1214, %v1288, %v1320
        %v1350 = vsel %vm1214, %v1290, %v1322
        %v1351 = vsel %vm1214, %v1292, %v1324
        %v1352 = vsel %vm1214, %v1294, %v1326
        %v1353 = vsel %vm1214, %v1296, %v1328
        %v1354 = vsel %vm1214, %v1298, %v1330
        %v1355 = vsel %vm1214, %v1300, %v1332
        %v1356 = vsel %vm1214, %v1302, %v1334
        %v1357 = vsel %vm1214, %v1304, %v1336
        %v1358 = vsel %vm1214, %v1306, %v1338
        %v1359 = vsel %vm1214, %v1308, %v1340
        %v1360 = vsel %vm1214, %v1310, %v1342
        %v1361 = vsel %vm1214, %v1312, %v1344
        %v1362 = vsel %vm1214, %v1314, %v1346
        %v1363 = vsel %vm1214, %v1316, %v1284
        %v1364 = vsel %vm1214, %v1318, %v1286
        %v1365 = vsel %vm1214, %v1320, %v1288
        %v1366 = vsel %vm1214, %v1322, %v1290
        %v1367 = vsel %vm1214, %v1324, %v1292
        %v1368 = vsel %vm1214, %v1326, %v1294
        %v1369 = vsel %vm1214, %v1328, %v1296
        %v1370 = vsel %vm1214, %v1330, %v1298
        %v1371 = vsel %vm1214, %v1332, %v1300
        %v1372 = vsel %vm1214, %v1334, %v1302
        %v1373 = vsel %vm1214, %v1336, %v1304
        %v1374 = vsel %vm1214, %v1338, %v1306
        %v1375 = vsel %vm1214, %v1340, %v1308
        %v1376 = vsel %vm1214, %v1342, %v1310
        %v1377 = vsel %vm1214, %v1344, %v1312
        %v1378 = vsel %vm1214, %v1346, %v1314
        %v1379 = vsel %vm1249, %v1363, 0.0
        %v1380 = vsel %vm1250, %v1347, 0.0
        %v1381 = vsel %vm1249, %v1364, 0.0
        %v1382 = vsel %vm1250, %v1348, 0.0
        %v1383 = vsel %vm1249, %v1365, 0.0
        %v1384 = vsel %vm1250, %v1349, 0.0
        %v1385 = vsel %vm1249, %v1366, 0.0
        %v1386 = vsel %vm1250, %v1350, 0.0
        %v1387 = vsel %vm1249, %v1367, 0.0
        %v1388 = vsel %vm1250, %v1351, 0.0
        %v1389 = vsel %vm1249, %v1368, 0.0
        %v1390 = vsel %vm1250, %v1352, 0.0
        %v1391 = vsel %vm1249, %v1369, 0.0
        %v1392 = vsel %vm1250, %v1353, 0.0
        %v1393 = vsel %vm1249, %v1370, 0.0
        %v1394 = vsel %vm1250, %v1354, 0.0
        %v1395 = vsel %vm1249, %v1371, 0.0
        %v1396 = vsel %vm1250, %v1355, 0.0
        %v1397 = vsel %vm1249, %v1372, 0.0
        %v1398 = vsel %vm1250, %v1356, 0.0
        %v1399 = vsel %vm1249, %v1373, 0.0
        %v1400 = vsel %vm1250, %v1357, 0.0
        %v1401 = vsel %vm1249, %v1374, 0.0
        %v1402 = vsel %vm1250, %v1358, 0.0
        %v1403 = vsel %vm1249, %v1375, 0.0
        %v1404 = vsel %vm1250, %v1359, 0.0
        %v1405 = vsel %vm1249, %v1376, 0.0
        %v1406 = vsel %vm1250, %v1360, 0.0
        %v1407 = vsel %vm1249, %v1377, 0.0
        %v1408 = vsel %vm1250, %v1361, 0.0
        %v1409 = vsel %vm1249, %v1378, 0.0
        %v1410 = vsel %vm1250, %v1362, 0.0
        %v1411 = vmul.f32 %v986, %v1379
        %v1412 = vmul.f32 %v988, %v1380
        %v1413 = vmul.f32 %v990, %v1381
        %v1414 = vmul.f32 %v992, %v1382
        %v1415 = vmul.f32 %v994, %v1383
        %v1416 = vmul.f32 %v996, %v1384
        %v1417 = vmul.f32 %v998, %v1385
        %v1418 = vmul.f32 %v1000, %v1386
        %v1419 = vmul.f32 %v1002, %v1387
        %v1420 = vmul.f32 %v1004, %v1388
        %v1421 = vmul.f32 %v1006, %v1389
        %v1422 = vmul.f32 %v1008, %v1390
        %v1423 = vmul.f32 %v1010, %v1391
        %v1424 = vmul.f32 %v1012, %v1392
        %v1425 = vmul.f32 %v1014, %v1393
        %v1426 = vmul.f32 %v1016, %v1394
        %v1427 = vmul.f32 %v1018, %v1395
        %v1428 = vmul.f32 %v1020, %v1396
        %v1429 = vmul.f32 %v1022, %v1397
        %v1430 = vmul.f32 %v1024, %v1398
        %v1431 = vmul.f32 %v1026, %v1399
        %v1432 = vmul.f32 %v1028, %v1400
        %v1433 = vmul.f32 %v1030, %v1401
        %v1434 = vmul.f32 %v1032, %v1402
        %v1435 = vmul.f32 %v1034, %v1403
        %v1436 = vmul.f32 %v1036, %v1404
        %v1437 = vmul.f32 %v1038, %v1405
        %v1438 = vmul.f32 %v1040, %v1406
        %v1439 = vmul.f32 %v1042, %v1407
        %v1440 = vmul.f32 %v1044, %v1408
        %v1441 = vmul.f32 %v1046, %v1409
        %v1442 = vmul.f32 %v1048, %v1410
        %v1443 = vadd.f32 %v1411, %v1057
        %v1444 = vadd.f32 %v1412, %v1058
        %v1445 = vadd.f32 %v1413, %v1059
        %v1446 = vadd.f32 %v1414, %v1060
        %v1447 = vadd.f32 %v1415, %v1069
        %v1448 = vadd.f32 %v1416, %v1070
        %v1449 = vadd.f32 %v1417, %v1071
        %v1450 = vadd.f32 %v1418, %v1072
        %v1451 = vadd.f32 %v1419, %v1081
        %v1452 = vadd.f32 %v1420, %v1082
        %v1453 = vadd.f32 %v1421, %v1083
        %v1454 = vadd.f32 %v1422, %v1084
        %v1455 = vadd.f32 %v1423, %v1093
        %v1456 = vadd.f32 %v1424, %v1094
        %v1457 = vadd.f32 %v1425, %v1095
        %v1458 = vadd.f32 %v1426, %v1096
        %v1459 = vadd.f32 %v1427, %v1105
        %v1460 = vadd.f32 %v1428, %v1106
        %v1461 = vadd.f32 %v1429, %v1107
        %v1462 = vadd.f32 %v1430, %v1108
        %v1463 = vadd.f32 %v1431, %v1117
        %v1464 = vadd.f32 %v1432, %v1118
        %v1465 = vadd.f32 %v1433, %v1119
        %v1466 = vadd.f32 %v1434, %v1120
        %v1467 = vadd.f32 %v1435, %v1129
        %v1468 = vadd.f32 %v1436, %v1130
        %v1469 = vadd.f32 %v1437, %v1131
        %v1470 = vadd.f32 %v1438, %v1132
        %v1471 = vadd.f32 %v1439, %v1141
        %v1472 = vadd.f32 %v1440, %v1142
        %v1473 = vadd.f32 %v1441, %v1143
        %v1474 = vadd.f32 %v1442, %v1144
        %v1475 = vmul.f32 %v986, %v1251
        %v1476 = vmul.f32 %v988, %v1252
        %v1477 = vmul.f32 %v990, %v1253
        %v1478 = vmul.f32 %v992, %v1254
        %v1479 = vmul.f32 %v994, %v1255
        %v1480 = vmul.f32 %v996, %v1256
        %v1481 = vmul.f32 %v998, %v1257
        %v1482 = vmul.f32 %v1000, %v1258
        %v1483 = vmul.f32 %v1002, %v1259
        %v1484 = vmul.f32 %v1004, %v1260
        %v1485 = vmul.f32 %v1006, %v1261
        %v1486 = vmul.f32 %v1008, %v1262
        %v1487 = vmul.f32 %v1010, %v1263
        %v1488 = vmul.f32 %v1012, %v1264
        %v1489 = vmul.f32 %v1014, %v1265
        %v1490 = vmul.f32 %v1016, %v1266
        %v1491 = vmul.f32 %v1018, %v1267
        %v1492 = vmul.f32 %v1020, %v1268
        %v1493 = vmul.f32 %v1022, %v1269
        %v1494 = vmul.f32 %v1024, %v1270
        %v1495 = vmul.f32 %v1026, %v1271
        %v1496 = vmul.f32 %v1028, %v1272
        %v1497 = vmul.f32 %v1030, %v1273
        %v1498 = vmul.f32 %v1032, %v1274
        %v1499 = vmul.f32 %v1034, %v1275
        %v1500 = vmul.f32 %v1036, %v1276
        %v1501 = vmul.f32 %v1038, %v1277
        %v1502 = vmul.f32 %v1040, %v1278
        %v1503 = vmul.f32 %v1042, %v1279
        %v1504 = vmul.f32 %v1044, %v1280
        %v1505 = vmul.f32 %v1046, %v1281
        %v1506 = vmul.f32 %v1048, %v1282
        %vm1507 = vcmp.ge.s32.totalorder %v1146, 2
        %vm1508 = vcmp.ge.s32.totalorder %v1147, 2
        %1509 = vrot.lane.b32.xlu0 %v1475, 2
        %v1510 = vpop.permute.xlu0 %1509
        %1511 = vrot.lane.b32.xlu0 %v1477, 2
        %v1512 = vpop.permute.xlu0 %1511
        %1513 = vrot.lane.b32.xlu0 %v1479, 2
        %v1514 = vpop.permute.xlu0 %1513
        %1515 = vrot.lane.b32.xlu0 %v1481, 2
        %v1516 = vpop.permute.xlu0 %1515
        %1517 = vrot.lane.b32.xlu0 %v1483, 2
        %v1518 = vpop.permute.xlu0 %1517
        %1519 = vrot.lane.b32.xlu0 %v1485, 2
        %v1520 = vpop.permute.xlu0 %1519
        %1521 = vrot.lane.b32.xlu0 %v1487, 2
        %v1522 = vpop.permute.xlu0 %1521
        %1523 = vrot.lane.b32.xlu0 %v1489, 2
        %v1524 = vpop.permute.xlu0 %1523
        %1525 = vrot.lane.b32.xlu0 %v1491, 2
        %v1526 = vpop.permute.xlu0 %1525
        %1527 = vrot.lane.b32.xlu0 %v1493, 2
        %v1528 = vpop.permute.xlu0 %1527
        %1529 = vrot.lane.b32.xlu0 %v1495, 2
        %v1530 = vpop.permute.xlu0 %1529
        %1531 = vrot.lane.b32.xlu0 %v1497, 2
        %v1532 = vpop.permute.xlu0 %1531
        %1533 = vrot.lane.b32.xlu0 %v1499, 2
        %v1534 = vpop.permute.xlu0 %1533
        %1535 = vrot.lane.b32.xlu0 %v1501, 2
        %v1536 = vpop.permute.xlu0 %1535
        %1537 = vrot.lane.b32.xlu0 %v1503, 2
        %v1538 = vpop.permute.xlu0 %1537
        %1539 = vrot.lane.b32.xlu0 %v1505, 2
        %v1540 = vpop.permute.xlu0 %1539
        %1541 = vrot.lane.b32.xlu0 %v1476, 2
        %v1542 = vpop.permute.xlu0 %1541
        %1543 = vrot.lane.b32.xlu0 %v1478, 2
        %v1544 = vpop.permute.xlu0 %1543
        %1545 = vrot.lane.b32.xlu0 %v1480, 2
        %v1546 = vpop.permute.xlu0 %1545
        %1547 = vrot.lane.b32.xlu0 %v1482, 2
        %v1548 = vpop.permute.xlu0 %1547
        %1549 = vrot.lane.b32.xlu0 %v1484, 2
        %v1550 = vpop.permute.xlu0 %1549
        %1551 = vrot.lane.b32.xlu0 %v1486, 2
        %v1552 = vpop.permute.xlu0 %1551
        %1553 = vrot.lane.b32.xlu0 %v1488, 2
        %v1554 = vpop.permute.xlu0 %1553
        %1555 = vrot.lane.b32.xlu0 %v1490, 2
        %v1556 = vpop.permute.xlu0 %1555
        %1557 = vrot.lane.b32.xlu0 %v1492, 2
        %v1558 = vpop.permute.xlu0 %1557
        %1559 = vrot.lane.b32.xlu0 %v1494, 2
        %v1560 = vpop.permute.xlu0 %1559
        %1561 = vrot.lane.b32.xlu0 %v1496, 2
        %v1562 = vpop.permute.xlu0 %1561
        %1563 = vrot.lane.b32.xlu0 %v1498, 2
        %v1564 = vpop.permute.xlu0 %1563
        %1565 = vrot.lane.b32.xlu0 %v1500, 2
        %v1566 = vpop.permute.xlu0 %1565
        %1567 = vrot.lane.b32.xlu0 %v1502, 2
        %v1568 = vpop.permute.xlu0 %1567
        %1569 = vrot.lane.b32.xlu0 %v1504, 2
        %v1570 = vpop.permute.xlu0 %1569
        %1571 = vrot.lane.b32.xlu0 %v1506, 2
        %v1572 = vpop.permute.xlu0 %1571
        %vm1573 = vcmp.lt.s32.totalorder %v1146, 2
        %v1574 = vsel %vm1573, %v1510, %v1542
        %v1575 = vsel %vm1573, %v1512, %v1544
        %v1576 = vsel %vm1573, %v1514, %v1546
        %v1577 = vsel %vm1573, %v1516, %v1548
        %v1578 = vsel %vm1573, %v1518, %v1550
        %v1579 = vsel %vm1573, %v1520, %v1552
        %v1580 = vsel %vm1573, %v1522, %v1554
        %v1581 = vsel %vm1573, %v1524, %v1556
        %v1582 = vsel %vm1573, %v1526, %v1558
        %v1583 = vsel %vm1573, %v1528, %v1560
        %v1584 = vsel %vm1573, %v1530, %v1562
        %v1585 = vsel %vm1573, %v1532, %v1564
        %v1586 = vsel %vm1573, %v1534, %v1566
        %v1587 = vsel %vm1573, %v1536, %v1568
        %v1588 = vsel %vm1573, %v1538, %v1570
        %v1589 = vsel %vm1573, %v1540, %v1572
        %v1590 = vsel %vm1573, %v1542, %v1510
        %v1591 = vsel %vm1573, %v1544, %v1512
        %v1592 = vsel %vm1573, %v1546, %v1514
        %v1593 = vsel %vm1573, %v1548, %v1516
        %v1594 = vsel %vm1573, %v1550, %v1518
        %v1595 = vsel %vm1573, %v1552, %v1520
        %v1596 = vsel %vm1573, %v1554, %v1522
        %v1597 = vsel %vm1573, %v1556, %v1524
        %v1598 = vsel %vm1573, %v1558, %v1526
        %v1599 = vsel %vm1573, %v1560, %v1528
        %v1600 = vsel %vm1573, %v1562, %v1530
        %v1601 = vsel %vm1573, %v1564, %v1532
        %v1602 = vsel %vm1573, %v1566, %v1534
        %v1603 = vsel %vm1573, %v1568, %v1536
        %v1604 = vsel %vm1573, %v1570, %v1538
        %v1605 = vsel %vm1573, %v1572, %v1540
        %v1606 = vsel %vm1507, 1, 0
        %v1607 = vsel %vm1508, 1, 0
        %vm1608 = vcmp.eq.s32.totalorder %v1606, 1
        %vm1609 = vcmp.eq.s32.totalorder %v1607, 1
        %v1610 = vsel %vm1608, %v1590, 1.0
        %v1611 = vsel %vm1609, %v1574, 1.0
        %v1612 = vsel %vm1608, %v1591, 1.0
        %v1613 = vsel %vm1609, %v1575, 1.0
        %v1614 = vsel %vm1608, %v1592, 1.0
        %v1615 = vsel %vm1609, %v1576, 1.0
        %v1616 = vsel %vm1608, %v1593, 1.0
        %v1617 = vsel %vm1609, %v1577, 1.0
        %v1618 = vsel %vm1608, %v1594, 1.0
        %v1619 = vsel %vm1609, %v1578, 1.0
        %v1620 = vsel %vm1608, %v1595, 1.0
        %v1621 = vsel %vm1609, %v1579, 1.0
        %v1622 = vsel %vm1608, %v1596, 1.0
        %v1623 = vsel %vm1609, %v1580, 1.0
        %v1624 = vsel %vm1608, %v1597, 1.0
        %v1625 = vsel %vm1609, %v1581, 1.0
        %v1626 = vsel %vm1608, %v1598, 1.0
        %v1627 = vsel %vm1609, %v1582, 1.0
        %v1628 = vsel %vm1608, %v1599, 1.0
        %v1629 = vsel %vm1609, %v1583, 1.0
        %v1630 = vsel %vm1608, %v1600, 1.0
        %v1631 = vsel %vm1609, %v1584, 1.0
        %v1632 = vsel %vm1608, %v1601, 1.0
        %v1633 = vsel %vm1609, %v1585, 1.0
        %v1634 = vsel %vm1608, %v1602, 1.0
        %v1635 = vsel %vm1609, %v1586, 1.0
        %v1636 = vsel %vm1608, %v1603, 1.0
        %v1637 = vsel %vm1609, %v1587, 1.0
        %v1638 = vsel %vm1608, %v1604, 1.0
        %v1639 = vsel %vm1609, %v1588, 1.0
        %v1640 = vsel %vm1608, %v1605, 1.0
        %v1641 = vsel %vm1609, %v1589, 1.0
        %1642 = vrot.lane.b32.xlu0 %v1443, 2
        %v1643 = vpop.permute.xlu0 %1642
        %1644 = vrot.lane.b32.xlu0 %v1445, 2
        %v1645 = vpop.permute.xlu0 %1644
        %1646 = vrot.lane.b32.xlu0 %v1447, 2
        %v1647 = vpop.permute.xlu0 %1646
        %1648 = vrot.lane.b32.xlu0 %v1449, 2
        %v1649 = vpop.permute.xlu0 %1648
        %1650 = vrot.lane.b32.xlu0 %v1451, 2
        %v1651 = vpop.permute.xlu0 %1650
        %1652 = vrot.lane.b32.xlu0 %v1453, 2
        %v1653 = vpop.permute.xlu0 %1652
        %1654 = vrot.lane.b32.xlu0 %v1455, 2
        %v1655 = vpop.permute.xlu0 %1654
        %1656 = vrot.lane.b32.xlu0 %v1457, 2
        %v1657 = vpop.permute.xlu0 %1656
        %1658 = vrot.lane.b32.xlu0 %v1459, 2
        %v1659 = vpop.permute.xlu0 %1658
        %1660 = vrot.lane.b32.xlu0 %v1461, 2
        %v1661 = vpop.permute.xlu0 %1660
        %1662 = vrot.lane.b32.xlu0 %v1463, 2
        %v1663 = vpop.permute.xlu0 %1662
        %1664 = vrot.lane.b32.xlu0 %v1465, 2
        %v1665 = vpop.permute.xlu0 %1664
        %1666 = vrot.lane.b32.xlu0 %v1467, 2
        %v1667 = vpop.permute.xlu0 %1666
        %1668 = vrot.lane.b32.xlu0 %v1469, 2
        %v1669 = vpop.permute.xlu0 %1668
        %1670 = vrot.lane.b32.xlu0 %v1471, 2
        %v1671 = vpop.permute.xlu0 %1670
        %1672 = vrot.lane.b32.xlu0 %v1473, 2
        %v1673 = vpop.permute.xlu0 %1672
        %1674 = vrot.lane.b32.xlu0 %v1444, 2
        %v1675 = vpop.permute.xlu0 %1674
        %1676 = vrot.lane.b32.xlu0 %v1446, 2
        %v1677 = vpop.permute.xlu0 %1676
        %1678 = vrot.lane.b32.xlu0 %v1448, 2
        %v1679 = vpop.permute.xlu0 %1678
        %1680 = vrot.lane.b32.xlu0 %v1450, 2
        %v1681 = vpop.permute.xlu0 %1680
        %1682 = vrot.lane.b32.xlu0 %v1452, 2
        %v1683 = vpop.permute.xlu0 %1682
        %1684 = vrot.lane.b32.xlu0 %v1454, 2
        %v1685 = vpop.permute.xlu0 %1684
        %1686 = vrot.lane.b32.xlu0 %v1456, 2
        %v1687 = vpop.permute.xlu0 %1686
        %1688 = vrot.lane.b32.xlu0 %v1458, 2
        %v1689 = vpop.permute.xlu0 %1688
        %1690 = vrot.lane.b32.xlu0 %v1460, 2
        %v1691 = vpop.permute.xlu0 %1690
        %1692 = vrot.lane.b32.xlu0 %v1462, 2
        %v1693 = vpop.permute.xlu0 %1692
        %1694 = vrot.lane.b32.xlu0 %v1464, 2
        %v1695 = vpop.permute.xlu0 %1694
        %1696 = vrot.lane.b32.xlu0 %v1466, 2
        %v1697 = vpop.permute.xlu0 %1696
        %1698 = vrot.lane.b32.xlu0 %v1468, 2
        %v1699 = vpop.permute.xlu0 %1698
        %1700 = vrot.lane.b32.xlu0 %v1470, 2
        %v1701 = vpop.permute.xlu0 %1700
        %1702 = vrot.lane.b32.xlu0 %v1472, 2
        %v1703 = vpop.permute.xlu0 %1702
        %1704 = vrot.lane.b32.xlu0 %v1474, 2
        %v1705 = vpop.permute.xlu0 %1704
        %v1706 = vsel %vm1573, %v1643, %v1675
        %v1707 = vsel %vm1573, %v1645, %v1677
        %v1708 = vsel %vm1573, %v1647, %v1679
        %v1709 = vsel %vm1573, %v1649, %v1681
        %v1710 = vsel %vm1573, %v1651, %v1683
        %v1711 = vsel %vm1573, %v1653, %v1685
        %v1712 = vsel %vm1573, %v1655, %v1687
        %v1713 = vsel %vm1573, %v1657, %v1689
        %v1714 = vsel %vm1573, %v1659, %v1691
        %v1715 = vsel %vm1573, %v1661, %v1693
        %v1716 = vsel %vm1573, %v1663, %v1695
        %v1717 = vsel %vm1573, %v1665, %v1697
        %v1718 = vsel %vm1573, %v1667, %v1699
        %v1719 = vsel %vm1573, %v1669, %v1701
        %v1720 = vsel %vm1573, %v1671, %v1703
        %v1721 = vsel %vm1573, %v1673, %v1705
        %v1722 = vsel %vm1573, %v1675, %v1643
        %v1723 = vsel %vm1573, %v1677, %v1645
        %v1724 = vsel %vm1573, %v1679, %v1647
        %v1725 = vsel %vm1573, %v1681, %v1649
        %v1726 = vsel %vm1573, %v1683, %v1651
        %v1727 = vsel %vm1573, %v1685, %v1653
        %v1728 = vsel %vm1573, %v1687, %v1655
        %v1729 = vsel %vm1573, %v1689, %v1657
        %v1730 = vsel %vm1573, %v1691, %v1659
        %v1731 = vsel %vm1573, %v1693, %v1661
        %v1732 = vsel %vm1573, %v1695, %v1663
        %v1733 = vsel %vm1573, %v1697, %v1665
        %v1734 = vsel %vm1573, %v1699, %v1667
        %v1735 = vsel %vm1573, %v1701, %v1669
        %v1736 = vsel %vm1573, %v1703, %v1671
        %v1737 = vsel %vm1573, %v1705, %v1673
        %v1738 = vsel %vm1608, %v1722, 0.0
        %v1739 = vsel %vm1609, %v1706, 0.0
        %v1740 = vsel %vm1608, %v1723, 0.0
        %v1741 = vsel %vm1609, %v1707, 0.0
        %v1742 = vsel %vm1608, %v1724, 0.0
        %v1743 = vsel %vm1609, %v1708, 0.0
        %v1744 = vsel %vm1608, %v1725, 0.0
        %v1745 = vsel %vm1609, %v1709, 0.0
        %v1746 = vsel %vm1608, %v1726, 0.0
        %v1747 = vsel %vm1609, %v1710, 0.0
        %v1748 = vsel %vm1608, %v1727, 0.0
        %v1749 = vsel %vm1609, %v1711, 0.0
        %v1750 = vsel %vm1608, %v1728, 0.0
        %v1751 = vsel %vm1609, %v1712, 0.0
        %v1752 = vsel %vm1608, %v1729, 0.0
        %v1753 = vsel %vm1609, %v1713, 0.0
        %v1754 = vsel %vm1608, %v1730, 0.0
        %v1755 = vsel %vm1609, %v1714, 0.0
        %v1756 = vsel %vm1608, %v1731, 0.0
        %v1757 = vsel %vm1609, %v1715, 0.0
        %v1758 = vsel %vm1608, %v1732, 0.0
        %v1759 = vsel %vm1609, %v1716, 0.0
        %v1760 = vsel %vm1608, %v1733, 0.0
        %v1761 = vsel %vm1609, %v1717, 0.0
        %v1762 = vsel %vm1608, %v1734, 0.0
        %v1763 = vsel %vm1609, %v1718, 0.0
        %v1764 = vsel %vm1608, %v1735, 0.0
        %v1765 = vsel %vm1609, %v1719, 0.0
        %v1766 = vsel %vm1608, %v1736, 0.0
        %v1767 = vsel %vm1609, %v1720, 0.0
        %v1768 = vsel %vm1608, %v1737, 0.0
        %v1769 = vsel %vm1609, %v1721, 0.0
        %v1770 = vmul.f32 %v1475, %v1738
        %v1771 = vmul.f32 %v1476, %v1739
        %v1772 = vmul.f32 %v1477, %v1740
        %v1773 = vmul.f32 %v1478, %v1741
        %v1774 = vmul.f32 %v1479, %v1742
        %v1775 = vmul.f32 %v1480, %v1743
        %v1776 = vmul.f32 %v1481, %v1744
        %v1777 = vmul.f32 %v1482, %v1745
        %v1778 = vmul.f32 %v1483, %v1746
        %v1779 = vmul.f32 %v1484, %v1747
        %v1780 = vmul.f32 %v1485, %v1748
        %v1781 = vmul.f32 %v1486, %v1749
        %v1782 = vmul.f32 %v1487, %v1750
        %v1783 = vmul.f32 %v1488, %v1751
        %v1784 = vmul.f32 %v1489, %v1752
        %v1785 = vmul.f32 %v1490, %v1753
        %v1786 = vmul.f32 %v1491, %v1754
        %v1787 = vmul.f32 %v1492, %v1755
        %v1788 = vmul.f32 %v1493, %v1756
        %v1789 = vmul.f32 %v1494, %v1757
        %v1790 = vmul.f32 %v1495, %v1758
        %v1791 = vmul.f32 %v1496, %v1759
        %v1792 = vmul.f32 %v1497, %v1760
        %v1793 = vmul.f32 %v1498, %v1761
        %v1794 = vmul.f32 %v1499, %v1762
        %v1795 = vmul.f32 %v1500, %v1763
        %v1796 = vmul.f32 %v1501, %v1764
        %v1797 = vmul.f32 %v1502, %v1765
        %v1798 = vmul.f32 %v1503, %v1766
        %v1799 = vmul.f32 %v1504, %v1767
        %v1800 = vmul.f32 %v1505, %v1768
        %v1801 = vmul.f32 %v1506, %v1769
        %v1802 = vadd.f32 %v1770, %v1443
        %v1803 = vadd.f32 %v1771, %v1444
        %v1804 = vadd.f32 %v1772, %v1445
        %v1805 = vadd.f32 %v1773, %v1446
        %v1806 = vadd.f32 %v1774, %v1447
        %v1807 = vadd.f32 %v1775, %v1448
        %v1808 = vadd.f32 %v1776, %v1449
        %v1809 = vadd.f32 %v1777, %v1450
        %v1810 = vadd.f32 %v1778, %v1451
        %v1811 = vadd.f32 %v1779, %v1452
        %v1812 = vadd.f32 %v1780, %v1453
        %v1813 = vadd.f32 %v1781, %v1454
        %v1814 = vadd.f32 %v1782, %v1455
        %v1815 = vadd.f32 %v1783, %v1456
        %v1816 = vadd.f32 %v1784, %v1457
        %v1817 = vadd.f32 %v1785, %v1458
        %v1818 = vadd.f32 %v1786, %v1459
        %v1819 = vadd.f32 %v1787, %v1460
        %v1820 = vadd.f32 %v1788, %v1461
        %v1821 = vadd.f32 %v1789, %v1462
        %v1822 = vadd.f32 %v1790, %v1463
        %v1823 = vadd.f32 %v1791, %v1464
        %v1824 = vadd.f32 %v1792, %v1465
        %v1825 = vadd.f32 %v1793, %v1466
        %v1826 = vadd.f32 %v1794, %v1467
        %v1827 = vadd.f32 %v1795, %v1468
        %v1828 = vadd.f32 %v1796, %v1469
        %v1829 = vadd.f32 %v1797, %v1470
        %v1830 = vadd.f32 %v1798, %v1471
        %v1831 = vadd.f32 %v1799, %v1472
        %v1832 = vadd.f32 %v1800, %v1473
        %v1833 = vadd.f32 %v1801, %v1474
        %v1834 = vmul.f32 %v1475, %v1610
        %v1835 = vmul.f32 %v1476, %v1611
        %v1836 = vmul.f32 %v1477, %v1612
        %v1837 = vmul.f32 %v1478, %v1613
        %v1838 = vmul.f32 %v1479, %v1614
        %v1839 = vmul.f32 %v1480, %v1615
        %v1840 = vmul.f32 %v1481, %v1616
        %v1841 = vmul.f32 %v1482, %v1617
        %v1842 = vmul.f32 %v1483, %v1618
        %v1843 = vmul.f32 %v1484, %v1619
        %v1844 = vmul.f32 %v1485, %v1620
        %v1845 = vmul.f32 %v1486, %v1621
        %v1846 = vmul.f32 %v1487, %v1622
        %v1847 = vmul.f32 %v1488, %v1623
        %v1848 = vmul.f32 %v1489, %v1624
        %v1849 = vmul.f32 %v1490, %v1625
        %v1850 = vmul.f32 %v1491, %v1626
        %v1851 = vmul.f32 %v1492, %v1627
        %v1852 = vmul.f32 %v1493, %v1628
        %v1853 = vmul.f32 %v1494, %v1629
        %v1854 = vmul.f32 %v1495, %v1630
        %v1855 = vmul.f32 %v1496, %v1631
        %v1856 = vmul.f32 %v1497, %v1632
        %v1857 = vmul.f32 %v1498, %v1633
        %v1858 = vmul.f32 %v1499, %v1634
        %v1859 = vmul.f32 %v1500, %v1635
        %v1860 = vmul.f32 %v1501, %v1636
        %v1861 = vmul.f32 %v1502, %v1637
        %v1862 = vmul.f32 %v1503, %v1638
        %v1863 = vmul.f32 %v1504, %v1639
        %v1864 = vmul.f32 %v1505, %v1640
        %v1865 = vmul.f32 %v1506, %v1641
        %vm1866 = vcmp.ge.s32.totalorder %v1146, 4
        %vm1867 = vcmp.ge.s32.totalorder %v1147, 4
        %1868 = vrot.lane.b32.xlu0 %v1834, 4
        %v1869 = vpop.permute.xlu0 %1868
        %1870 = vrot.lane.b32.xlu0 %v1836, 4
        %v1871 = vpop.permute.xlu0 %1870
        %1872 = vrot.lane.b32.xlu0 %v1838, 4
        %v1873 = vpop.permute.xlu0 %1872
        %1874 = vrot.lane.b32.xlu0 %v1840, 4
        %v1875 = vpop.permute.xlu0 %1874
        %1876 = vrot.lane.b32.xlu0 %v1842, 4
        %v1877 = vpop.permute.xlu0 %1876
        %1878 = vrot.lane.b32.xlu0 %v1844, 4
        %v1879 = vpop.permute.xlu0 %1878
        %1880 = vrot.lane.b32.xlu0 %v1846, 4
        %v1881 = vpop.permute.xlu0 %1880
        %1882 = vrot.lane.b32.xlu0 %v1848, 4
        %v1883 = vpop.permute.xlu0 %1882
        %1884 = vrot.lane.b32.xlu0 %v1850, 4
        %v1885 = vpop.permute.xlu0 %1884
        %1886 = vrot.lane.b32.xlu0 %v1852, 4
        %v1887 = vpop.permute.xlu0 %1886
        %1888 = vrot.lane.b32.xlu0 %v1854, 4
        %v1889 = vpop.permute.xlu0 %1888
        %1890 = vrot.lane.b32.xlu0 %v1856, 4
        %v1891 = vpop.permute.xlu0 %1890
        %1892 = vrot.lane.b32.xlu0 %v1858, 4
        %v1893 = vpop.permute.xlu0 %1892
        %1894 = vrot.lane.b32.xlu0 %v1860, 4
        %v1895 = vpop.permute.xlu0 %1894
        %1896 = vrot.lane.b32.xlu0 %v1862, 4
        %v1897 = vpop.permute.xlu0 %1896
        %1898 = vrot.lane.b32.xlu0 %v1864, 4
        %v1899 = vpop.permute.xlu0 %1898
        %1900 = vrot.lane.b32.xlu0 %v1835, 4
        %v1901 = vpop.permute.xlu0 %1900
        %1902 = vrot.lane.b32.xlu0 %v1837, 4
        %v1903 = vpop.permute.xlu0 %1902
        %1904 = vrot.lane.b32.xlu0 %v1839, 4
        %v1905 = vpop.permute.xlu0 %1904
        %1906 = vrot.lane.b32.xlu0 %v1841, 4
        %v1907 = vpop.permute.xlu0 %1906
        %1908 = vrot.lane.b32.xlu0 %v1843, 4
        %v1909 = vpop.permute.xlu0 %1908
        %1910 = vrot.lane.b32.xlu0 %v1845, 4
        %v1911 = vpop.permute.xlu0 %1910
        %1912 = vrot.lane.b32.xlu0 %v1847, 4
        %v1913 = vpop.permute.xlu0 %1912
        %1914 = vrot.lane.b32.xlu0 %v1849, 4
        %v1915 = vpop.permute.xlu0 %1914
        %1916 = vrot.lane.b32.xlu0 %v1851, 4
        %v1917 = vpop.permute.xlu0 %1916
        %1918 = vrot.lane.b32.xlu0 %v1853, 4
        %v1919 = vpop.permute.xlu0 %1918
        %1920 = vrot.lane.b32.xlu0 %v1855, 4
        %v1921 = vpop.permute.xlu0 %1920
        %1922 = vrot.lane.b32.xlu0 %v1857, 4
        %v1923 = vpop.permute.xlu0 %1922
        %1924 = vrot.lane.b32.xlu0 %v1859, 4
        %v1925 = vpop.permute.xlu0 %1924
        %1926 = vrot.lane.b32.xlu0 %v1861, 4
        %v1927 = vpop.permute.xlu0 %1926
        %1928 = vrot.lane.b32.xlu0 %v1863, 4
        %v1929 = vpop.permute.xlu0 %1928
        %1930 = vrot.lane.b32.xlu0 %v1865, 4
        %v1931 = vpop.permute.xlu0 %1930
        %vm1932 = vcmp.lt.s32.totalorder %v1146, 4
        %v1933 = vsel %vm1932, %v1869, %v1901
        %v1934 = vsel %vm1932, %v1871, %v1903
        %v1935 = vsel %vm1932, %v1873, %v1905
        %v1936 = vsel %vm1932, %v1875, %v1907
        %v1937 = vsel %vm1932, %v1877, %v1909
        %v1938 = vsel %vm1932, %v1879, %v1911
        %v1939 = vsel %vm1932, %v1881, %v1913
        %v1940 = vsel %vm1932, %v1883, %v1915
        %v1941 = vsel %vm1932, %v1885, %v1917
        %v1942 = vsel %vm1932, %v1887, %v1919
        %v1943 = vsel %vm1932, %v1889, %v1921
        %v1944 = vsel %vm1932, %v1891, %v1923
        %v1945 = vsel %vm1932, %v1893, %v1925
        %v1946 = vsel %vm1932, %v1895, %v1927
        %v1947 = vsel %vm1932, %v1897, %v1929
        %v1948 = vsel %vm1932, %v1899, %v1931
        %v1949 = vsel %vm1932, %v1901, %v1869
        %v1950 = vsel %vm1932, %v1903, %v1871
        %v1951 = vsel %vm1932, %v1905, %v1873
        %v1952 = vsel %vm1932, %v1907, %v1875
        %v1953 = vsel %vm1932, %v1909, %v1877
        %v1954 = vsel %vm1932, %v1911, %v1879
        %v1955 = vsel %vm1932, %v1913, %v1881
        %v1956 = vsel %vm1932, %v1915, %v1883
        %v1957 = vsel %vm1932, %v1917, %v1885
        %v1958 = vsel %vm1932, %v1919, %v1887
        %v1959 = vsel %vm1932, %v1921, %v1889
        %v1960 = vsel %vm1932, %v1923, %v1891
        %v1961 = vsel %vm1932, %v1925, %v1893
        %v1962 = vsel %vm1932, %v1927, %v1895
        %v1963 = vsel %vm1932, %v1929, %v1897
        %v1964 = vsel %vm1932, %v1931, %v1899
        %v1965 = vsel %vm1866, 1, 0
        %v1966 = vsel %vm1867, 1, 0
        %vm1967 = vcmp.eq.s32.totalorder %v1965, 1
        %vm1968 = vcmp.eq.s32.totalorder %v1966, 1
        %v1969 = vsel %vm1967, %v1949, 1.0
        %v1970 = vsel %vm1968, %v1933, 1.0
        %v1971 = vsel %vm1967, %v1950, 1.0
        %v1972 = vsel %vm1968, %v1934, 1.0
        %v1973 = vsel %vm1967, %v1951, 1.0
        %v1974 = vsel %vm1968, %v1935, 1.0
        %v1975 = vsel %vm1967, %v1952, 1.0
        %v1976 = vsel %vm1968, %v1936, 1.0
        %v1977 = vsel %vm1967, %v1953, 1.0
        %v1978 = vsel %vm1968, %v1937, 1.0
        %v1979 = vsel %vm1967, %v1954, 1.0
        %v1980 = vsel %vm1968, %v1938, 1.0
        %v1981 = vsel %vm1967, %v1955, 1.0
        %v1982 = vsel %vm1968, %v1939, 1.0
        %v1983 = vsel %vm1967, %v1956, 1.0
        %v1984 = vsel %vm1968, %v1940, 1.0
        %v1985 = vsel %vm1967, %v1957, 1.0
        %v1986 = vsel %vm1968, %v1941, 1.0
        %v1987 = vsel %vm1967, %v1958, 1.0
        %v1988 = vsel %vm1968, %v1942, 1.0
        %v1989 = vsel %vm1967, %v1959, 1.0
        %v1990 = vsel %vm1968, %v1943, 1.0
        %v1991 = vsel %vm1967, %v1960, 1.0
        %v1992 = vsel %vm1968, %v1944, 1.0
        %v1993 = vsel %vm1967, %v1961, 1.0
        %v1994 = vsel %vm1968, %v1945, 1.0
        %v1995 = vsel %vm1967, %v1962, 1.0
        %v1996 = vsel %vm1968, %v1946, 1.0
        %v1997 = vsel %vm1967, %v1963, 1.0
        %v1998 = vsel %vm1968, %v1947, 1.0
        %v1999 = vsel %vm1967, %v1964, 1.0
        %v2000 = vsel %vm1968, %v1948, 1.0
        %2001 = vrot.lane.b32.xlu0 %v1802, 4
        %v2002 = vpop.permute.xlu0 %2001
        %2003 = vrot.lane.b32.xlu0 %v1804, 4
        %v2004 = vpop.permute.xlu0 %2003
        %2005 = vrot.lane.b32.xlu0 %v1806, 4
        %v2006 = vpop.permute.xlu0 %2005
        %2007 = vrot.lane.b32.xlu0 %v1808, 4
        %v2008 = vpop.permute.xlu0 %2007
        %2009 = vrot.lane.b32.xlu0 %v1810, 4
        %v2010 = vpop.permute.xlu0 %2009
        %2011 = vrot.lane.b32.xlu0 %v1812, 4
        %v2012 = vpop.permute.xlu0 %2011
        %2013 = vrot.lane.b32.xlu0 %v1814, 4
        %v2014 = vpop.permute.xlu0 %2013
        %2015 = vrot.lane.b32.xlu0 %v1816, 4
        %v2016 = vpop.permute.xlu0 %2015
        %2017 = vrot.lane.b32.xlu0 %v1818, 4
        %v2018 = vpop.permute.xlu0 %2017
        %2019 = vrot.lane.b32.xlu0 %v1820, 4
        %v2020 = vpop.permute.xlu0 %2019
        %2021 = vrot.lane.b32.xlu0 %v1822, 4
        %v2022 = vpop.permute.xlu0 %2021
        %2023 = vrot.lane.b32.xlu0 %v1824, 4
        %v2024 = vpop.permute.xlu0 %2023
        %2025 = vrot.lane.b32.xlu0 %v1826, 4
        %v2026 = vpop.permute.xlu0 %2025
        %2027 = vrot.lane.b32.xlu0 %v1828, 4
        %v2028 = vpop.permute.xlu0 %2027
        %2029 = vrot.lane.b32.xlu0 %v1830, 4
        %v2030 = vpop.permute.xlu0 %2029
        %2031 = vrot.lane.b32.xlu0 %v1832, 4
        %v2032 = vpop.permute.xlu0 %2031
        %2033 = vrot.lane.b32.xlu0 %v1803, 4
        %v2034 = vpop.permute.xlu0 %2033
        %2035 = vrot.lane.b32.xlu0 %v1805, 4
        %v2036 = vpop.permute.xlu0 %2035
        %2037 = vrot.lane.b32.xlu0 %v1807, 4
        %v2038 = vpop.permute.xlu0 %2037
        %2039 = vrot.lane.b32.xlu0 %v1809, 4
        %v2040 = vpop.permute.xlu0 %2039
        %2041 = vrot.lane.b32.xlu0 %v1811, 4
        %v2042 = vpop.permute.xlu0 %2041
        %2043 = vrot.lane.b32.xlu0 %v1813, 4
        %v2044 = vpop.permute.xlu0 %2043
        %2045 = vrot.lane.b32.xlu0 %v1815, 4
        %v2046 = vpop.permute.xlu0 %2045
        %2047 = vrot.lane.b32.xlu0 %v1817, 4
        %v2048 = vpop.permute.xlu0 %2047
        %2049 = vrot.lane.b32.xlu0 %v1819, 4
        %v2050 = vpop.permute.xlu0 %2049
        %2051 = vrot.lane.b32.xlu0 %v1821, 4
        %v2052 = vpop.permute.xlu0 %2051
        %2053 = vrot.lane.b32.xlu0 %v1823, 4
        %v2054 = vpop.permute.xlu0 %2053
        %2055 = vrot.lane.b32.xlu0 %v1825, 4
        %v2056 = vpop.permute.xlu0 %2055
        %2057 = vrot.lane.b32.xlu0 %v1827, 4
        %v2058 = vpop.permute.xlu0 %2057
        %2059 = vrot.lane.b32.xlu0 %v1829, 4
        %v2060 = vpop.permute.xlu0 %2059
        %2061 = vrot.lane.b32.xlu0 %v1831, 4
        %v2062 = vpop.permute.xlu0 %2061
        %2063 = vrot.lane.b32.xlu0 %v1833, 4
        %v2064 = vpop.permute.xlu0 %2063
        %v2065 = vsel %vm1932, %v2002, %v2034
        %v2066 = vsel %vm1932, %v2004, %v2036
        %v2067 = vsel %vm1932, %v2006, %v2038
        %v2068 = vsel %vm1932, %v2008, %v2040
        %v2069 = vsel %vm1932, %v2010, %v2042
        %v2070 = vsel %vm1932, %v2012, %v2044
        %v2071 = vsel %vm1932, %v2014, %v2046
        %v2072 = vsel %vm1932, %v2016, %v2048
        %v2073 = vsel %vm1932, %v2018, %v2050
        %v2074 = vsel %vm1932, %v2020, %v2052
        %v2075 = vsel %vm1932, %v2022, %v2054
        %v2076 = vsel %vm1932, %v2024, %v2056
        %v2077 = vsel %vm1932, %v2026, %v2058
        %v2078 = vsel %vm1932, %v2028, %v2060
        %v2079 = vsel %vm1932, %v2030, %v2062
        %v2080 = vsel %vm1932, %v2032, %v2064
        %v2081 = vsel %vm1932, %v2034, %v2002
        %v2082 = vsel %vm1932, %v2036, %v2004
        %v2083 = vsel %vm1932, %v2038, %v2006
        %v2084 = vsel %vm1932, %v2040, %v2008
        %v2085 = vsel %vm1932, %v2042, %v2010
        %v2086 = vsel %vm1932, %v2044, %v2012
        %v2087 = vsel %vm1932, %v2046, %v2014
        %v2088 = vsel %vm1932, %v2048, %v2016
        %v2089 = vsel %vm1932, %v2050, %v2018
        %v2090 = vsel %vm1932, %v2052, %v2020
        %v2091 = vsel %vm1932, %v2054, %v2022
        %v2092 = vsel %vm1932, %v2056, %v2024
        %v2093 = vsel %vm1932, %v2058, %v2026
        %v2094 = vsel %vm1932, %v2060, %v2028
        %v2095 = vsel %vm1932, %v2062, %v2030
        %v2096 = vsel %vm1932, %v2064, %v2032
        %v2097 = vsel %vm1967, %v2081, 0.0
        %v2098 = vsel %vm1968, %v2065, 0.0
        %v2099 = vsel %vm1967, %v2082, 0.0
        %v2100 = vsel %vm1968, %v2066, 0.0
        %v2101 = vsel %vm1967, %v2083, 0.0
        %v2102 = vsel %vm1968, %v2067, 0.0
        %v2103 = vsel %vm1967, %v2084, 0.0
        %v2104 = vsel %vm1968, %v2068, 0.0
        %v2105 = vsel %vm1967, %v2085, 0.0
        %v2106 = vsel %vm1968, %v2069, 0.0
        %v2107 = vsel %vm1967, %v2086, 0.0
        %v2108 = vsel %vm1968, %v2070, 0.0
        %v2109 = vsel %vm1967, %v2087, 0.0
        %v2110 = vsel %vm1968, %v2071, 0.0
        %v2111 = vsel %vm1967, %v2088, 0.0
        %v2112 = vsel %vm1968, %v2072, 0.0
        %v2113 = vsel %vm1967, %v2089, 0.0
        %v2114 = vsel %vm1968, %v2073, 0.0
        %v2115 = vsel %vm1967, %v2090, 0.0
        %v2116 = vsel %vm1968, %v2074, 0.0
        %v2117 = vsel %vm1967, %v2091, 0.0
        %v2118 = vsel %vm1968, %v2075, 0.0
        %v2119 = vsel %vm1967, %v2092, 0.0
        %v2120 = vsel %vm1968, %v2076, 0.0
        %v2121 = vsel %vm1967, %v2093, 0.0
        %v2122 = vsel %vm1968, %v2077, 0.0
        %v2123 = vsel %vm1967, %v2094, 0.0
        %v2124 = vsel %vm1968, %v2078, 0.0
        %v2125 = vsel %vm1967, %v2095, 0.0
        %v2126 = vsel %vm1968, %v2079, 0.0
        %v2127 = vsel %vm1967, %v2096, 0.0
        %v2128 = vsel %vm1968, %v2080, 0.0
        %v2129 = vmul.f32 %v1834, %v2097
        %v2130 = vmul.f32 %v1835, %v2098
        %v2131 = vmul.f32 %v1836, %v2099
        %v2132 = vmul.f32 %v1837, %v2100
        %v2133 = vmul.f32 %v1838, %v2101
        %v2134 = vmul.f32 %v1839, %v2102
        %v2135 = vmul.f32 %v1840, %v2103
        %v2136 = vmul.f32 %v1841, %v2104
        %v2137 = vmul.f32 %v1842, %v2105
        %v2138 = vmul.f32 %v1843, %v2106
        %v2139 = vmul.f32 %v1844, %v2107
        %v2140 = vmul.f32 %v1845, %v2108
        %v2141 = vmul.f32 %v1846, %v2109
        %v2142 = vmul.f32 %v1847, %v2110
        %v2143 = vmul.f32 %v1848, %v2111
        %v2144 = vmul.f32 %v1849, %v2112
        %v2145 = vmul.f32 %v1850, %v2113
        %v2146 = vmul.f32 %v1851, %v2114
        %v2147 = vmul.f32 %v1852, %v2115
        %v2148 = vmul.f32 %v1853, %v2116
        %v2149 = vmul.f32 %v1854, %v2117
        %v2150 = vmul.f32 %v1855, %v2118
        %v2151 = vmul.f32 %v1856, %v2119
        %v2152 = vmul.f32 %v1857, %v2120
        %v2153 = vmul.f32 %v1858, %v2121
        %v2154 = vmul.f32 %v1859, %v2122
        %v2155 = vmul.f32 %v1860, %v2123
        %v2156 = vmul.f32 %v1861, %v2124
        %v2157 = vmul.f32 %v1862, %v2125
        %v2158 = vmul.f32 %v1863, %v2126
        %v2159 = vmul.f32 %v1864, %v2127
        %v2160 = vmul.f32 %v1865, %v2128
        %v2161 = vadd.f32 %v2129, %v1802
        %v2162 = vadd.f32 %v2130, %v1803
        %v2163 = vadd.f32 %v2131, %v1804
        %v2164 = vadd.f32 %v2132, %v1805
        %v2165 = vadd.f32 %v2133, %v1806
        %v2166 = vadd.f32 %v2134, %v1807
        %v2167 = vadd.f32 %v2135, %v1808
        %v2168 = vadd.f32 %v2136, %v1809
        %v2169 = vadd.f32 %v2137, %v1810
        %v2170 = vadd.f32 %v2138, %v1811
        %v2171 = vadd.f32 %v2139, %v1812
        %v2172 = vadd.f32 %v2140, %v1813
        %v2173 = vadd.f32 %v2141, %v1814
        %v2174 = vadd.f32 %v2142, %v1815
        %v2175 = vadd.f32 %v2143, %v1816
        %v2176 = vadd.f32 %v2144, %v1817
        %v2177 = vadd.f32 %v2145, %v1818
        %v2178 = vadd.f32 %v2146, %v1819
        %v2179 = vadd.f32 %v2147, %v1820
        %v2180 = vadd.f32 %v2148, %v1821
        %v2181 = vadd.f32 %v2149, %v1822
        %v2182 = vadd.f32 %v2150, %v1823
        %v2183 = vadd.f32 %v2151, %v1824
        %v2184 = vadd.f32 %v2152, %v1825
        %v2185 = vadd.f32 %v2153, %v1826
        %v2186 = vadd.f32 %v2154, %v1827
        %v2187 = vadd.f32 %v2155, %v1828
        %v2188 = vadd.f32 %v2156, %v1829
        %v2189 = vadd.f32 %v2157, %v1830
        %v2190 = vadd.f32 %v2158, %v1831
        %v2191 = vadd.f32 %v2159, %v1832
        %v2192 = vadd.f32 %v2160, %v1833
        %v2193 = vmul.f32 %v1834, %v1969
        %v2194 = vmul.f32 %v1835, %v1970
        %v2195 = vmul.f32 %v1836, %v1971
        %v2196 = vmul.f32 %v1837, %v1972
        %v2197 = vmul.f32 %v1838, %v1973
        %v2198 = vmul.f32 %v1839, %v1974
        %v2199 = vmul.f32 %v1840, %v1975
        %v2200 = vmul.f32 %v1841, %v1976
        %v2201 = vmul.f32 %v1842, %v1977
        %v2202 = vmul.f32 %v1843, %v1978
        %v2203 = vmul.f32 %v1844, %v1979
        %v2204 = vmul.f32 %v1845, %v1980
        %v2205 = vmul.f32 %v1846, %v1981
        %v2206 = vmul.f32 %v1847, %v1982
        %v2207 = vmul.f32 %v1848, %v1983
        %v2208 = vmul.f32 %v1849, %v1984
        %v2209 = vmul.f32 %v1850, %v1985
        %v2210 = vmul.f32 %v1851, %v1986
        %v2211 = vmul.f32 %v1852, %v1987
        %v2212 = vmul.f32 %v1853, %v1988
        %v2213 = vmul.f32 %v1854, %v1989
        %v2214 = vmul.f32 %v1855, %v1990
        %v2215 = vmul.f32 %v1856, %v1991
        %v2216 = vmul.f32 %v1857, %v1992
        %v2217 = vmul.f32 %v1858, %v1993
        %v2218 = vmul.f32 %v1859, %v1994
        %v2219 = vmul.f32 %v1860, %v1995
        %v2220 = vmul.f32 %v1861, %v1996
        %v2221 = vmul.f32 %v1862, %v1997
        %v2222 = vmul.f32 %v1863, %v1998
        %v2223 = vmul.f32 %v1864, %v1999
        %v2224 = vmul.f32 %v1865, %v2000
        %vm2225 = vcmp.ge.s32.totalorder %v1146, 8
        %vm2226 = vcmp.ge.s32.totalorder %v1147, 8
        %2227 = vrot.lane.b32.xlu0 %v2193, 8
        %v2228 = vpop.permute.xlu0 %2227
        %2229 = vrot.lane.b32.xlu0 %v2195, 8
        %v2230 = vpop.permute.xlu0 %2229
        %2231 = vrot.lane.b32.xlu0 %v2197, 8
        %v2232 = vpop.permute.xlu0 %2231
        %2233 = vrot.lane.b32.xlu0 %v2199, 8
        %v2234 = vpop.permute.xlu0 %2233
        %2235 = vrot.lane.b32.xlu0 %v2201, 8
        %v2236 = vpop.permute.xlu0 %2235
        %2237 = vrot.lane.b32.xlu0 %v2203, 8
        %v2238 = vpop.permute.xlu0 %2237
        %2239 = vrot.lane.b32.xlu0 %v2205, 8
        %v2240 = vpop.permute.xlu0 %2239
        %2241 = vrot.lane.b32.xlu0 %v2207, 8
        %v2242 = vpop.permute.xlu0 %2241
        %2243 = vrot.lane.b32.xlu0 %v2209, 8
        %v2244 = vpop.permute.xlu0 %2243
        %2245 = vrot.lane.b32.xlu0 %v2211, 8
        %v2246 = vpop.permute.xlu0 %2245
        %2247 = vrot.lane.b32.xlu0 %v2213, 8
        %v2248 = vpop.permute.xlu0 %2247
        %2249 = vrot.lane.b32.xlu0 %v2215, 8
        %v2250 = vpop.permute.xlu0 %2249
        %2251 = vrot.lane.b32.xlu0 %v2217, 8
        %v2252 = vpop.permute.xlu0 %2251
        %2253 = vrot.lane.b32.xlu0 %v2219, 8
        %v2254 = vpop.permute.xlu0 %2253
        %2255 = vrot.lane.b32.xlu0 %v2221, 8
        %v2256 = vpop.permute.xlu0 %2255
        %2257 = vrot.lane.b32.xlu0 %v2223, 8
        %v2258 = vpop.permute.xlu0 %2257
        %2259 = vrot.lane.b32.xlu0 %v2194, 8
        %v2260 = vpop.permute.xlu0 %2259
        %2261 = vrot.lane.b32.xlu0 %v2196, 8
        %v2262 = vpop.permute.xlu0 %2261
        %2263 = vrot.lane.b32.xlu0 %v2198, 8
        %v2264 = vpop.permute.xlu0 %2263
        %2265 = vrot.lane.b32.xlu0 %v2200, 8
        %v2266 = vpop.permute.xlu0 %2265
        %2267 = vrot.lane.b32.xlu0 %v2202, 8
        %v2268 = vpop.permute.xlu0 %2267
        %2269 = vrot.lane.b32.xlu0 %v2204, 8
        %v2270 = vpop.permute.xlu0 %2269
        %2271 = vrot.lane.b32.xlu0 %v2206, 8
        %v2272 = vpop.permute.xlu0 %2271
        %2273 = vrot.lane.b32.xlu0 %v2208, 8
        %v2274 = vpop.permute.xlu0 %2273
        %2275 = vrot.lane.b32.xlu0 %v2210, 8
        %v2276 = vpop.permute.xlu0 %2275
        %2277 = vrot.lane.b32.xlu0 %v2212, 8
        %v2278 = vpop.permute.xlu0 %2277
        %2279 = vrot.lane.b32.xlu0 %v2214, 8
        %v2280 = vpop.permute.xlu0 %2279
        %2281 = vrot.lane.b32.xlu0 %v2216, 8
        %v2282 = vpop.permute.xlu0 %2281
        %2283 = vrot.lane.b32.xlu0 %v2218, 8
        %v2284 = vpop.permute.xlu0 %2283
        %2285 = vrot.lane.b32.xlu0 %v2220, 8
        %v2286 = vpop.permute.xlu0 %2285
        %2287 = vrot.lane.b32.xlu0 %v2222, 8
        %v2288 = vpop.permute.xlu0 %2287
        %2289 = vrot.lane.b32.xlu0 %v2224, 8
        %v2290 = vpop.permute.xlu0 %2289
        %vm2291 = vcmp.lt.s32.totalorder %v1146, 8
        %v2292 = vsel %vm2291, %v2228, %v2260
        %v2293 = vsel %vm2291, %v2230, %v2262
        %v2294 = vsel %vm2291, %v2232, %v2264
        %v2295 = vsel %vm2291, %v2234, %v2266
        %v2296 = vsel %vm2291, %v2236, %v2268
        %v2297 = vsel %vm2291, %v2238, %v2270
        %v2298 = vsel %vm2291, %v2240, %v2272
        %v2299 = vsel %vm2291, %v2242, %v2274
        %v2300 = vsel %vm2291, %v2244, %v2276
        %v2301 = vsel %vm2291, %v2246, %v2278
        %v2302 = vsel %vm2291, %v2248, %v2280
        %v2303 = vsel %vm2291, %v2250, %v2282
        %v2304 = vsel %vm2291, %v2252, %v2284
        %v2305 = vsel %vm2291, %v2254, %v2286
        %v2306 = vsel %vm2291, %v2256, %v2288
        %v2307 = vsel %vm2291, %v2258, %v2290
        %v2308 = vsel %vm2291, %v2260, %v2228
        %v2309 = vsel %vm2291, %v2262, %v2230
        %v2310 = vsel %vm2291, %v2264, %v2232
        %v2311 = vsel %vm2291, %v2266, %v2234
        %v2312 = vsel %vm2291, %v2268, %v2236
        %v2313 = vsel %vm2291, %v2270, %v2238
        %v2314 = vsel %vm2291, %v2272, %v2240
        %v2315 = vsel %vm2291, %v2274, %v2242
        %v2316 = vsel %vm2291, %v2276, %v2244
        %v2317 = vsel %vm2291, %v2278, %v2246
        %v2318 = vsel %vm2291, %v2280, %v2248
        %v2319 = vsel %vm2291, %v2282, %v2250
        %v2320 = vsel %vm2291, %v2284, %v2252
        %v2321 = vsel %vm2291, %v2286, %v2254
        %v2322 = vsel %vm2291, %v2288, %v2256
        %v2323 = vsel %vm2291, %v2290, %v2258
        %v2324 = vsel %vm2225, 1, 0
        %v2325 = vsel %vm2226, 1, 0
        %vm2326 = vcmp.eq.s32.totalorder %v2324, 1
        %vm2327 = vcmp.eq.s32.totalorder %v2325, 1
        %v2328 = vsel %vm2326, %v2308, 1.0
        %v2329 = vsel %vm2327, %v2292, 1.0
        %v2330 = vsel %vm2326, %v2309, 1.0
        %v2331 = vsel %vm2327, %v2293, 1.0
        %v2332 = vsel %vm2326, %v2310, 1.0
        %v2333 = vsel %vm2327, %v2294, 1.0
        %v2334 = vsel %vm2326, %v2311, 1.0
        %v2335 = vsel %vm2327, %v2295, 1.0
        %v2336 = vsel %vm2326, %v2312, 1.0
        %v2337 = vsel %vm2327, %v2296, 1.0
        %v2338 = vsel %vm2326, %v2313, 1.0
        %v2339 = vsel %vm2327, %v2297, 1.0
        %v2340 = vsel %vm2326, %v2314, 1.0
        %v2341 = vsel %vm2327, %v2298, 1.0
        %v2342 = vsel %vm2326, %v2315, 1.0
        %v2343 = vsel %vm2327, %v2299, 1.0
        %v2344 = vsel %vm2326, %v2316, 1.0
        %v2345 = vsel %vm2327, %v2300, 1.0
        %v2346 = vsel %vm2326, %v2317, 1.0
        %v2347 = vsel %vm2327, %v2301, 1.0
        %v2348 = vsel %vm2326, %v2318, 1.0
        %v2349 = vsel %vm2327, %v2302, 1.0
        %v2350 = vsel %vm2326, %v2319, 1.0
        %v2351 = vsel %vm2327, %v2303, 1.0
        %v2352 = vsel %vm2326, %v2320, 1.0
        %v2353 = vsel %vm2327, %v2304, 1.0
        %v2354 = vsel %vm2326, %v2321, 1.0
        %v2355 = vsel %vm2327, %v2305, 1.0
        %v2356 = vsel %vm2326, %v2322, 1.0
        %v2357 = vsel %vm2327, %v2306, 1.0
        %v2358 = vsel %vm2326, %v2323, 1.0
        %v2359 = vsel %vm2327, %v2307, 1.0
        %2360 = vrot.lane.b32.xlu0 %v2161, 8
        %v2361 = vpop.permute.xlu0 %2360
        %2362 = vrot.lane.b32.xlu0 %v2163, 8
        %v2363 = vpop.permute.xlu0 %2362
        %2364 = vrot.lane.b32.xlu0 %v2165, 8
        %v2365 = vpop.permute.xlu0 %2364
        %2366 = vrot.lane.b32.xlu0 %v2167, 8
        %v2367 = vpop.permute.xlu0 %2366
        %2368 = vrot.lane.b32.xlu0 %v2169, 8
        %v2369 = vpop.permute.xlu0 %2368
        %2370 = vrot.lane.b32.xlu0 %v2171, 8
        %v2371 = vpop.permute.xlu0 %2370
        %2372 = vrot.lane.b32.xlu0 %v2173, 8
        %v2373 = vpop.permute.xlu0 %2372
        %2374 = vrot.lane.b32.xlu0 %v2175, 8
        %v2375 = vpop.permute.xlu0 %2374
        %2376 = vrot.lane.b32.xlu0 %v2177, 8
        %v2377 = vpop.permute.xlu0 %2376
        %2378 = vrot.lane.b32.xlu0 %v2179, 8
        %v2379 = vpop.permute.xlu0 %2378
        %2380 = vrot.lane.b32.xlu0 %v2181, 8
        %v2381 = vpop.permute.xlu0 %2380
        %2382 = vrot.lane.b32.xlu0 %v2183, 8
        %v2383 = vpop.permute.xlu0 %2382
        %2384 = vrot.lane.b32.xlu0 %v2185, 8
        %v2385 = vpop.permute.xlu0 %2384
        %2386 = vrot.lane.b32.xlu0 %v2187, 8
        %v2387 = vpop.permute.xlu0 %2386
        %2388 = vrot.lane.b32.xlu0 %v2189, 8
        %v2389 = vpop.permute.xlu0 %2388
        %2390 = vrot.lane.b32.xlu0 %v2191, 8
        %v2391 = vpop.permute.xlu0 %2390
        %2392 = vrot.lane.b32.xlu0 %v2162, 8
        %v2393 = vpop.permute.xlu0 %2392
        %2394 = vrot.lane.b32.xlu0 %v2164, 8
        %v2395 = vpop.permute.xlu0 %2394
        %2396 = vrot.lane.b32.xlu0 %v2166, 8
        %v2397 = vpop.permute.xlu0 %2396
        %2398 = vrot.lane.b32.xlu0 %v2168, 8
        %v2399 = vpop.permute.xlu0 %2398
        %2400 = vrot.lane.b32.xlu0 %v2170, 8
        %v2401 = vpop.permute.xlu0 %2400
        %2402 = vrot.lane.b32.xlu0 %v2172, 8
        %v2403 = vpop.permute.xlu0 %2402
        %2404 = vrot.lane.b32.xlu0 %v2174, 8
        %v2405 = vpop.permute.xlu0 %2404
        %2406 = vrot.lane.b32.xlu0 %v2176, 8
        %v2407 = vpop.permute.xlu0 %2406
        %2408 = vrot.lane.b32.xlu0 %v2178, 8
        %v2409 = vpop.permute.xlu0 %2408
        %2410 = vrot.lane.b32.xlu0 %v2180, 8
        %v2411 = vpop.permute.xlu0 %2410
        %2412 = vrot.lane.b32.xlu0 %v2182, 8
        %v2413 = vpop.permute.xlu0 %2412
        %2414 = vrot.lane.b32.xlu0 %v2184, 8
        %v2415 = vpop.permute.xlu0 %2414
        %2416 = vrot.lane.b32.xlu0 %v2186, 8
        %v2417 = vpop.permute.xlu0 %2416
        %2418 = vrot.lane.b32.xlu0 %v2188, 8
        %v2419 = vpop.permute.xlu0 %2418
        %2420 = vrot.lane.b32.xlu0 %v2190, 8
        %v2421 = vpop.permute.xlu0 %2420
        %2422 = vrot.lane.b32.xlu0 %v2192, 8
        %v2423 = vpop.permute.xlu0 %2422
        %v2424 = vsel %vm2291, %v2361, %v2393
        %v2425 = vsel %vm2291, %v2363, %v2395
        %v2426 = vsel %vm2291, %v2365, %v2397
        %v2427 = vsel %vm2291, %v2367, %v2399
        %v2428 = vsel %vm2291, %v2369, %v2401
        %v2429 = vsel %vm2291, %v2371, %v2403
        %v2430 = vsel %vm2291, %v2373, %v2405
        %v2431 = vsel %vm2291, %v2375, %v2407
        %v2432 = vsel %vm2291, %v2377, %v2409
        %v2433 = vsel %vm2291, %v2379, %v2411
        %v2434 = vsel %vm2291, %v2381, %v2413
        %v2435 = vsel %vm2291, %v2383, %v2415
        %v2436 = vsel %vm2291, %v2385, %v2417
        %v2437 = vsel %vm2291, %v2387, %v2419
        %v2438 = vsel %vm2291, %v2389, %v2421
        %v2439 = vsel %vm2291, %v2391, %v2423
        %v2440 = vsel %vm2291, %v2393, %v2361
        %v2441 = vsel %vm2291, %v2395, %v2363
        %v2442 = vsel %vm2291, %v2397, %v2365
        %v2443 = vsel %vm2291, %v2399, %v2367
        %v2444 = vsel %vm2291, %v2401, %v2369
        %v2445 = vsel %vm2291, %v2403, %v2371
        %v2446 = vsel %vm2291, %v2405, %v2373
        %v2447 = vsel %vm2291, %v2407, %v2375
        %v2448 = vsel %vm2291, %v2409, %v2377
        %v2449 = vsel %vm2291, %v2411, %v2379
        %v2450 = vsel %vm2291, %v2413, %v2381
        %v2451 = vsel %vm2291, %v2415, %v2383
        %v2452 = vsel %vm2291, %v2417, %v2385
        %v2453 = vsel %vm2291, %v2419, %v2387
        %v2454 = vsel %vm2291, %v2421, %v2389
        %v2455 = vsel %vm2291, %v2423, %v2391
        %v2456 = vsel %vm2326, %v2440, 0.0
        %v2457 = vsel %vm2327, %v2424, 0.0
        %v2458 = vsel %vm2326, %v2441, 0.0
        %v2459 = vsel %vm2327, %v2425, 0.0
        %v2460 = vsel %vm2326, %v2442, 0.0
        %v2461 = vsel %vm2327, %v2426, 0.0
        %v2462 = vsel %vm2326, %v2443, 0.0
        %v2463 = vsel %vm2327, %v2427, 0.0
        %v2464 = vsel %vm2326, %v2444, 0.0
        %v2465 = vsel %vm2327, %v2428, 0.0
        %v2466 = vsel %vm2326, %v2445, 0.0
        %v2467 = vsel %vm2327, %v2429, 0.0
        %v2468 = vsel %vm2326, %v2446, 0.0
        %v2469 = vsel %vm2327, %v2430, 0.0
        %v2470 = vsel %vm2326, %v2447, 0.0
        %v2471 = vsel %vm2327, %v2431, 0.0
        %v2472 = vsel %vm2326, %v2448, 0.0
        %v2473 = vsel %vm2327, %v2432, 0.0
        %v2474 = vsel %vm2326, %v2449, 0.0
        %v2475 = vsel %vm2327, %v2433, 0.0
        %v2476 = vsel %vm2326, %v2450, 0.0
        %v2477 = vsel %vm2327, %v2434, 0.0
        %v2478 = vsel %vm2326, %v2451, 0.0
        %v2479 = vsel %vm2327, %v2435, 0.0
        %v2480 = vsel %vm2326, %v2452, 0.0
        %v2481 = vsel %vm2327, %v2436, 0.0
        %v2482 = vsel %vm2326, %v2453, 0.0
        %v2483 = vsel %vm2327, %v2437, 0.0
        %v2484 = vsel %vm2326, %v2454, 0.0
        %v2485 = vsel %vm2327, %v2438, 0.0
        %v2486 = vsel %vm2326, %v2455, 0.0
        %v2487 = vsel %vm2327, %v2439, 0.0
        %v2488 = vmul.f32 %v2193, %v2456
        %v2489 = vmul.f32 %v2194, %v2457
        %v2490 = vmul.f32 %v2195, %v2458
        %v2491 = vmul.f32 %v2196, %v2459
        %v2492 = vmul.f32 %v2197, %v2460
        %v2493 = vmul.f32 %v2198, %v2461
        %v2494 = vmul.f32 %v2199, %v2462
        %v2495 = vmul.f32 %v2200, %v2463
        %v2496 = vmul.f32 %v2201, %v2464
        %v2497 = vmul.f32 %v2202, %v2465
        %v2498 = vmul.f32 %v2203, %v2466
        %v2499 = vmul.f32 %v2204, %v2467
        %v2500 = vmul.f32 %v2205, %v2468
        %v2501 = vmul.f32 %v2206, %v2469
        %v2502 = vmul.f32 %v2207, %v2470
        %v2503 = vmul.f32 %v2208, %v2471
        %v2504 = vmul.f32 %v2209, %v2472
        %v2505 = vmul.f32 %v2210, %v2473
        %v2506 = vmul.f32 %v2211, %v2474
        %v2507 = vmul.f32 %v2212, %v2475
        %v2508 = vmul.f32 %v2213, %v2476
        %v2509 = vmul.f32 %v2214, %v2477
        %v2510 = vmul.f32 %v2215, %v2478
        %v2511 = vmul.f32 %v2216, %v2479
        %v2512 = vmul.f32 %v2217, %v2480
        %v2513 = vmul.f32 %v2218, %v2481
        %v2514 = vmul.f32 %v2219, %v2482
        %v2515 = vmul.f32 %v2220, %v2483
        %v2516 = vmul.f32 %v2221, %v2484
        %v2517 = vmul.f32 %v2222, %v2485
        %v2518 = vmul.f32 %v2223, %v2486
        %v2519 = vmul.f32 %v2224, %v2487
        %v2520 = vadd.f32 %v2488, %v2161
        %v2521 = vadd.f32 %v2489, %v2162
        %v2522 = vadd.f32 %v2490, %v2163
        %v2523 = vadd.f32 %v2491, %v2164
        %v2524 = vadd.f32 %v2492, %v2165
        %v2525 = vadd.f32 %v2493, %v2166
        %v2526 = vadd.f32 %v2494, %v2167
        %v2527 = vadd.f32 %v2495, %v2168
        %v2528 = vadd.f32 %v2496, %v2169
        %v2529 = vadd.f32 %v2497, %v2170
        %v2530 = vadd.f32 %v2498, %v2171
        %v2531 = vadd.f32 %v2499, %v2172
        %v2532 = vadd.f32 %v2500, %v2173
        %v2533 = vadd.f32 %v2501, %v2174
        %v2534 = vadd.f32 %v2502, %v2175
        %v2535 = vadd.f32 %v2503, %v2176
        %v2536 = vadd.f32 %v2504, %v2177
        %v2537 = vadd.f32 %v2505, %v2178
        %v2538 = vadd.f32 %v2506, %v2179
        %v2539 = vadd.f32 %v2507, %v2180
        %v2540 = vadd.f32 %v2508, %v2181
        %v2541 = vadd.f32 %v2509, %v2182
        %v2542 = vadd.f32 %v2510, %v2183
        %v2543 = vadd.f32 %v2511, %v2184
        %v2544 = vadd.f32 %v2512, %v2185
        %v2545 = vadd.f32 %v2513, %v2186
        %v2546 = vadd.f32 %v2514, %v2187
        %v2547 = vadd.f32 %v2515, %v2188
        %v2548 = vadd.f32 %v2516, %v2189
        %v2549 = vadd.f32 %v2517, %v2190
        %v2550 = vadd.f32 %v2518, %v2191
        %v2551 = vadd.f32 %v2519, %v2192
        %v2552 = vmul.f32 %v2193, %v2328
        %v2553 = vmul.f32 %v2194, %v2329
        %v2554 = vmul.f32 %v2195, %v2330
        %v2555 = vmul.f32 %v2196, %v2331
        %v2556 = vmul.f32 %v2197, %v2332
        %v2557 = vmul.f32 %v2198, %v2333
        %v2558 = vmul.f32 %v2199, %v2334
        %v2559 = vmul.f32 %v2200, %v2335
        %v2560 = vmul.f32 %v2201, %v2336
        %v2561 = vmul.f32 %v2202, %v2337
        %v2562 = vmul.f32 %v2203, %v2338
        %v2563 = vmul.f32 %v2204, %v2339
        %v2564 = vmul.f32 %v2205, %v2340
        %v2565 = vmul.f32 %v2206, %v2341
        %v2566 = vmul.f32 %v2207, %v2342
        %v2567 = vmul.f32 %v2208, %v2343
        %v2568 = vmul.f32 %v2209, %v2344
        %v2569 = vmul.f32 %v2210, %v2345
        %v2570 = vmul.f32 %v2211, %v2346
        %v2571 = vmul.f32 %v2212, %v2347
        %v2572 = vmul.f32 %v2213, %v2348
        %v2573 = vmul.f32 %v2214, %v2349
        %v2574 = vmul.f32 %v2215, %v2350
        %v2575 = vmul.f32 %v2216, %v2351
        %v2576 = vmul.f32 %v2217, %v2352
        %v2577 = vmul.f32 %v2218, %v2353
        %v2578 = vmul.f32 %v2219, %v2354
        %v2579 = vmul.f32 %v2220, %v2355
        %v2580 = vmul.f32 %v2221, %v2356
        %v2581 = vmul.f32 %v2222, %v2357
        %v2582 = vmul.f32 %v2223, %v2358
        %v2583 = vmul.f32 %v2224, %v2359
        %vm2584 = vcmp.ge.s32.totalorder %v1146, 16
        %vm2585 = vcmp.ge.s32.totalorder %v1147, 16
        %2586 = vrot.lane.b32.xlu0 %v2552, 16
        %v2587 = vpop.permute.xlu0 %2586
        %2588 = vrot.lane.b32.xlu0 %v2554, 16
        %v2589 = vpop.permute.xlu0 %2588
        %2590 = vrot.lane.b32.xlu0 %v2556, 16
        %v2591 = vpop.permute.xlu0 %2590
        %2592 = vrot.lane.b32.xlu0 %v2558, 16
        %v2593 = vpop.permute.xlu0 %2592
        %2594 = vrot.lane.b32.xlu0 %v2560, 16
        %v2595 = vpop.permute.xlu0 %2594
        %2596 = vrot.lane.b32.xlu0 %v2562, 16
        %v2597 = vpop.permute.xlu0 %2596
        %2598 = vrot.lane.b32.xlu0 %v2564, 16
        %v2599 = vpop.permute.xlu0 %2598
        %2600 = vrot.lane.b32.xlu0 %v2566, 16
        %v2601 = vpop.permute.xlu0 %2600
        %2602 = vrot.lane.b32.xlu0 %v2568, 16
        %v2603 = vpop.permute.xlu0 %2602
        %2604 = vrot.lane.b32.xlu0 %v2570, 16
        %v2605 = vpop.permute.xlu0 %2604
        %2606 = vrot.lane.b32.xlu0 %v2572, 16
        %v2607 = vpop.permute.xlu0 %2606
        %2608 = vrot.lane.b32.xlu0 %v2574, 16
        %v2609 = vpop.permute.xlu0 %2608
        %2610 = vrot.lane.b32.xlu0 %v2576, 16
        %v2611 = vpop.permute.xlu0 %2610
        %2612 = vrot.lane.b32.xlu0 %v2578, 16
        %v2613 = vpop.permute.xlu0 %2612
        %2614 = vrot.lane.b32.xlu0 %v2580, 16
        %v2615 = vpop.permute.xlu0 %2614
        %2616 = vrot.lane.b32.xlu0 %v2582, 16
        %v2617 = vpop.permute.xlu0 %2616
        %2618 = vrot.lane.b32.xlu0 %v2553, 16
        %v2619 = vpop.permute.xlu0 %2618
        %2620 = vrot.lane.b32.xlu0 %v2555, 16
        %v2621 = vpop.permute.xlu0 %2620
        %2622 = vrot.lane.b32.xlu0 %v2557, 16
        %v2623 = vpop.permute.xlu0 %2622
        %2624 = vrot.lane.b32.xlu0 %v2559, 16
        %v2625 = vpop.permute.xlu0 %2624
        %2626 = vrot.lane.b32.xlu0 %v2561, 16
        %v2627 = vpop.permute.xlu0 %2626
        %2628 = vrot.lane.b32.xlu0 %v2563, 16
        %v2629 = vpop.permute.xlu0 %2628
        %2630 = vrot.lane.b32.xlu0 %v2565, 16
        %v2631 = vpop.permute.xlu0 %2630
        %2632 = vrot.lane.b32.xlu0 %v2567, 16
        %v2633 = vpop.permute.xlu0 %2632
        %2634 = vrot.lane.b32.xlu0 %v2569, 16
        %v2635 = vpop.permute.xlu0 %2634
        %2636 = vrot.lane.b32.xlu0 %v2571, 16
        %v2637 = vpop.permute.xlu0 %2636
        %2638 = vrot.lane.b32.xlu0 %v2573, 16
        %v2639 = vpop.permute.xlu0 %2638
        %2640 = vrot.lane.b32.xlu0 %v2575, 16
        %v2641 = vpop.permute.xlu0 %2640
        %2642 = vrot.lane.b32.xlu0 %v2577, 16
        %v2643 = vpop.permute.xlu0 %2642
        %2644 = vrot.lane.b32.xlu0 %v2579, 16
        %v2645 = vpop.permute.xlu0 %2644
        %2646 = vrot.lane.b32.xlu0 %v2581, 16
        %v2647 = vpop.permute.xlu0 %2646
        %2648 = vrot.lane.b32.xlu0 %v2583, 16
        %v2649 = vpop.permute.xlu0 %2648
        %vm2650 = vcmp.lt.s32.totalorder %v1146, 16
        %v2651 = vsel %vm2650, %v2587, %v2619
        %v2652 = vsel %vm2650, %v2589, %v2621
        %v2653 = vsel %vm2650, %v2591, %v2623
        %v2654 = vsel %vm2650, %v2593, %v2625
        %v2655 = vsel %vm2650, %v2595, %v2627
        %v2656 = vsel %vm2650, %v2597, %v2629
        %v2657 = vsel %vm2650, %v2599, %v2631
        %v2658 = vsel %vm2650, %v2601, %v2633
        %v2659 = vsel %vm2650, %v2603, %v2635
        %v2660 = vsel %vm2650, %v2605, %v2637
        %v2661 = vsel %vm2650, %v2607, %v2639
        %v2662 = vsel %vm2650, %v2609, %v2641
        %v2663 = vsel %vm2650, %v2611, %v2643
        %v2664 = vsel %vm2650, %v2613, %v2645
        %v2665 = vsel %vm2650, %v2615, %v2647
        %v2666 = vsel %vm2650, %v2617, %v2649
        %v2667 = vsel %vm2650, %v2619, %v2587
        %v2668 = vsel %vm2650, %v2621, %v2589
        %v2669 = vsel %vm2650, %v2623, %v2591
        %v2670 = vsel %vm2650, %v2625, %v2593
        %v2671 = vsel %vm2650, %v2627, %v2595
        %v2672 = vsel %vm2650, %v2629, %v2597
        %v2673 = vsel %vm2650, %v2631, %v2599
        %v2674 = vsel %vm2650, %v2633, %v2601
        %v2675 = vsel %vm2650, %v2635, %v2603
        %v2676 = vsel %vm2650, %v2637, %v2605
        %v2677 = vsel %vm2650, %v2639, %v2607
        %v2678 = vsel %vm2650, %v2641, %v2609
        %v2679 = vsel %vm2650, %v2643, %v2611
        %v2680 = vsel %vm2650, %v2645, %v2613
        %v2681 = vsel %vm2650, %v2647, %v2615
        %v2682 = vsel %vm2650, %v2649, %v2617
        %v2683 = vsel %vm2584, 1, 0
        %v2684 = vsel %vm2585, 1, 0
        %vm2685 = vcmp.eq.s32.totalorder %v2683, 1
        %vm2686 = vcmp.eq.s32.totalorder %v2684, 1
        %v2687 = vsel %vm2685, %v2667, 1.0
        %v2688 = vsel %vm2686, %v2651, 1.0
        %v2689 = vsel %vm2685, %v2668, 1.0
        %v2690 = vsel %vm2686, %v2652, 1.0
        %v2691 = vsel %vm2685, %v2669, 1.0
        %v2692 = vsel %vm2686, %v2653, 1.0
        %v2693 = vsel %vm2685, %v2670, 1.0
        %v2694 = vsel %vm2686, %v2654, 1.0
        %v2695 = vsel %vm2685, %v2671, 1.0
        %v2696 = vsel %vm2686, %v2655, 1.0
        %v2697 = vsel %vm2685, %v2672, 1.0
        %v2698 = vsel %vm2686, %v2656, 1.0
        %v2699 = vsel %vm2685, %v2673, 1.0
        %v2700 = vsel %vm2686, %v2657, 1.0
        %v2701 = vsel %vm2685, %v2674, 1.0
        %v2702 = vsel %vm2686, %v2658, 1.0
        %v2703 = vsel %vm2685, %v2675, 1.0
        %v2704 = vsel %vm2686, %v2659, 1.0
        %v2705 = vsel %vm2685, %v2676, 1.0
        %v2706 = vsel %vm2686, %v2660, 1.0
        %v2707 = vsel %vm2685, %v2677, 1.0
        %v2708 = vsel %vm2686, %v2661, 1.0
        %v2709 = vsel %vm2685, %v2678, 1.0
        %v2710 = vsel %vm2686, %v2662, 1.0
        %v2711 = vsel %vm2685, %v2679, 1.0
        %v2712 = vsel %vm2686, %v2663, 1.0
        %v2713 = vsel %vm2685, %v2680, 1.0
        %v2714 = vsel %vm2686, %v2664, 1.0
        %v2715 = vsel %vm2685, %v2681, 1.0
        %v2716 = vsel %vm2686, %v2665, 1.0
        %v2717 = vsel %vm2685, %v2682, 1.0
        %v2718 = vsel %vm2686, %v2666, 1.0
        %2719 = vrot.lane.b32.xlu0 %v2520, 16
        %v2720 = vpop.permute.xlu0 %2719
        %2721 = vrot.lane.b32.xlu0 %v2522, 16
        %v2722 = vpop.permute.xlu0 %2721
        %2723 = vrot.lane.b32.xlu0 %v2524, 16
        %v2724 = vpop.permute.xlu0 %2723
        %2725 = vrot.lane.b32.xlu0 %v2526, 16
        %v2726 = vpop.permute.xlu0 %2725
        %2727 = vrot.lane.b32.xlu0 %v2528, 16
        %v2728 = vpop.permute.xlu0 %2727
        %2729 = vrot.lane.b32.xlu0 %v2530, 16
        %v2730 = vpop.permute.xlu0 %2729
        %2731 = vrot.lane.b32.xlu0 %v2532, 16
        %v2732 = vpop.permute.xlu0 %2731
        %2733 = vrot.lane.b32.xlu0 %v2534, 16
        %v2734 = vpop.permute.xlu0 %2733
        %2735 = vrot.lane.b32.xlu0 %v2536, 16
        %v2736 = vpop.permute.xlu0 %2735
        %2737 = vrot.lane.b32.xlu0 %v2538, 16
        %v2738 = vpop.permute.xlu0 %2737
        %2739 = vrot.lane.b32.xlu0 %v2540, 16
        %v2740 = vpop.permute.xlu0 %2739
        %2741 = vrot.lane.b32.xlu0 %v2542, 16
        %v2742 = vpop.permute.xlu0 %2741
        %2743 = vrot.lane.b32.xlu0 %v2544, 16
        %v2744 = vpop.permute.xlu0 %2743
        %2745 = vrot.lane.b32.xlu0 %v2546, 16
        %v2746 = vpop.permute.xlu0 %2745
        %2747 = vrot.lane.b32.xlu0 %v2548, 16
        %v2748 = vpop.permute.xlu0 %2747
        %2749 = vrot.lane.b32.xlu0 %v2550, 16
        %v2750 = vpop.permute.xlu0 %2749
        %2751 = vrot.lane.b32.xlu0 %v2521, 16
        %v2752 = vpop.permute.xlu0 %2751
        %2753 = vrot.lane.b32.xlu0 %v2523, 16
        %v2754 = vpop.permute.xlu0 %2753
        %2755 = vrot.lane.b32.xlu0 %v2525, 16
        %v2756 = vpop.permute.xlu0 %2755
        %2757 = vrot.lane.b32.xlu0 %v2527, 16
        %v2758 = vpop.permute.xlu0 %2757
        %2759 = vrot.lane.b32.xlu0 %v2529, 16
        %v2760 = vpop.permute.xlu0 %2759
        %2761 = vrot.lane.b32.xlu0 %v2531, 16
        %v2762 = vpop.permute.xlu0 %2761
        %2763 = vrot.lane.b32.xlu0 %v2533, 16
        %v2764 = vpop.permute.xlu0 %2763
        %2765 = vrot.lane.b32.xlu0 %v2535, 16
        %v2766 = vpop.permute.xlu0 %2765
        %2767 = vrot.lane.b32.xlu0 %v2537, 16
        %v2768 = vpop.permute.xlu0 %2767
        %2769 = vrot.lane.b32.xlu0 %v2539, 16
        %v2770 = vpop.permute.xlu0 %2769
        %2771 = vrot.lane.b32.xlu0 %v2541, 16
        %v2772 = vpop.permute.xlu0 %2771
        %2773 = vrot.lane.b32.xlu0 %v2543, 16
        %v2774 = vpop.permute.xlu0 %2773
        %2775 = vrot.lane.b32.xlu0 %v2545, 16
        %v2776 = vpop.permute.xlu0 %2775
        %2777 = vrot.lane.b32.xlu0 %v2547, 16
        %v2778 = vpop.permute.xlu0 %2777
        %2779 = vrot.lane.b32.xlu0 %v2549, 16
        %v2780 = vpop.permute.xlu0 %2779
        %2781 = vrot.lane.b32.xlu0 %v2551, 16
        %v2782 = vpop.permute.xlu0 %2781
        %v2783 = vsel %vm2650, %v2720, %v2752
        %v2784 = vsel %vm2650, %v2722, %v2754
        %v2785 = vsel %vm2650, %v2724, %v2756
        %v2786 = vsel %vm2650, %v2726, %v2758
        %v2787 = vsel %vm2650, %v2728, %v2760
        %v2788 = vsel %vm2650, %v2730, %v2762
        %v2789 = vsel %vm2650, %v2732, %v2764
        %v2790 = vsel %vm2650, %v2734, %v2766
        %v2791 = vsel %vm2650, %v2736, %v2768
        %v2792 = vsel %vm2650, %v2738, %v2770
        %v2793 = vsel %vm2650, %v2740, %v2772
        %v2794 = vsel %vm2650, %v2742, %v2774
        %v2795 = vsel %vm2650, %v2744, %v2776
        %v2796 = vsel %vm2650, %v2746, %v2778
        %v2797 = vsel %vm2650, %v2748, %v2780
        %v2798 = vsel %vm2650, %v2750, %v2782
        %v2799 = vsel %vm2650, %v2752, %v2720
        %v2800 = vsel %vm2650, %v2754, %v2722
        %v2801 = vsel %vm2650, %v2756, %v2724
        %v2802 = vsel %vm2650, %v2758, %v2726
        %v2803 = vsel %vm2650, %v2760, %v2728
        %v2804 = vsel %vm2650, %v2762, %v2730
        %v2805 = vsel %vm2650, %v2764, %v2732
        %v2806 = vsel %vm2650, %v2766, %v2734
        %v2807 = vsel %vm2650, %v2768, %v2736
        %v2808 = vsel %vm2650, %v2770, %v2738
        %v2809 = vsel %vm2650, %v2772, %v2740
        %v2810 = vsel %vm2650, %v2774, %v2742
        %v2811 = vsel %vm2650, %v2776, %v2744
        %v2812 = vsel %vm2650, %v2778, %v2746
        %v2813 = vsel %vm2650, %v2780, %v2748
        %v2814 = vsel %vm2650, %v2782, %v2750
        %v2815 = vsel %vm2685, %v2799, 0.0
        %v2816 = vsel %vm2686, %v2783, 0.0
        %v2817 = vsel %vm2685, %v2800, 0.0
        %v2818 = vsel %vm2686, %v2784, 0.0
        %v2819 = vsel %vm2685, %v2801, 0.0
        %v2820 = vsel %vm2686, %v2785, 0.0
        %v2821 = vsel %vm2685, %v2802, 0.0
        %v2822 = vsel %vm2686, %v2786, 0.0
        %v2823 = vsel %vm2685, %v2803, 0.0
        %v2824 = vsel %vm2686, %v2787, 0.0
        %v2825 = vsel %vm2685, %v2804, 0.0
        %v2826 = vsel %vm2686, %v2788, 0.0
        %v2827 = vsel %vm2685, %v2805, 0.0
        %v2828 = vsel %vm2686, %v2789, 0.0
        %v2829 = vsel %vm2685, %v2806, 0.0
        %v2830 = vsel %vm2686, %v2790, 0.0
        %v2831 = vsel %vm2685, %v2807, 0.0
        %v2832 = vsel %vm2686, %v2791, 0.0
        %v2833 = vsel %vm2685, %v2808, 0.0
        %v2834 = vsel %vm2686, %v2792, 0.0
        %v2835 = vsel %vm2685, %v2809, 0.0
        %v2836 = vsel %vm2686, %v2793, 0.0
        %v2837 = vsel %vm2685, %v2810, 0.0
        %v2838 = vsel %vm2686, %v2794, 0.0
        %v2839 = vsel %vm2685, %v2811, 0.0
        %v2840 = vsel %vm2686, %v2795, 0.0
        %v2841 = vsel %vm2685, %v2812, 0.0
        %v2842 = vsel %vm2686, %v2796, 0.0
        %v2843 = vsel %vm2685, %v2813, 0.0
        %v2844 = vsel %vm2686, %v2797, 0.0
        %v2845 = vsel %vm2685, %v2814, 0.0
        %v2846 = vsel %vm2686, %v2798, 0.0
        %v2847 = vmul.f32 %v2552, %v2815
        %v2848 = vmul.f32 %v2553, %v2816
        %v2849 = vmul.f32 %v2554, %v2817
        %v2850 = vmul.f32 %v2555, %v2818
        %v2851 = vmul.f32 %v2556, %v2819
        %v2852 = vmul.f32 %v2557, %v2820
        %v2853 = vmul.f32 %v2558, %v2821
        %v2854 = vmul.f32 %v2559, %v2822
        %v2855 = vmul.f32 %v2560, %v2823
        %v2856 = vmul.f32 %v2561, %v2824
        %v2857 = vmul.f32 %v2562, %v2825
        %v2858 = vmul.f32 %v2563, %v2826
        %v2859 = vmul.f32 %v2564, %v2827
        %v2860 = vmul.f32 %v2565, %v2828
        %v2861 = vmul.f32 %v2566, %v2829
        %v2862 = vmul.f32 %v2567, %v2830
        %v2863 = vmul.f32 %v2568, %v2831
        %v2864 = vmul.f32 %v2569, %v2832
        %v2865 = vmul.f32 %v2570, %v2833
        %v2866 = vmul.f32 %v2571, %v2834
        %v2867 = vmul.f32 %v2572, %v2835
        %v2868 = vmul.f32 %v2573, %v2836
        %v2869 = vmul.f32 %v2574, %v2837
        %v2870 = vmul.f32 %v2575, %v2838
        %v2871 = vmul.f32 %v2576, %v2839
        %v2872 = vmul.f32 %v2577, %v2840
        %v2873 = vmul.f32 %v2578, %v2841
        %v2874 = vmul.f32 %v2579, %v2842
        %v2875 = vmul.f32 %v2580, %v2843
        %v2876 = vmul.f32 %v2581, %v2844
        %v2877 = vmul.f32 %v2582, %v2845
        %v2878 = vmul.f32 %v2583, %v2846
        %v2879 = vadd.f32 %v2847, %v2520
        %v2880 = vadd.f32 %v2848, %v2521
        %v2881 = vadd.f32 %v2849, %v2522
        %v2882 = vadd.f32 %v2850, %v2523
        %v2883 = vadd.f32 %v2851, %v2524
        %v2884 = vadd.f32 %v2852, %v2525
        %v2885 = vadd.f32 %v2853, %v2526
        %v2886 = vadd.f32 %v2854, %v2527
        %v2887 = vadd.f32 %v2855, %v2528
        %v2888 = vadd.f32 %v2856, %v2529
        %v2889 = vadd.f32 %v2857, %v2530
        %v2890 = vadd.f32 %v2858, %v2531
        %v2891 = vadd.f32 %v2859, %v2532
        %v2892 = vadd.f32 %v2860, %v2533
        %v2893 = vadd.f32 %v2861, %v2534
        %v2894 = vadd.f32 %v2862, %v2535
        %v2895 = vadd.f32 %v2863, %v2536
        %v2896 = vadd.f32 %v2864, %v2537
        %v2897 = vadd.f32 %v2865, %v2538
        %v2898 = vadd.f32 %v2866, %v2539
        %v2899 = vadd.f32 %v2867, %v2540
        %v2900 = vadd.f32 %v2868, %v2541
        %v2901 = vadd.f32 %v2869, %v2542
        %v2902 = vadd.f32 %v2870, %v2543
        %v2903 = vadd.f32 %v2871, %v2544
        %v2904 = vadd.f32 %v2872, %v2545
        %v2905 = vadd.f32 %v2873, %v2546
        %v2906 = vadd.f32 %v2874, %v2547
        %v2907 = vadd.f32 %v2875, %v2548
        %v2908 = vadd.f32 %v2876, %v2549
        %v2909 = vadd.f32 %v2877, %v2550
        %v2910 = vadd.f32 %v2878, %v2551
        %v2911 = vmul.f32 %v2552, %v2687
        %v2912 = vmul.f32 %v2553, %v2688
        %v2913 = vmul.f32 %v2554, %v2689
        %v2914 = vmul.f32 %v2555, %v2690
        %v2915 = vmul.f32 %v2556, %v2691
        %v2916 = vmul.f32 %v2557, %v2692
        %v2917 = vmul.f32 %v2558, %v2693
        %v2918 = vmul.f32 %v2559, %v2694
        %v2919 = vmul.f32 %v2560, %v2695
        %v2920 = vmul.f32 %v2561, %v2696
        %v2921 = vmul.f32 %v2562, %v2697
        %v2922 = vmul.f32 %v2563, %v2698
        %v2923 = vmul.f32 %v2564, %v2699
        %v2924 = vmul.f32 %v2565, %v2700
        %v2925 = vmul.f32 %v2566, %v2701
        %v2926 = vmul.f32 %v2567, %v2702
        %v2927 = vmul.f32 %v2568, %v2703
        %v2928 = vmul.f32 %v2569, %v2704
        %v2929 = vmul.f32 %v2570, %v2705
        %v2930 = vmul.f32 %v2571, %v2706
        %v2931 = vmul.f32 %v2572, %v2707
        %v2932 = vmul.f32 %v2573, %v2708
        %v2933 = vmul.f32 %v2574, %v2709
        %v2934 = vmul.f32 %v2575, %v2710
        %v2935 = vmul.f32 %v2576, %v2711
        %v2936 = vmul.f32 %v2577, %v2712
        %v2937 = vmul.f32 %v2578, %v2713
        %v2938 = vmul.f32 %v2579, %v2714
        %v2939 = vmul.f32 %v2580, %v2715
        %v2940 = vmul.f32 %v2581, %v2716
        %v2941 = vmul.f32 %v2582, %v2717
        %v2942 = vmul.f32 %v2583, %v2718
        %vm2943 = vcmp.ge.s32.totalorder %v1146, 32
        %vm2944 = vcmp.ge.s32.totalorder %v1147, 32
        %2945 = vrot.lane.b32.xlu0 %v2911, 32
        %v2946 = vpop.permute.xlu0 %2945
        %2947 = vrot.lane.b32.xlu0 %v2913, 32
        %v2948 = vpop.permute.xlu0 %2947
        %2949 = vrot.lane.b32.xlu0 %v2915, 32
        %v2950 = vpop.permute.xlu0 %2949
        %2951 = vrot.lane.b32.xlu0 %v2917, 32
        %v2952 = vpop.permute.xlu0 %2951
        %2953 = vrot.lane.b32.xlu0 %v2919, 32
        %v2954 = vpop.permute.xlu0 %2953
        %2955 = vrot.lane.b32.xlu0 %v2921, 32
        %v2956 = vpop.permute.xlu0 %2955
        %2957 = vrot.lane.b32.xlu0 %v2923, 32
        %v2958 = vpop.permute.xlu0 %2957
        %2959 = vrot.lane.b32.xlu0 %v2925, 32
        %v2960 = vpop.permute.xlu0 %2959
        %2961 = vrot.lane.b32.xlu0 %v2927, 32
        %v2962 = vpop.permute.xlu0 %2961
        %2963 = vrot.lane.b32.xlu0 %v2929, 32
        %v2964 = vpop.permute.xlu0 %2963
        %2965 = vrot.lane.b32.xlu0 %v2931, 32
        %v2966 = vpop.permute.xlu0 %2965
        %2967 = vrot.lane.b32.xlu0 %v2933, 32
        %v2968 = vpop.permute.xlu0 %2967
        %2969 = vrot.lane.b32.xlu0 %v2935, 32
        %v2970 = vpop.permute.xlu0 %2969
        %2971 = vrot.lane.b32.xlu0 %v2937, 32
        %v2972 = vpop.permute.xlu0 %2971
        %2973 = vrot.lane.b32.xlu0 %v2939, 32
        %v2974 = vpop.permute.xlu0 %2973
        %2975 = vrot.lane.b32.xlu0 %v2941, 32
        %v2976 = vpop.permute.xlu0 %2975
        %2977 = vrot.lane.b32.xlu0 %v2912, 32
        %v2978 = vpop.permute.xlu0 %2977
        %2979 = vrot.lane.b32.xlu0 %v2914, 32
        %v2980 = vpop.permute.xlu0 %2979
        %2981 = vrot.lane.b32.xlu0 %v2916, 32
        %v2982 = vpop.permute.xlu0 %2981
        %2983 = vrot.lane.b32.xlu0 %v2918, 32
        %v2984 = vpop.permute.xlu0 %2983
        %2985 = vrot.lane.b32.xlu0 %v2920, 32
        %v2986 = vpop.permute.xlu0 %2985
        %2987 = vrot.lane.b32.xlu0 %v2922, 32
        %v2988 = vpop.permute.xlu0 %2987
        %2989 = vrot.lane.b32.xlu0 %v2924, 32
        %v2990 = vpop.permute.xlu0 %2989
        %2991 = vrot.lane.b32.xlu0 %v2926, 32
        %v2992 = vpop.permute.xlu0 %2991
        %2993 = vrot.lane.b32.xlu0 %v2928, 32
        %v2994 = vpop.permute.xlu0 %2993
        %2995 = vrot.lane.b32.xlu0 %v2930, 32
        %v2996 = vpop.permute.xlu0 %2995
        %2997 = vrot.lane.b32.xlu0 %v2932, 32
        %v2998 = vpop.permute.xlu0 %2997
        %2999 = vrot.lane.b32.xlu0 %v2934, 32
        %v3000 = vpop.permute.xlu0 %2999
        %3001 = vrot.lane.b32.xlu0 %v2936, 32
        %v3002 = vpop.permute.xlu0 %3001
        %3003 = vrot.lane.b32.xlu0 %v2938, 32
        %v3004 = vpop.permute.xlu0 %3003
        %3005 = vrot.lane.b32.xlu0 %v2940, 32
        %v3006 = vpop.permute.xlu0 %3005
        %3007 = vrot.lane.b32.xlu0 %v2942, 32
        %v3008 = vpop.permute.xlu0 %3007
        %vm3009 = vcmp.lt.s32.totalorder %v1146, 32
        %v3010 = vsel %vm3009, %v2946, %v2978
        %v3011 = vsel %vm3009, %v2948, %v2980
        %v3012 = vsel %vm3009, %v2950, %v2982
        %v3013 = vsel %vm3009, %v2952, %v2984
        %v3014 = vsel %vm3009, %v2954, %v2986
        %v3015 = vsel %vm3009, %v2956, %v2988
        %v3016 = vsel %vm3009, %v2958, %v2990
        %v3017 = vsel %vm3009, %v2960, %v2992
        %v3018 = vsel %vm3009, %v2962, %v2994
        %v3019 = vsel %vm3009, %v2964, %v2996
        %v3020 = vsel %vm3009, %v2966, %v2998
        %v3021 = vsel %vm3009, %v2968, %v3000
        %v3022 = vsel %vm3009, %v2970, %v3002
        %v3023 = vsel %vm3009, %v2972, %v3004
        %v3024 = vsel %vm3009, %v2974, %v3006
        %v3025 = vsel %vm3009, %v2976, %v3008
        %v3026 = vsel %vm3009, %v2978, %v2946
        %v3027 = vsel %vm3009, %v2980, %v2948
        %v3028 = vsel %vm3009, %v2982, %v2950
        %v3029 = vsel %vm3009, %v2984, %v2952
        %v3030 = vsel %vm3009, %v2986, %v2954
        %v3031 = vsel %vm3009, %v2988, %v2956
        %v3032 = vsel %vm3009, %v2990, %v2958
        %v3033 = vsel %vm3009, %v2992, %v2960
        %v3034 = vsel %vm3009, %v2994, %v2962
        %v3035 = vsel %vm3009, %v2996, %v2964
        %v3036 = vsel %vm3009, %v2998, %v2966
        %v3037 = vsel %vm3009, %v3000, %v2968
        %v3038 = vsel %vm3009, %v3002, %v2970
        %v3039 = vsel %vm3009, %v3004, %v2972
        %v3040 = vsel %vm3009, %v3006, %v2974
        %v3041 = vsel %vm3009, %v3008, %v2976
        %v3042 = vsel %vm2943, 1, 0
        %v3043 = vsel %vm2944, 1, 0
        %vm3044 = vcmp.eq.s32.totalorder %v3042, 1
        %vm3045 = vcmp.eq.s32.totalorder %v3043, 1
        %v3046 = vsel %vm3044, %v3026, 1.0
        %v3047 = vsel %vm3045, %v3010, 1.0
        %v3048 = vsel %vm3044, %v3027, 1.0
        %v3049 = vsel %vm3045, %v3011, 1.0
        %v3050 = vsel %vm3044, %v3028, 1.0
        %v3051 = vsel %vm3045, %v3012, 1.0
        %v3052 = vsel %vm3044, %v3029, 1.0
        %v3053 = vsel %vm3045, %v3013, 1.0
        %v3054 = vsel %vm3044, %v3030, 1.0
        %v3055 = vsel %vm3045, %v3014, 1.0
        %v3056 = vsel %vm3044, %v3031, 1.0
        %v3057 = vsel %vm3045, %v3015, 1.0
        %v3058 = vsel %vm3044, %v3032, 1.0
        %v3059 = vsel %vm3045, %v3016, 1.0
        %v3060 = vsel %vm3044, %v3033, 1.0
        %v3061 = vsel %vm3045, %v3017, 1.0
        %v3062 = vsel %vm3044, %v3034, 1.0
        %v3063 = vsel %vm3045, %v3018, 1.0
        %v3064 = vsel %vm3044, %v3035, 1.0
        %v3065 = vsel %vm3045, %v3019, 1.0
        %v3066 = vsel %vm3044, %v3036, 1.0
        %v3067 = vsel %vm3045, %v3020, 1.0
        %v3068 = vsel %vm3044, %v3037, 1.0
        %v3069 = vsel %vm3045, %v3021, 1.0
        %v3070 = vsel %vm3044, %v3038, 1.0
        %v3071 = vsel %vm3045, %v3022, 1.0
        %v3072 = vsel %vm3044, %v3039, 1.0
        %v3073 = vsel %vm3045, %v3023, 1.0
        %v3074 = vsel %vm3044, %v3040, 1.0
        %v3075 = vsel %vm3045, %v3024, 1.0
        %v3076 = vsel %vm3044, %v3041, 1.0
        %v3077 = vsel %vm3045, %v3025, 1.0
        %3078 = vrot.lane.b32.xlu0 %v2879, 32
        %v3079 = vpop.permute.xlu0 %3078
        %3080 = vrot.lane.b32.xlu0 %v2881, 32
        %v3081 = vpop.permute.xlu0 %3080
        %3082 = vrot.lane.b32.xlu0 %v2883, 32
        %v3083 = vpop.permute.xlu0 %3082
        %3084 = vrot.lane.b32.xlu0 %v2885, 32
        %v3085 = vpop.permute.xlu0 %3084
        %3086 = vrot.lane.b32.xlu0 %v2887, 32
        %v3087 = vpop.permute.xlu0 %3086
        %3088 = vrot.lane.b32.xlu0 %v2889, 32
        %v3089 = vpop.permute.xlu0 %3088
        %3090 = vrot.lane.b32.xlu0 %v2891, 32
        %v3091 = vpop.permute.xlu0 %3090
        %3092 = vrot.lane.b32.xlu0 %v2893, 32
        %v3093 = vpop.permute.xlu0 %3092
        %3094 = vrot.lane.b32.xlu0 %v2895, 32
        %v3095 = vpop.permute.xlu0 %3094
        %3096 = vrot.lane.b32.xlu0 %v2897, 32
        %v3097 = vpop.permute.xlu0 %3096
        %3098 = vrot.lane.b32.xlu0 %v2899, 32
        %v3099 = vpop.permute.xlu0 %3098
        %3100 = vrot.lane.b32.xlu0 %v2901, 32
        %v3101 = vpop.permute.xlu0 %3100
        %3102 = vrot.lane.b32.xlu0 %v2903, 32
        %v3103 = vpop.permute.xlu0 %3102
        %3104 = vrot.lane.b32.xlu0 %v2905, 32
        %v3105 = vpop.permute.xlu0 %3104
        %3106 = vrot.lane.b32.xlu0 %v2907, 32
        %v3107 = vpop.permute.xlu0 %3106
        %3108 = vrot.lane.b32.xlu0 %v2909, 32
        %v3109 = vpop.permute.xlu0 %3108
        %3110 = vrot.lane.b32.xlu0 %v2880, 32
        %v3111 = vpop.permute.xlu0 %3110
        %3112 = vrot.lane.b32.xlu0 %v2882, 32
        %v3113 = vpop.permute.xlu0 %3112
        %3114 = vrot.lane.b32.xlu0 %v2884, 32
        %v3115 = vpop.permute.xlu0 %3114
        %3116 = vrot.lane.b32.xlu0 %v2886, 32
        %v3117 = vpop.permute.xlu0 %3116
        %3118 = vrot.lane.b32.xlu0 %v2888, 32
        %v3119 = vpop.permute.xlu0 %3118
        %3120 = vrot.lane.b32.xlu0 %v2890, 32
        %v3121 = vpop.permute.xlu0 %3120
        %3122 = vrot.lane.b32.xlu0 %v2892, 32
        %v3123 = vpop.permute.xlu0 %3122
        %3124 = vrot.lane.b32.xlu0 %v2894, 32
        %v3125 = vpop.permute.xlu0 %3124
        %3126 = vrot.lane.b32.xlu0 %v2896, 32
        %v3127 = vpop.permute.xlu0 %3126
        %3128 = vrot.lane.b32.xlu0 %v2898, 32
        %v3129 = vpop.permute.xlu0 %3128
        %3130 = vrot.lane.b32.xlu0 %v2900, 32
        %v3131 = vpop.permute.xlu0 %3130
        %3132 = vrot.lane.b32.xlu0 %v2902, 32
        %v3133 = vpop.permute.xlu0 %3132
        %3134 = vrot.lane.b32.xlu0 %v2904, 32
        %v3135 = vpop.permute.xlu0 %3134
        %3136 = vrot.lane.b32.xlu0 %v2906, 32
        %v3137 = vpop.permute.xlu0 %3136
        %3138 = vrot.lane.b32.xlu0 %v2908, 32
        %v3139 = vpop.permute.xlu0 %3138
        %3140 = vrot.lane.b32.xlu0 %v2910, 32
        %v3141 = vpop.permute.xlu0 %3140
        %v3142 = vsel %vm3009, %v3079, %v3111
        %v3143 = vsel %vm3009, %v3081, %v3113
        %v3144 = vsel %vm3009, %v3083, %v3115
        %v3145 = vsel %vm3009, %v3085, %v3117
        %v3146 = vsel %vm3009, %v3087, %v3119
        %v3147 = vsel %vm3009, %v3089, %v3121
        %v3148 = vsel %vm3009, %v3091, %v3123
        %v3149 = vsel %vm3009, %v3093, %v3125
        %v3150 = vsel %vm3009, %v3095, %v3127
        %v3151 = vsel %vm3009, %v3097, %v3129
        %v3152 = vsel %vm3009, %v3099, %v3131
        %v3153 = vsel %vm3009, %v3101, %v3133
        %v3154 = vsel %vm3009, %v3103, %v3135
        %v3155 = vsel %vm3009, %v3105, %v3137
        %v3156 = vsel %vm3009, %v3107, %v3139
        %v3157 = vsel %vm3009, %v3109, %v3141
        %v3158 = vsel %vm3009, %v3111, %v3079
        %v3159 = vsel %vm3009, %v3113, %v3081
        %v3160 = vsel %vm3009, %v3115, %v3083
        %v3161 = vsel %vm3009, %v3117, %v3085
        %v3162 = vsel %vm3009, %v3119, %v3087
        %v3163 = vsel %vm3009, %v3121, %v3089
        %v3164 = vsel %vm3009, %v3123, %v3091
        %v3165 = vsel %vm3009, %v3125, %v3093
        %v3166 = vsel %vm3009, %v3127, %v3095
        %v3167 = vsel %vm3009, %v3129, %v3097
        %v3168 = vsel %vm3009, %v3131, %v3099
        %v3169 = vsel %vm3009, %v3133, %v3101
        %v3170 = vsel %vm3009, %v3135, %v3103
        %v3171 = vsel %vm3009, %v3137, %v3105
        %v3172 = vsel %vm3009, %v3139, %v3107
        %v3173 = vsel %vm3009, %v3141, %v3109
        %v3174 = vsel %vm3044, %v3158, 0.0
        %v3175 = vsel %vm3045, %v3142, 0.0
        %v3176 = vsel %vm3044, %v3159, 0.0
        %v3177 = vsel %vm3045, %v3143, 0.0
        %v3178 = vsel %vm3044, %v3160, 0.0
        %v3179 = vsel %vm3045, %v3144, 0.0
        %v3180 = vsel %vm3044, %v3161, 0.0
        %v3181 = vsel %vm3045, %v3145, 0.0
        %v3182 = vsel %vm3044, %v3162, 0.0
        %v3183 = vsel %vm3045, %v3146, 0.0
        %v3184 = vsel %vm3044, %v3163, 0.0
        %v3185 = vsel %vm3045, %v3147, 0.0
        %v3186 = vsel %vm3044, %v3164, 0.0
        %v3187 = vsel %vm3045, %v3148, 0.0
        %v3188 = vsel %vm3044, %v3165, 0.0
        %v3189 = vsel %vm3045, %v3149, 0.0
        %v3190 = vsel %vm3044, %v3166, 0.0
        %v3191 = vsel %vm3045, %v3150, 0.0
        %v3192 = vsel %vm3044, %v3167, 0.0
        %v3193 = vsel %vm3045, %v3151, 0.0
        %v3194 = vsel %vm3044, %v3168, 0.0
        %v3195 = vsel %vm3045, %v3152, 0.0
        %v3196 = vsel %vm3044, %v3169, 0.0
        %v3197 = vsel %vm3045, %v3153, 0.0
        %v3198 = vsel %vm3044, %v3170, 0.0
        %v3199 = vsel %vm3045, %v3154, 0.0
        %v3200 = vsel %vm3044, %v3171, 0.0
        %v3201 = vsel %vm3045, %v3155, 0.0
        %v3202 = vsel %vm3044, %v3172, 0.0
        %v3203 = vsel %vm3045, %v3156, 0.0
        %v3204 = vsel %vm3044, %v3173, 0.0
        %v3205 = vsel %vm3045, %v3157, 0.0
        %v3206 = vmul.f32 %v2911, %v3174
        %v3207 = vmul.f32 %v2912, %v3175
        %v3208 = vmul.f32 %v2913, %v3176
        %v3209 = vmul.f32 %v2914, %v3177
        %v3210 = vmul.f32 %v2915, %v3178
        %v3211 = vmul.f32 %v2916, %v3179
        %v3212 = vmul.f32 %v2917, %v3180
        %v3213 = vmul.f32 %v2918, %v3181
        %v3214 = vmul.f32 %v2919, %v3182
        %v3215 = vmul.f32 %v2920, %v3183
        %v3216 = vmul.f32 %v2921, %v3184
        %v3217 = vmul.f32 %v2922, %v3185
        %v3218 = vmul.f32 %v2923, %v3186
        %v3219 = vmul.f32 %v2924, %v3187
        %v3220 = vmul.f32 %v2925, %v3188
        %v3221 = vmul.f32 %v2926, %v3189
        %v3222 = vmul.f32 %v2927, %v3190
        %v3223 = vmul.f32 %v2928, %v3191
        %v3224 = vmul.f32 %v2929, %v3192
        %v3225 = vmul.f32 %v2930, %v3193
        %v3226 = vmul.f32 %v2931, %v3194
        %v3227 = vmul.f32 %v2932, %v3195
        %v3228 = vmul.f32 %v2933, %v3196
        %v3229 = vmul.f32 %v2934, %v3197
        %v3230 = vmul.f32 %v2935, %v3198
        %v3231 = vmul.f32 %v2936, %v3199
        %v3232 = vmul.f32 %v2937, %v3200
        %v3233 = vmul.f32 %v2938, %v3201
        %v3234 = vmul.f32 %v2939, %v3202
        %v3235 = vmul.f32 %v2940, %v3203
        %v3236 = vmul.f32 %v2941, %v3204
        %v3237 = vmul.f32 %v2942, %v3205
        %v3238 = vadd.f32 %v3206, %v2879
        %v3239 = vadd.f32 %v3207, %v2880
        %v3240 = vadd.f32 %v3208, %v2881
        %v3241 = vadd.f32 %v3209, %v2882
        %v3242 = vadd.f32 %v3210, %v2883
        %v3243 = vadd.f32 %v3211, %v2884
        %v3244 = vadd.f32 %v3212, %v2885
        %v3245 = vadd.f32 %v3213, %v2886
        %v3246 = vadd.f32 %v3214, %v2887
        %v3247 = vadd.f32 %v3215, %v2888
        %v3248 = vadd.f32 %v3216, %v2889
        %v3249 = vadd.f32 %v3217, %v2890
        %v3250 = vadd.f32 %v3218, %v2891
        %v3251 = vadd.f32 %v3219, %v2892
        %v3252 = vadd.f32 %v3220, %v2893
        %v3253 = vadd.f32 %v3221, %v2894
        %v3254 = vadd.f32 %v3222, %v2895
        %v3255 = vadd.f32 %v3223, %v2896
        %v3256 = vadd.f32 %v3224, %v2897
        %v3257 = vadd.f32 %v3225, %v2898
        %v3258 = vadd.f32 %v3226, %v2899
        %v3259 = vadd.f32 %v3227, %v2900
        %v3260 = vadd.f32 %v3228, %v2901
        %v3261 = vadd.f32 %v3229, %v2902
        %v3262 = vadd.f32 %v3230, %v2903
        %v3263 = vadd.f32 %v3231, %v2904
        %v3264 = vadd.f32 %v3232, %v2905
        %v3265 = vadd.f32 %v3233, %v2906
        %v3266 = vadd.f32 %v3234, %v2907
        %v3267 = vadd.f32 %v3235, %v2908
        %v3268 = vadd.f32 %v3236, %v2909
        %v3269 = vadd.f32 %v3237, %v2910
        %v3270 = vmul.f32 %v2911, %v3046
        %v3271 = vmul.f32 %v2912, %v3047
        %v3272 = vmul.f32 %v2913, %v3048
        %v3273 = vmul.f32 %v2914, %v3049
        %v3274 = vmul.f32 %v2915, %v3050
        %v3275 = vmul.f32 %v2916, %v3051
        %v3276 = vmul.f32 %v2917, %v3052
        %v3277 = vmul.f32 %v2918, %v3053
        %v3278 = vmul.f32 %v2919, %v3054
        %v3279 = vmul.f32 %v2920, %v3055
        %v3280 = vmul.f32 %v2921, %v3056
        %v3281 = vmul.f32 %v2922, %v3057
        %v3282 = vmul.f32 %v2923, %v3058
        %v3283 = vmul.f32 %v2924, %v3059
        %v3284 = vmul.f32 %v2925, %v3060
        %v3285 = vmul.f32 %v2926, %v3061
        %v3286 = vmul.f32 %v2927, %v3062
        %v3287 = vmul.f32 %v2928, %v3063
        %v3288 = vmul.f32 %v2929, %v3064
        %v3289 = vmul.f32 %v2930, %v3065
        %v3290 = vmul.f32 %v2931, %v3066
        %v3291 = vmul.f32 %v2932, %v3067
        %v3292 = vmul.f32 %v2933, %v3068
        %v3293 = vmul.f32 %v2934, %v3069
        %v3294 = vmul.f32 %v2935, %v3070
        %v3295 = vmul.f32 %v2936, %v3071
        %v3296 = vmul.f32 %v2937, %v3072
        %v3297 = vmul.f32 %v2938, %v3073
        %v3298 = vmul.f32 %v2939, %v3074
        %v3299 = vmul.f32 %v2940, %v3075
        %v3300 = vmul.f32 %v2941, %v3076
        %v3301 = vmul.f32 %v2942, %v3077
        %vm3302 = vcmp.ge.s32.totalorder %v1146, 64
        %vm3303 = vcmp.ge.s32.totalorder %v1147, 64
        %3304 = vrot.lane.b32.xlu0 %v3270, 64
        %v3305 = vpop.permute.xlu0 %3304
        %3306 = vrot.lane.b32.xlu0 %v3272, 64
        %v3307 = vpop.permute.xlu0 %3306
        %3308 = vrot.lane.b32.xlu0 %v3274, 64
        %v3309 = vpop.permute.xlu0 %3308
        %3310 = vrot.lane.b32.xlu0 %v3276, 64
        %v3311 = vpop.permute.xlu0 %3310
        %3312 = vrot.lane.b32.xlu0 %v3278, 64
        %v3313 = vpop.permute.xlu0 %3312
        %3314 = vrot.lane.b32.xlu0 %v3280, 64
        %v3315 = vpop.permute.xlu0 %3314
        %3316 = vrot.lane.b32.xlu0 %v3282, 64
        %v3317 = vpop.permute.xlu0 %3316
        %3318 = vrot.lane.b32.xlu0 %v3284, 64
        %v3319 = vpop.permute.xlu0 %3318
        %3320 = vrot.lane.b32.xlu0 %v3286, 64
        %v3321 = vpop.permute.xlu0 %3320
        %3322 = vrot.lane.b32.xlu0 %v3288, 64
        %v3323 = vpop.permute.xlu0 %3322
        %3324 = vrot.lane.b32.xlu0 %v3290, 64
        %v3325 = vpop.permute.xlu0 %3324
        %3326 = vrot.lane.b32.xlu0 %v3292, 64
        %v3327 = vpop.permute.xlu0 %3326
        %3328 = vrot.lane.b32.xlu0 %v3294, 64
        %v3329 = vpop.permute.xlu0 %3328
        %3330 = vrot.lane.b32.xlu0 %v3296, 64
        %v3331 = vpop.permute.xlu0 %3330
        %3332 = vrot.lane.b32.xlu0 %v3298, 64
        %v3333 = vpop.permute.xlu0 %3332
        %3334 = vrot.lane.b32.xlu0 %v3300, 64
        %v3335 = vpop.permute.xlu0 %3334
        %3336 = vrot.lane.b32.xlu0 %v3271, 64
        %v3337 = vpop.permute.xlu0 %3336
        %3338 = vrot.lane.b32.xlu0 %v3273, 64
        %v3339 = vpop.permute.xlu0 %3338
        %3340 = vrot.lane.b32.xlu0 %v3275, 64
        %v3341 = vpop.permute.xlu0 %3340
        %3342 = vrot.lane.b32.xlu0 %v3277, 64
        %v3343 = vpop.permute.xlu0 %3342
        %3344 = vrot.lane.b32.xlu0 %v3279, 64
        %v3345 = vpop.permute.xlu0 %3344
        %3346 = vrot.lane.b32.xlu0 %v3281, 64
        %v3347 = vpop.permute.xlu0 %3346
        %3348 = vrot.lane.b32.xlu0 %v3283, 64
        %v3349 = vpop.permute.xlu0 %3348
        %3350 = vrot.lane.b32.xlu0 %v3285, 64
        %v3351 = vpop.permute.xlu0 %3350
        %3352 = vrot.lane.b32.xlu0 %v3287, 64
        %v3353 = vpop.permute.xlu0 %3352
        %3354 = vrot.lane.b32.xlu0 %v3289, 64
        %v3355 = vpop.permute.xlu0 %3354
        %3356 = vrot.lane.b32.xlu0 %v3291, 64
        %v3357 = vpop.permute.xlu0 %3356
        %3358 = vrot.lane.b32.xlu0 %v3293, 64
        %v3359 = vpop.permute.xlu0 %3358
        %3360 = vrot.lane.b32.xlu0 %v3295, 64
        %v3361 = vpop.permute.xlu0 %3360
        %3362 = vrot.lane.b32.xlu0 %v3297, 64
        %v3363 = vpop.permute.xlu0 %3362
        %3364 = vrot.lane.b32.xlu0 %v3299, 64
        %v3365 = vpop.permute.xlu0 %3364
        %3366 = vrot.lane.b32.xlu0 %v3301, 64
        %v3367 = vpop.permute.xlu0 %3366
        %vm3368 = vcmp.lt.s32.totalorder %v1146, 64
        %v3369 = vsel %vm3368, %v3305, %v3337
        %v3370 = vsel %vm3368, %v3307, %v3339
        %v3371 = vsel %vm3368, %v3309, %v3341
        %v3372 = vsel %vm3368, %v3311, %v3343
        %v3373 = vsel %vm3368, %v3313, %v3345
        %v3374 = vsel %vm3368, %v3315, %v3347
        %v3375 = vsel %vm3368, %v3317, %v3349
        %v3376 = vsel %vm3368, %v3319, %v3351
        %v3377 = vsel %vm3368, %v3321, %v3353
        %v3378 = vsel %vm3368, %v3323, %v3355
        %v3379 = vsel %vm3368, %v3325, %v3357
        %v3380 = vsel %vm3368, %v3327, %v3359
        %v3381 = vsel %vm3368, %v3329, %v3361
        %v3382 = vsel %vm3368, %v3331, %v3363
        %v3383 = vsel %vm3368, %v3333, %v3365
        %v3384 = vsel %vm3368, %v3335, %v3367
        %v3385 = vsel %vm3368, %v3337, %v3305
        %v3386 = vsel %vm3368, %v3339, %v3307
        %v3387 = vsel %vm3368, %v3341, %v3309
        %v3388 = vsel %vm3368, %v3343, %v3311
        %v3389 = vsel %vm3368, %v3345, %v3313
        %v3390 = vsel %vm3368, %v3347, %v3315
        %v3391 = vsel %vm3368, %v3349, %v3317
        %v3392 = vsel %vm3368, %v3351, %v3319
        %v3393 = vsel %vm3368, %v3353, %v3321
        %v3394 = vsel %vm3368, %v3355, %v3323
        %v3395 = vsel %vm3368, %v3357, %v3325
        %v3396 = vsel %vm3368, %v3359, %v3327
        %v3397 = vsel %vm3368, %v3361, %v3329
        %v3398 = vsel %vm3368, %v3363, %v3331
        %v3399 = vsel %vm3368, %v3365, %v3333
        %v3400 = vsel %vm3368, %v3367, %v3335
        %v3401 = vsel %vm3302, 1, 0
        %v3402 = vsel %vm3303, 1, 0
        %vm3403 = vcmp.eq.s32.totalorder %v3401, 1
        %vm3404 = vcmp.eq.s32.totalorder %v3402, 1
        %v3405 = vsel %vm3403, %v3385, 1.0
        %v3406 = vsel %vm3404, %v3369, 1.0
        %v3407 = vsel %vm3403, %v3386, 1.0
        %v3408 = vsel %vm3404, %v3370, 1.0
        %v3409 = vsel %vm3403, %v3387, 1.0
        %v3410 = vsel %vm3404, %v3371, 1.0
        %v3411 = vsel %vm3403, %v3388, 1.0
        %v3412 = vsel %vm3404, %v3372, 1.0
        %v3413 = vsel %vm3403, %v3389, 1.0
        %v3414 = vsel %vm3404, %v3373, 1.0
        %v3415 = vsel %vm3403, %v3390, 1.0
        %v3416 = vsel %vm3404, %v3374, 1.0
        %v3417 = vsel %vm3403, %v3391, 1.0
        %v3418 = vsel %vm3404, %v3375, 1.0
        %v3419 = vsel %vm3403, %v3392, 1.0
        %v3420 = vsel %vm3404, %v3376, 1.0
        %v3421 = vsel %vm3403, %v3393, 1.0
        %v3422 = vsel %vm3404, %v3377, 1.0
        %v3423 = vsel %vm3403, %v3394, 1.0
        %v3424 = vsel %vm3404, %v3378, 1.0
        %v3425 = vsel %vm3403, %v3395, 1.0
        %v3426 = vsel %vm3404, %v3379, 1.0
        %v3427 = vsel %vm3403, %v3396, 1.0
        %v3428 = vsel %vm3404, %v3380, 1.0
        %v3429 = vsel %vm3403, %v3397, 1.0
        %v3430 = vsel %vm3404, %v3381, 1.0
        %v3431 = vsel %vm3403, %v3398, 1.0
        %v3432 = vsel %vm3404, %v3382, 1.0
        %v3433 = vsel %vm3403, %v3399, 1.0
        %v3434 = vsel %vm3404, %v3383, 1.0
        %v3435 = vsel %vm3403, %v3400, 1.0
        %v3436 = vsel %vm3404, %v3384, 1.0
        %3437 = vrot.lane.b32.xlu0 %v3238, 64
        %v3438 = vpop.permute.xlu0 %3437
        %3439 = vrot.lane.b32.xlu0 %v3240, 64
        %v3440 = vpop.permute.xlu0 %3439
        %3441 = vrot.lane.b32.xlu0 %v3242, 64
        %v3442 = vpop.permute.xlu0 %3441
        %3443 = vrot.lane.b32.xlu0 %v3244, 64
        %v3444 = vpop.permute.xlu0 %3443
        %3445 = vrot.lane.b32.xlu0 %v3246, 64
        %v3446 = vpop.permute.xlu0 %3445
        %3447 = vrot.lane.b32.xlu0 %v3248, 64
        %v3448 = vpop.permute.xlu0 %3447
        %3449 = vrot.lane.b32.xlu0 %v3250, 64
        %v3450 = vpop.permute.xlu0 %3449
        %3451 = vrot.lane.b32.xlu0 %v3252, 64
        %v3452 = vpop.permute.xlu0 %3451
        %3453 = vrot.lane.b32.xlu0 %v3254, 64
        %v3454 = vpop.permute.xlu0 %3453
        %3455 = vrot.lane.b32.xlu0 %v3256, 64
        %v3456 = vpop.permute.xlu0 %3455
        %3457 = vrot.lane.b32.xlu0 %v3258, 64
        %v3458 = vpop.permute.xlu0 %3457
        %3459 = vrot.lane.b32.xlu0 %v3260, 64
        %v3460 = vpop.permute.xlu0 %3459
        %3461 = vrot.lane.b32.xlu0 %v3262, 64
        %v3462 = vpop.permute.xlu0 %3461
        %3463 = vrot.lane.b32.xlu0 %v3264, 64
        %v3464 = vpop.permute.xlu0 %3463
        %3465 = vrot.lane.b32.xlu0 %v3266, 64
        %v3466 = vpop.permute.xlu0 %3465
        %3467 = vrot.lane.b32.xlu0 %v3268, 64
        %v3468 = vpop.permute.xlu0 %3467
        %3469 = vrot.lane.b32.xlu0 %v3239, 64
        %v3470 = vpop.permute.xlu0 %3469
        %3471 = vrot.lane.b32.xlu0 %v3241, 64
        %v3472 = vpop.permute.xlu0 %3471
        %3473 = vrot.lane.b32.xlu0 %v3243, 64
        %v3474 = vpop.permute.xlu0 %3473
        %3475 = vrot.lane.b32.xlu0 %v3245, 64
        %v3476 = vpop.permute.xlu0 %3475
        %3477 = vrot.lane.b32.xlu0 %v3247, 64
        %v3478 = vpop.permute.xlu0 %3477
        %3479 = vrot.lane.b32.xlu0 %v3249, 64
        %v3480 = vpop.permute.xlu0 %3479
        %3481 = vrot.lane.b32.xlu0 %v3251, 64
        %v3482 = vpop.permute.xlu0 %3481
        %3483 = vrot.lane.b32.xlu0 %v3253, 64
        %v3484 = vpop.permute.xlu0 %3483
        %3485 = vrot.lane.b32.xlu0 %v3255, 64
        %v3486 = vpop.permute.xlu0 %3485
        %3487 = vrot.lane.b32.xlu0 %v3257, 64
        %v3488 = vpop.permute.xlu0 %3487
        %3489 = vrot.lane.b32.xlu0 %v3259, 64
        %v3490 = vpop.permute.xlu0 %3489
        %3491 = vrot.lane.b32.xlu0 %v3261, 64
        %v3492 = vpop.permute.xlu0 %3491
        %3493 = vrot.lane.b32.xlu0 %v3263, 64
        %v3494 = vpop.permute.xlu0 %3493
        %3495 = vrot.lane.b32.xlu0 %v3265, 64
        %v3496 = vpop.permute.xlu0 %3495
        %3497 = vrot.lane.b32.xlu0 %v3267, 64
        %v3498 = vpop.permute.xlu0 %3497
        %3499 = vrot.lane.b32.xlu0 %v3269, 64
        %v3500 = vpop.permute.xlu0 %3499
        %v3501 = vsel %vm3368, %v3438, %v3470
        %v3502 = vsel %vm3368, %v3440, %v3472
        %v3503 = vsel %vm3368, %v3442, %v3474
        %v3504 = vsel %vm3368, %v3444, %v3476
        %v3505 = vsel %vm3368, %v3446, %v3478
        %v3506 = vsel %vm3368, %v3448, %v3480
        %v3507 = vsel %vm3368, %v3450, %v3482
        %v3508 = vsel %vm3368, %v3452, %v3484
        %v3509 = vsel %vm3368, %v3454, %v3486
        %v3510 = vsel %vm3368, %v3456, %v3488
        %v3511 = vsel %vm3368, %v3458, %v3490
        %v3512 = vsel %vm3368, %v3460, %v3492
        %v3513 = vsel %vm3368, %v3462, %v3494
        %v3514 = vsel %vm3368, %v3464, %v3496
        %v3515 = vsel %vm3368, %v3466, %v3498
        %v3516 = vsel %vm3368, %v3468, %v3500
        %v3517 = vsel %vm3368, %v3470, %v3438
        %v3518 = vsel %vm3368, %v3472, %v3440
        %v3519 = vsel %vm3368, %v3474, %v3442
        %v3520 = vsel %vm3368, %v3476, %v3444
        %v3521 = vsel %vm3368, %v3478, %v3446
        %v3522 = vsel %vm3368, %v3480, %v3448
        %v3523 = vsel %vm3368, %v3482, %v3450
        %v3524 = vsel %vm3368, %v3484, %v3452
        %v3525 = vsel %vm3368, %v3486, %v3454
        %v3526 = vsel %vm3368, %v3488, %v3456
        %v3527 = vsel %vm3368, %v3490, %v3458
        %v3528 = vsel %vm3368, %v3492, %v3460
        %v3529 = vsel %vm3368, %v3494, %v3462
        %v3530 = vsel %vm3368, %v3496, %v3464
        %v3531 = vsel %vm3368, %v3498, %v3466
        %v3532 = vsel %vm3368, %v3500, %v3468
        %v3533 = vsel %vm3403, %v3517, 0.0
        %v3534 = vsel %vm3404, %v3501, 0.0
        %v3535 = vsel %vm3403, %v3518, 0.0
        %v3536 = vsel %vm3404, %v3502, 0.0
        %v3537 = vsel %vm3403, %v3519, 0.0
        %v3538 = vsel %vm3404, %v3503, 0.0
        %v3539 = vsel %vm3403, %v3520, 0.0
        %v3540 = vsel %vm3404, %v3504, 0.0
        %v3541 = vsel %vm3403, %v3521, 0.0
        %v3542 = vsel %vm3404, %v3505, 0.0
        %v3543 = vsel %vm3403, %v3522, 0.0
        %v3544 = vsel %vm3404, %v3506, 0.0
        %v3545 = vsel %vm3403, %v3523, 0.0
        %v3546 = vsel %vm3404, %v3507, 0.0
        %v3547 = vsel %vm3403, %v3524, 0.0
        %v3548 = vsel %vm3404, %v3508, 0.0
        %v3549 = vsel %vm3403, %v3525, 0.0
        %v3550 = vsel %vm3404, %v3509, 0.0
        %v3551 = vsel %vm3403, %v3526, 0.0
        %v3552 = vsel %vm3404, %v3510, 0.0
        %v3553 = vsel %vm3403, %v3527, 0.0
        %v3554 = vsel %vm3404, %v3511, 0.0
        %v3555 = vsel %vm3403, %v3528, 0.0
        %v3556 = vsel %vm3404, %v3512, 0.0
        %v3557 = vsel %vm3403, %v3529, 0.0
        %v3558 = vsel %vm3404, %v3513, 0.0
        %v3559 = vsel %vm3403, %v3530, 0.0
        %v3560 = vsel %vm3404, %v3514, 0.0
        %v3561 = vsel %vm3403, %v3531, 0.0
        %v3562 = vsel %vm3404, %v3515, 0.0
        %v3563 = vsel %vm3403, %v3532, 0.0
        %v3564 = vsel %vm3404, %v3516, 0.0
        %v3565 = vmul.f32 %v3270, %v3533
        %v3566 = vmul.f32 %v3271, %v3534
        %v3567 = vmul.f32 %v3272, %v3535
        %v3568 = vmul.f32 %v3273, %v3536
        %v3569 = vmul.f32 %v3274, %v3537
        %v3570 = vmul.f32 %v3275, %v3538
        %v3571 = vmul.f32 %v3276, %v3539
        %v3572 = vmul.f32 %v3277, %v3540
        %v3573 = vmul.f32 %v3278, %v3541
        %v3574 = vmul.f32 %v3279, %v3542
        %v3575 = vmul.f32 %v3280, %v3543
        %v3576 = vmul.f32 %v3281, %v3544
        %v3577 = vmul.f32 %v3282, %v3545
        %v3578 = vmul.f32 %v3283, %v3546
        %v3579 = vmul.f32 %v3284, %v3547
        %v3580 = vmul.f32 %v3285, %v3548
        %v3581 = vmul.f32 %v3286, %v3549
        %v3582 = vmul.f32 %v3287, %v3550
        %v3583 = vmul.f32 %v3288, %v3551
        %v3584 = vmul.f32 %v3289, %v3552
        %v3585 = vmul.f32 %v3290, %v3553
        %v3586 = vmul.f32 %v3291, %v3554
        %v3587 = vmul.f32 %v3292, %v3555
        %v3588 = vmul.f32 %v3293, %v3556
        %v3589 = vmul.f32 %v3294, %v3557
        %v3590 = vmul.f32 %v3295, %v3558
        %v3591 = vmul.f32 %v3296, %v3559
        %v3592 = vmul.f32 %v3297, %v3560
        %v3593 = vmul.f32 %v3298, %v3561
        %v3594 = vmul.f32 %v3299, %v3562
        %v3595 = vmul.f32 %v3300, %v3563
        %v3596 = vmul.f32 %v3301, %v3564
        %v3597 = vadd.f32 %v3565, %v3238
        %v3598 = vadd.f32 %v3566, %v3239
        %v3599 = vadd.f32 %v3567, %v3240
        %v3600 = vadd.f32 %v3568, %v3241
        %v3601 = vadd.f32 %v3569, %v3242
        %v3602 = vadd.f32 %v3570, %v3243
        %v3603 = vadd.f32 %v3571, %v3244
        %v3604 = vadd.f32 %v3572, %v3245
        %v3605 = vadd.f32 %v3573, %v3246
        %v3606 = vadd.f32 %v3574, %v3247
        %v3607 = vadd.f32 %v3575, %v3248
        %v3608 = vadd.f32 %v3576, %v3249
        %v3609 = vadd.f32 %v3577, %v3250
        %v3610 = vadd.f32 %v3578, %v3251
        %v3611 = vadd.f32 %v3579, %v3252
        %v3612 = vadd.f32 %v3580, %v3253
        %v3613 = vadd.f32 %v3581, %v3254
        %v3614 = vadd.f32 %v3582, %v3255
        %v3615 = vadd.f32 %v3583, %v3256
        %v3616 = vadd.f32 %v3584, %v3257
        %v3617 = vadd.f32 %v3585, %v3258
        %v3618 = vadd.f32 %v3586, %v3259
        %v3619 = vadd.f32 %v3587, %v3260
        %v3620 = vadd.f32 %v3588, %v3261
        %v3621 = vadd.f32 %v3589, %v3262
        %v3622 = vadd.f32 %v3590, %v3263
        %v3623 = vadd.f32 %v3591, %v3264
        %v3624 = vadd.f32 %v3592, %v3265
        %v3625 = vadd.f32 %v3593, %v3266
        %v3626 = vadd.f32 %v3594, %v3267
        %v3627 = vadd.f32 %v3595, %v3268
        %v3628 = vadd.f32 %v3596, %v3269
        %v3629 = vmul.f32 %v3270, %v3405
        %v3630 = vmul.f32 %v3271, %v3406
        %v3631 = vmul.f32 %v3272, %v3407
        %v3632 = vmul.f32 %v3273, %v3408
        %v3633 = vmul.f32 %v3274, %v3409
        %v3634 = vmul.f32 %v3275, %v3410
        %v3635 = vmul.f32 %v3276, %v3411
        %v3636 = vmul.f32 %v3277, %v3412
        %v3637 = vmul.f32 %v3278, %v3413
        %v3638 = vmul.f32 %v3279, %v3414
        %v3639 = vmul.f32 %v3280, %v3415
        %v3640 = vmul.f32 %v3281, %v3416
        %v3641 = vmul.f32 %v3282, %v3417
        %v3642 = vmul.f32 %v3283, %v3418
        %v3643 = vmul.f32 %v3284, %v3419
        %v3644 = vmul.f32 %v3285, %v3420
        %v3645 = vmul.f32 %v3286, %v3421
        %v3646 = vmul.f32 %v3287, %v3422
        %v3647 = vmul.f32 %v3288, %v3423
        %v3648 = vmul.f32 %v3289, %v3424
        %v3649 = vmul.f32 %v3290, %v3425
        %v3650 = vmul.f32 %v3291, %v3426
        %v3651 = vmul.f32 %v3292, %v3427
        %v3652 = vmul.f32 %v3293, %v3428
        %v3653 = vmul.f32 %v3294, %v3429
        %v3654 = vmul.f32 %v3295, %v3430
        %v3655 = vmul.f32 %v3296, %v3431
        %v3656 = vmul.f32 %v3297, %v3432
        %v3657 = vmul.f32 %v3298, %v3433
        %v3658 = vmul.f32 %v3299, %v3434
        %v3659 = vmul.f32 %v3300, %v3435
        %v3660 = vmul.f32 %v3301, %v3436
        %vm3661 = vcmp.ge.s32.totalorder %v1146, 128
        %vm3662 = vcmp.ge.s32.totalorder %v1147, 128
        %v3663 = vsel %vm3661, 1, 0
        %v3664 = vsel %vm3662, 1, 0
        %vm3665 = vcmp.eq.s32.totalorder %v3663, 1
        %vm3666 = vcmp.eq.s32.totalorder %v3664, 1
        %v3667 = vsel %vm3665, %v3630, 1.0
        %v3668 = vsel %vm3666, %v3629, 1.0
        %v3669 = vsel %vm3665, %v3632, 1.0
        %v3670 = vsel %vm3666, %v3631, 1.0
        %v3671 = vsel %vm3665, %v3634, 1.0
        %v3672 = vsel %vm3666, %v3633, 1.0
        %v3673 = vsel %vm3665, %v3636, 1.0
        %v3674 = vsel %vm3666, %v3635, 1.0
        %v3675 = vsel %vm3665, %v3638, 1.0
        %v3676 = vsel %vm3666, %v3637, 1.0
        %v3677 = vsel %vm3665, %v3640, 1.0
        %v3678 = vsel %vm3666, %v3639, 1.0
        %v3679 = vsel %vm3665, %v3642, 1.0
        %v3680 = vsel %vm3666, %v3641, 1.0
        %v3681 = vsel %vm3665, %v3644, 1.0
        %v3682 = vsel %vm3666, %v3643, 1.0
        %v3683 = vsel %vm3665, %v3646, 1.0
        %v3684 = vsel %vm3666, %v3645, 1.0
        %v3685 = vsel %vm3665, %v3648, 1.0
        %v3686 = vsel %vm3666, %v3647, 1.0
        %v3687 = vsel %vm3665, %v3650, 1.0
        %v3688 = vsel %vm3666, %v3649, 1.0
        %v3689 = vsel %vm3665, %v3652, 1.0
        %v3690 = vsel %vm3666, %v3651, 1.0
        %v3691 = vsel %vm3665, %v3654, 1.0
        %v3692 = vsel %vm3666, %v3653, 1.0
        %v3693 = vsel %vm3665, %v3656, 1.0
        %v3694 = vsel %vm3666, %v3655, 1.0
        %v3695 = vsel %vm3665, %v3658, 1.0
        %v3696 = vsel %vm3666, %v3657, 1.0
        %v3697 = vsel %vm3665, %v3660, 1.0
        %v3698 = vsel %vm3666, %v3659, 1.0
        %v3699 = vsel %vm3665, %v3598, 0.0
        %v3700 = vsel %vm3666, %v3597, 0.0
        %v3701 = vsel %vm3665, %v3600, 0.0
        %v3702 = vsel %vm3666, %v3599, 0.0
        %v3703 = vsel %vm3665, %v3602, 0.0
        %v3704 = vsel %vm3666, %v3601, 0.0
        %v3705 = vsel %vm3665, %v3604, 0.0
        %v3706 = vsel %vm3666, %v3603, 0.0
        %v3707 = vsel %vm3665, %v3606, 0.0
        %v3708 = vsel %vm3666, %v3605, 0.0
        %v3709 = vsel %vm3665, %v3608, 0.0
        %v3710 = vsel %vm3666, %v3607, 0.0
        %v3711 = vsel %vm3665, %v3610, 0.0
        %v3712 = vsel %vm3666, %v3609, 0.0
        %v3713 = vsel %vm3665, %v3612, 0.0
        %v3714 = vsel %vm3666, %v3611, 0.0
        %v3715 = vsel %vm3665, %v3614, 0.0
        %v3716 = vsel %vm3666, %v3613, 0.0
        %v3717 = vsel %vm3665, %v3616, 0.0
        %v3718 = vsel %vm3666, %v3615, 0.0
        %v3719 = vsel %vm3665, %v3618, 0.0
        %v3720 = vsel %vm3666, %v3617, 0.0
        %v3721 = vsel %vm3665, %v3620, 0.0
        %v3722 = vsel %vm3666, %v3619, 0.0
        %v3723 = vsel %vm3665, %v3622, 0.0
        %v3724 = vsel %vm3666, %v3621, 0.0
        %v3725 = vsel %vm3665, %v3624, 0.0
        %v3726 = vsel %vm3666, %v3623, 0.0
        %v3727 = vsel %vm3665, %v3626, 0.0
        %v3728 = vsel %vm3666, %v3625, 0.0
        %v3729 = vsel %vm3665, %v3628, 0.0
        %v3730 = vsel %vm3666, %v3627, 0.0
        %v3731 = vmul.f32 %v3629, %v3699
        %v3732 = vmul.f32 %v3630, %v3700
        %v3733 = vmul.f32 %v3631, %v3701
        %v3734 = vmul.f32 %v3632, %v3702
        %v3735 = vmul.f32 %v3633, %v3703
        %v3736 = vmul.f32 %v3634, %v3704
        %v3737 = vmul.f32 %v3635, %v3705
        %v3738 = vmul.f32 %v3636, %v3706
        %v3739 = vmul.f32 %v3637, %v3707
        %v3740 = vmul.f32 %v3638, %v3708
        %v3741 = vmul.f32 %v3639, %v3709
        %v3742 = vmul.f32 %v3640, %v3710
        %v3743 = vmul.f32 %v3641, %v3711
        %v3744 = vmul.f32 %v3642, %v3712
        %v3745 = vmul.f32 %v3643, %v3713
        %v3746 = vmul.f32 %v3644, %v3714
        %v3747 = vmul.f32 %v3645, %v3715
        %v3748 = vmul.f32 %v3646, %v3716
        %v3749 = vmul.f32 %v3647, %v3717
        %v3750 = vmul.f32 %v3648, %v3718
        %v3751 = vmul.f32 %v3649, %v3719
        %v3752 = vmul.f32 %v3650, %v3720
        %v3753 = vmul.f32 %v3651, %v3721
        %v3754 = vmul.f32 %v3652, %v3722
        %v3755 = vmul.f32 %v3653, %v3723
        %v3756 = vmul.f32 %v3654, %v3724
        %v3757 = vmul.f32 %v3655, %v3725
        %v3758 = vmul.f32 %v3656, %v3726
        %v3759 = vmul.f32 %v3657, %v3727
        %v3760 = vmul.f32 %v3658, %v3728
        %v3761 = vmul.f32 %v3659, %v3729
        %v3762 = vmul.f32 %v3660, %v3730
        %v3763 = vadd.f32 %v3731, %v3597
        %v3764 = vadd.f32 %v3732, %v3598
        %v3765 = vadd.f32 %v3733, %v3599
        %v3766 = vadd.f32 %v3734, %v3600
        %v3767 = vadd.f32 %v3735, %v3601
        %v3768 = vadd.f32 %v3736, %v3602
        %v3769 = vadd.f32 %v3737, %v3603
        %v3770 = vadd.f32 %v3738, %v3604
        %v3771 = vadd.f32 %v3739, %v3605
        %v3772 = vadd.f32 %v3740, %v3606
        %v3773 = vadd.f32 %v3741, %v3607
        %v3774 = vadd.f32 %v3742, %v3608
        %v3775 = vadd.f32 %v3743, %v3609
        %v3776 = vadd.f32 %v3744, %v3610
        %v3777 = vadd.f32 %v3745, %v3611
        %v3778 = vadd.f32 %v3746, %v3612
        %v3779 = vadd.f32 %v3747, %v3613
        %v3780 = vadd.f32 %v3748, %v3614
        %v3781 = vadd.f32 %v3749, %v3615
        %v3782 = vadd.f32 %v3750, %v3616
        %v3783 = vadd.f32 %v3751, %v3617
        %v3784 = vadd.f32 %v3752, %v3618
        %v3785 = vadd.f32 %v3753, %v3619
        %v3786 = vadd.f32 %v3754, %v3620
        %v3787 = vadd.f32 %v3755, %v3621
        %v3788 = vadd.f32 %v3756, %v3622
        %v3789 = vadd.f32 %v3757, %v3623
        %v3790 = vadd.f32 %v3758, %v3624
        %v3791 = vadd.f32 %v3759, %v3625
        %v3792 = vadd.f32 %v3760, %v3626
        %v3793 = vadd.f32 %v3761, %v3627
        %v3794 = vadd.f32 %v3762, %v3628
        %v3795 = vmul.f32 %v3629, %v3667
        %v3796 = vmul.f32 %v3630, %v3668
        %v3797 = vmul.f32 %v3631, %v3669
        %v3798 = vmul.f32 %v3632, %v3670
        %v3799 = vmul.f32 %v3633, %v3671
        %v3800 = vmul.f32 %v3634, %v3672
        %v3801 = vmul.f32 %v3635, %v3673
        %v3802 = vmul.f32 %v3636, %v3674
        %v3803 = vmul.f32 %v3637, %v3675
        %v3804 = vmul.f32 %v3638, %v3676
        %v3805 = vmul.f32 %v3639, %v3677
        %v3806 = vmul.f32 %v3640, %v3678
        %v3807 = vmul.f32 %v3641, %v3679
        %v3808 = vmul.f32 %v3642, %v3680
        %v3809 = vmul.f32 %v3643, %v3681
        %v3810 = vmul.f32 %v3644, %v3682
        %v3811 = vmul.f32 %v3645, %v3683
        %v3812 = vmul.f32 %v3646, %v3684
        %v3813 = vmul.f32 %v3647, %v3685
        %v3814 = vmul.f32 %v3648, %v3686
        %v3815 = vmul.f32 %v3649, %v3687
        %v3816 = vmul.f32 %v3650, %v3688
        %v3817 = vmul.f32 %v3651, %v3689
        %v3818 = vmul.f32 %v3652, %v3690
        %v3819 = vmul.f32 %v3653, %v3691
        %v3820 = vmul.f32 %v3654, %v3692
        %v3821 = vmul.f32 %v3655, %v3693
        %v3822 = vmul.f32 %v3656, %v3694
        %v3823 = vmul.f32 %v3657, %v3695
        %v3824 = vmul.f32 %v3658, %v3696
        %v3825 = vmul.f32 %v3659, %v3697
        %v3826 = vmul.f32 %v3660, %v3698
        %v3827 = vld [vmem:[#allocation2] sm:$0xff]
        %v3828 = vld [vmem:[#allocation2 + $0x8] sm:$0xff]
        %v3829 = vld [vmem:[#allocation2 + $0x10] sm:$0xff]
        %v3830 = vld [vmem:[#allocation2 + $0x18] sm:$0xff]
        %v3831 = vld [vmem:[#allocation2 + $0x20] sm:$0xff]
        %v3832 = vld [vmem:[#allocation2 + $0x28] sm:$0xff]
        %v3833 = vld [vmem:[#allocation2 + $0x30] sm:$0xff]
        %v3834 = vld [vmem:[#allocation2 + $0x38] sm:$0xff]
        %v3835 = vld [vmem:[#allocation2 + $0x40] sm:$0xff]
        %v3836 = vld [vmem:[#allocation2 + $0x48] sm:$0xff]
        %v3837 = vld [vmem:[#allocation2 + $0x50] sm:$0xff]
        %v3838 = vld [vmem:[#allocation2 + $0x58] sm:$0xff]
        %v3839 = vld [vmem:[#allocation2 + $0x60] sm:$0xff]
        %v3840 = vld [vmem:[#allocation2 + $0x68] sm:$0xff]
        %v3841 = vld [vmem:[#allocation2 + $0x70] sm:$0xff]
        %v3842 = vld [vmem:[#allocation2 + $0x78] sm:$0xff]
        %3844 = vset.pattern.permute.xlu0 0
        %3845 = vperm.xlu0 %3844, %v3827
        %v3846 = vpop.permute.xlu0 %3845
        %3849 = vset.pattern.permute.xlu0 0
        %3850 = vperm.xlu0 %3849, %v3828
        %v3851 = vpop.permute.xlu0 %3850
        %3854 = vset.pattern.permute.xlu0 0
        %3855 = vperm.xlu0 %3854, %v3829
        %v3856 = vpop.permute.xlu0 %3855
        %3859 = vset.pattern.permute.xlu0 0
        %3860 = vperm.xlu0 %3859, %v3830
        %v3861 = vpop.permute.xlu0 %3860
        %3864 = vset.pattern.permute.xlu0 0
        %3865 = vperm.xlu0 %3864, %v3831
        %v3866 = vpop.permute.xlu0 %3865
        %3869 = vset.pattern.permute.xlu0 0
        %3870 = vperm.xlu0 %3869, %v3832
        %v3871 = vpop.permute.xlu0 %3870
        %3874 = vset.pattern.permute.xlu0 0
        %3875 = vperm.xlu0 %3874, %v3833
        %v3876 = vpop.permute.xlu0 %3875
        %3879 = vset.pattern.permute.xlu0 0
        %3880 = vperm.xlu0 %3879, %v3834
        %v3881 = vpop.permute.xlu0 %3880
        %3884 = vset.pattern.permute.xlu0 0
        %3885 = vperm.xlu0 %3884, %v3835
        %v3886 = vpop.permute.xlu0 %3885
        %3889 = vset.pattern.permute.xlu0 0
        %3890 = vperm.xlu0 %3889, %v3836
        %v3891 = vpop.permute.xlu0 %3890
        %3894 = vset.pattern.permute.xlu0 0
        %3895 = vperm.xlu0 %3894, %v3837
        %v3896 = vpop.permute.xlu0 %3895
        %3899 = vset.pattern.permute.xlu0 0
        %3900 = vperm.xlu0 %3899, %v3838
        %v3901 = vpop.permute.xlu0 %3900
        %3904 = vset.pattern.permute.xlu0 0
        %3905 = vperm.xlu0 %3904, %v3839
        %v3906 = vpop.permute.xlu0 %3905
        %3909 = vset.pattern.permute.xlu0 0
        %3910 = vperm.xlu0 %3909, %v3840
        %v3911 = vpop.permute.xlu0 %3910
        %3914 = vset.pattern.permute.xlu0 0
        %3915 = vperm.xlu0 %3914, %v3841
        %v3916 = vpop.permute.xlu0 %3915
        %3919 = vset.pattern.permute.xlu0 0
        %3920 = vperm.xlu0 %3919, %v3842
        %v3921 = vpop.permute.xlu0 %3920
        %v3923 = vmul.f32 %v3795, %v3846
        %v3924 = vmul.f32 %v3796, %v3846
        %v3925 = vmul.f32 %v3797, %v3851
        %v3926 = vmul.f32 %v3798, %v3851
        %v3927 = vmul.f32 %v3799, %v3856
        %v3928 = vmul.f32 %v3800, %v3856
        %v3929 = vmul.f32 %v3801, %v3861
        %v3930 = vmul.f32 %v3802, %v3861
        %v3931 = vmul.f32 %v3803, %v3866
        %v3932 = vmul.f32 %v3804, %v3866
        %v3933 = vmul.f32 %v3805, %v3871
        %v3934 = vmul.f32 %v3806, %v3871
        %v3935 = vmul.f32 %v3807, %v3876
        %v3936 = vmul.f32 %v3808, %v3876
        %v3937 = vmul.f32 %v3809, %v3881
        %v3938 = vmul.f32 %v3810, %v3881
        %v3939 = vmul.f32 %v3811, %v3886
        %v3940 = vmul.f32 %v3812, %v3886
        %v3941 = vmul.f32 %v3813, %v3891
        %v3942 = vmul.f32 %v3814, %v3891
        %v3943 = vmul.f32 %v3815, %v3896
        %v3944 = vmul.f32 %v3816, %v3896
        %v3945 = vmul.f32 %v3817, %v3901
        %v3946 = vmul.f32 %v3818, %v3901
        %v3947 = vmul.f32 %v3819, %v3906
        %v3948 = vmul.f32 %v3820, %v3906
        %v3949 = vmul.f32 %v3821, %v3911
        %v3950 = vmul.f32 %v3822, %v3911
        %v3951 = vmul.f32 %v3823, %v3916
        %v3952 = vmul.f32 %v3824, %v3916
        %v3953 = vmul.f32 %v3825, %v3921
        %v3954 = vmul.f32 %v3826, %v3921
        %v3955 = vadd.f32 %v3923, %v3763
        %v3956 = vadd.f32 %v3924, %v3764
        %v3957 = vadd.f32 %v3925, %v3765
        %v3958 = vadd.f32 %v3926, %v3766
        %v3959 = vadd.f32 %v3927, %v3767
        %v3960 = vadd.f32 %v3928, %v3768
        %v3961 = vadd.f32 %v3929, %v3769
        %v3962 = vadd.f32 %v3930, %v3770
        %v3963 = vadd.f32 %v3931, %v3771
        %v3964 = vadd.f32 %v3932, %v3772
        %v3965 = vadd.f32 %v3933, %v3773
        %v3966 = vadd.f32 %v3934, %v3774
        %v3967 = vadd.f32 %v3935, %v3775
        %v3968 = vadd.f32 %v3936, %v3776
        %v3969 = vadd.f32 %v3937, %v3777
        %v3970 = vadd.f32 %v3938, %v3778
        %v3971 = vadd.f32 %v3939, %v3779
        %v3972 = vadd.f32 %v3940, %v3780
        %v3973 = vadd.f32 %v3941, %v3781
        %v3974 = vadd.f32 %v3942, %v3782
        %v3975 = vadd.f32 %v3943, %v3783
        %v3976 = vadd.f32 %v3944, %v3784
        %v3977 = vadd.f32 %v3945, %v3785
        %v3978 = vadd.f32 %v3946, %v3786
        %v3979 = vadd.f32 %v3947, %v3787
        %v3980 = vadd.f32 %v3948, %v3788
        %v3981 = vadd.f32 %v3949, %v3789
        %v3982 = vadd.f32 %v3950, %v3790
        %v3983 = vadd.f32 %v3951, %v3791
        %v3984 = vadd.f32 %v3952, %v3792
        %v3985 = vadd.f32 %v3953, %v3793
        %v3986 = vadd.f32 %v3954, %v3794
        %4003 = vrot.lane.b32.xlu0 %v3956, 1
        %v4004 = vpop.permute.xlu0 %4003
        %4005 = vrot.lane.b32.xlu0 %v3958, 1
        %v4006 = vpop.permute.xlu0 %4005
        %4007 = vrot.lane.b32.xlu0 %v3960, 1
        %v4008 = vpop.permute.xlu0 %4007
        %4009 = vrot.lane.b32.xlu0 %v3962, 1
        %v4010 = vpop.permute.xlu0 %4009
        %4011 = vrot.lane.b32.xlu0 %v3964, 1
        %v4012 = vpop.permute.xlu0 %4011
        %4013 = vrot.lane.b32.xlu0 %v3966, 1
        %v4014 = vpop.permute.xlu0 %4013
        %4015 = vrot.lane.b32.xlu0 %v3968, 1
        %v4016 = vpop.permute.xlu0 %4015
        %4017 = vrot.lane.b32.xlu0 %v3970, 1
        %v4018 = vpop.permute.xlu0 %4017
        %4019 = vrot.lane.b32.xlu0 %v3972, 1
        %v4020 = vpop.permute.xlu0 %4019
        %4021 = vrot.lane.b32.xlu0 %v3974, 1
        %v4022 = vpop.permute.xlu0 %4021
        %4023 = vrot.lane.b32.xlu0 %v3976, 1
        %v4024 = vpop.permute.xlu0 %4023
        %4025 = vrot.lane.b32.xlu0 %v3978, 1
        %v4026 = vpop.permute.xlu0 %4025
        %4027 = vrot.lane.b32.xlu0 %v3980, 1
        %v4028 = vpop.permute.xlu0 %4027
        %4029 = vrot.lane.b32.xlu0 %v3982, 1
        %v4030 = vpop.permute.xlu0 %4029
        %4031 = vrot.lane.b32.xlu0 %v3984, 1
        %v4032 = vpop.permute.xlu0 %4031
        %4033 = vrot.lane.b32.xlu0 %v3986, 1
        %v4034 = vpop.permute.xlu0 %4033
        %vm4051 = vcmask 7168
        %4052 = vst.msk [vmem:[#allocation2] sm:$0xff] %vm4051, %v4004
        %4053 = vst.msk [vmem:[#allocation2 + $0x8] sm:$0xff] %vm4051, %v4006
        %4054 = vst.msk [vmem:[#allocation2 + $0x10] sm:$0xff] %vm4051, %v4008
        %4055 = vst.msk [vmem:[#allocation2 + $0x18] sm:$0xff] %vm4051, %v4010
        %4056 = vst.msk [vmem:[#allocation2 + $0x20] sm:$0xff] %vm4051, %v4012
        %4057 = vst.msk [vmem:[#allocation2 + $0x28] sm:$0xff] %vm4051, %v4014
        %4058 = vst.msk [vmem:[#allocation2 + $0x30] sm:$0xff] %vm4051, %v4016
        %4059 = vst.msk [vmem:[#allocation2 + $0x38] sm:$0xff] %vm4051, %v4018
        %4060 = vst.msk [vmem:[#allocation2 + $0x40] sm:$0xff] %vm4051, %v4020
        %4061 = vst.msk [vmem:[#allocation2 + $0x48] sm:$0xff] %vm4051, %v4022
        %4062 = vst.msk [vmem:[#allocation2 + $0x50] sm:$0xff] %vm4051, %v4024
        %4063 = vst.msk [vmem:[#allocation2 + $0x58] sm:$0xff] %vm4051, %v4026
        %4064 = vst.msk [vmem:[#allocation2 + $0x60] sm:$0xff] %vm4051, %v4028
        %4065 = vst.msk [vmem:[#allocation2 + $0x68] sm:$0xff] %vm4051, %v4030
        %4066 = vst.msk [vmem:[#allocation2 + $0x70] sm:$0xff] %vm4051, %v4032
        %4067 = vst.msk [vmem:[#allocation2 + $0x78] sm:$0xff] %vm4051, %v4034
        %4069 = vset.pattern.permute.xlu0 0
        %4070 = vperm.xlu0 %4069, %v715
        %v4071 = vpop.permute.xlu0 %4070
        %4074 = vset.pattern.permute.xlu0 0
        %4075 = vperm.xlu0 %4074, %v716
        %v4076 = vpop.permute.xlu0 %4075
        %v4078 = vmul.f32 %v4071, %v541
        %v4079 = vmul.f32 %v4071, %v542
        %v4080 = vmul.f32 %v4076, %v543
        %v4081 = vmul.f32 %v4076, %v544
        %4083 = vset.pattern.permute.xlu0 0
        %4084 = vperm.xlu0 %4083, %v712
        %v4085 = vpop.permute.xlu0 %4084
        %4088 = vset.pattern.permute.xlu0 0
        %4089 = vperm.xlu0 %4088, %v713
        %v4090 = vpop.permute.xlu0 %4089
        %v4092 = vmul.f32 %v4085, %v545
        %v4093 = vmul.f32 %v4085, %v546
        %v4094 = vmul.f32 %v4090, %v547
        %v4095 = vmul.f32 %v4090, %v548
        %v4096 = vlaneseq
        %v4097 = vshrl.u32 %v4096, 7
        %v4098 = vsub.s32 4, %v4097
        %v4099 = vrot.slane %v700, %v4098
        %v4100 = vlaneseq
        %v4101 = vshrl.u32 %v4100, 7
        %v4102 = vsub.s32 4, %v4101
        %v4103 = vrot.slane %v702, %v4102
        %v4104 = vmul.f32 %v3955, %v4099
        %v4105 = vmul.f32 %v3956, %v4103
        %v4106 = vmul.f32 %v3957, %v4099
        %v4107 = vmul.f32 %v3958, %v4103
        %v4108 = vadd.f32 %v4078, %v4104
        %v4109 = vadd.f32 %v4079, %v4105
        %v4110 = vadd.f32 %v4080, %v4106
        %v4111 = vadd.f32 %v4081, %v4107
        %v4112 = vlaneseq
        %v4113 = vshrl.u32 %v4112, 7
        %v4114 = vsub.s32 4, %v4113
        %v4115 = vrot.slane %v622, %v4114
        %v4116 = vlaneseq
        %v4117 = vshrl.u32 %v4116, 7
        %v4118 = vsub.s32 4, %v4117
        %v4119 = vrot.slane %v624, %v4118
        %v4120 = vmul.f32 %v3971, %v4115
        %v4121 = vmul.f32 %v3972, %v4119
        %v4122 = vmul.f32 %v3973, %v4115
        %v4123 = vmul.f32 %v3974, %v4119
        %v4124 = vadd.f32 %v4092, %v4120
        %v4125 = vadd.f32 %v4093, %v4121
        %v4126 = vadd.f32 %v4094, %v4122
        %v4127 = vadd.f32 %v4095, %v4123
        %v4128 = vlaneseq
        %v4129 = vshrl.u32 %v4128, 7
        %v4130 = vsub.s32 5, %v4129
        %v4131 = vrot.slane %v700, %v4130
        %v4132 = vlaneseq
        %v4133 = vshrl.u32 %v4132, 7
        %v4134 = vsub.s32 5, %v4133
        %v4135 = vrot.slane %v702, %v4134
        %v4136 = vmul.f32 %v3959, %v4131
        %v4137 = vmul.f32 %v3960, %v4135
        %v4138 = vmul.f32 %v3961, %v4131
        %v4139 = vmul.f32 %v3962, %v4135
        %v4140 = vadd.f32 %v4108, %v4136
        %v4141 = vadd.f32 %v4109, %v4137
        %v4142 = vadd.f32 %v4110, %v4138
        %v4143 = vadd.f32 %v4111, %v4139
        %v4144 = vlaneseq
        %v4145 = vshrl.u32 %v4144, 7
        %v4146 = vsub.s32 5, %v4145
        %v4147 = vrot.slane %v622, %v4146
        %v4148 = vlaneseq
        %v4149 = vshrl.u32 %v4148, 7
        %v4150 = vsub.s32 5, %v4149
        %v4151 = vrot.slane %v624, %v4150
        %v4152 = vmul.f32 %v3975, %v4147
        %v4153 = vmul.f32 %v3976, %v4151
        %v4154 = vmul.f32 %v3977, %v4147
        %v4155 = vmul.f32 %v3978, %v4151
        %v4156 = vadd.f32 %v4124, %v4152
        %v4157 = vadd.f32 %v4125, %v4153
        %v4158 = vadd.f32 %v4126, %v4154
        %v4159 = vadd.f32 %v4127, %v4155
        %v4160 = vlaneseq
        %v4161 = vshrl.u32 %v4160, 7
        %v4162 = vsub.s32 6, %v4161
        %v4163 = vrot.slane %v700, %v4162
        %v4164 = vlaneseq
        %v4165 = vshrl.u32 %v4164, 7
        %v4166 = vsub.s32 6, %v4165
        %v4167 = vrot.slane %v702, %v4166
        %v4168 = vmul.f32 %v3963, %v4163
        %v4169 = vmul.f32 %v3964, %v4167
        %v4170 = vmul.f32 %v3965, %v4163
        %v4171 = vmul.f32 %v3966, %v4167
        %v4172 = vadd.f32 %v4140, %v4168
        %v4173 = vadd.f32 %v4141, %v4169
        %v4174 = vadd.f32 %v4142, %v4170
        %v4175 = vadd.f32 %v4143, %v4171
        %v4176 = vlaneseq
        %v4177 = vshrl.u32 %v4176, 7
        %v4178 = vsub.s32 6, %v4177
        %v4179 = vrot.slane %v622, %v4178
        %v4180 = vlaneseq
        %v4181 = vshrl.u32 %v4180, 7
        %v4182 = vsub.s32 6, %v4181
        %v4183 = vrot.slane %v624, %v4182
        %v4184 = vmul.f32 %v3979, %v4179
        %v4185 = vmul.f32 %v3980, %v4183
        %v4186 = vmul.f32 %v3981, %v4179
        %v4187 = vmul.f32 %v3982, %v4183
        %v4188 = vadd.f32 %v4156, %v4184
        %v4189 = vadd.f32 %v4157, %v4185
        %v4190 = vadd.f32 %v4158, %v4186
        %v4191 = vadd.f32 %v4159, %v4187
        %v4192 = vlaneseq
        %v4193 = vshrl.u32 %v4192, 7
        %v4194 = vsub.s32 7, %v4193
        %v4195 = vrot.slane %v700, %v4194
        %v4196 = vlaneseq
        %v4197 = vshrl.u32 %v4196, 7
        %v4198 = vsub.s32 7, %v4197
        %v4199 = vrot.slane %v702, %v4198
        %v4200 = vmul.f32 %v3967, %v4195
        %v4201 = vmul.f32 %v3968, %v4199
        %v4202 = vmul.f32 %v3969, %v4195
        %v4203 = vmul.f32 %v3970, %v4199
        %v4204 = vadd.f32 %v4172, %v4200
        %v4205 = vadd.f32 %v4173, %v4201
        %v4206 = vadd.f32 %v4174, %v4202
        %v4207 = vadd.f32 %v4175, %v4203
        %v4208 = vlaneseq
        %v4209 = vshrl.u32 %v4208, 7
        %v4210 = vsub.s32 7, %v4209
        %v4211 = vrot.slane %v622, %v4210
        %v4212 = vlaneseq
        %v4213 = vshrl.u32 %v4212, 7
        %v4214 = vsub.s32 7, %v4213
        %v4215 = vrot.slane %v624, %v4214
        %v4216 = vmul.f32 %v3983, %v4211
        %v4217 = vmul.f32 %v3984, %v4215
        %v4218 = vmul.f32 %v3985, %v4211
        %v4219 = vmul.f32 %v3986, %v4215
        %v4220 = vadd.f32 %v4188, %v4216
        %v4221 = vadd.f32 %v4189, %v4217
        %v4222 = vadd.f32 %v4190, %v4218
        %v4223 = vadd.f32 %v4191, %v4219
        %v4224 = vpack.c.bf16 %v4206, %v4204
        %v4225 = vpack.c.bf16 %v4207, %v4205
        %v4228 = vunpack.c.l.b16 %v4224
        %v4229 = vunpack.c.l.b16 %v4225
        %v4230 = vunpack.c.h.b16 %v4224
        %v4231 = vunpack.c.h.b16 %v4225
        %v4232 = vpack.c.b16 %v4229, %v4228
        %v4233 = vpack.c.b16 %v4231, %v4230
        %4236 = vst [vmem:[%s483] sm:$0xff] %v4232
        %4237 = vst [vmem:[%s483 + $0x8] sm:$0xff] %v4233
        %v4238 = vpack.c.bf16 %v4222, %v4220
        %v4239 = vpack.c.bf16 %v4223, %v4221
        %v4242 = vunpack.c.l.b16 %v4238
        %v4243 = vunpack.c.l.b16 %v4239
        %v4244 = vunpack.c.h.b16 %v4238
        %v4245 = vunpack.c.h.b16 %v4239
        %v4246 = vpack.c.b16 %v4243, %v4242
        %v4247 = vpack.c.b16 %v4245, %v4244
        %4250 = vst [vmem:[%s490] sm:$0xff] %v4246
        %4251 = vst [vmem:[%s490 + $0x8] sm:$0xff] %v4247
        %s4252 = sand.u32 %s220, 1
        %s4253 = scalar_lea.sflag [#allocation6], %s4252
        %s4254 = sand.u32 %s220, 1
        %s4255 = smul.addr %s4254, 16
        %s4256 = scalar_lea.vmem [#allocation5], %s4255
        %s4257 = sand.u32 %s250, 1
        %s4258 = scalar_lea.sflag [#allocation8], %s4257
        %s4259 = sand.u32 %s250, 1
        %s4260 = smul.addr %s4259, 16
        %s4261 = scalar_lea.vmem [#allocation7], %s4260
        // Predicated region
        $region125: #{tpu_custom_call.1} parent=111 // pred_check
          %p4262 = pneg %p230
        $region126: #{tpu_custom_call.1} parent=111 // pred_check_branch
          %4264 = sbr.rel (%p4262) target = $region128
        $region127: #{tpu_custom_call.1} parent=111 // pred_region
          %s4265 = smul.u32 2, %s32
          %s4267 = ssub.s32 256, 256
          %4268 = vsyncadd %s4253, %s4267
          %s4269 = smul.addr %s30, 8
          %s4270 = sadd.s32 %s4265, %s4269
          %s4271 = smul.addr %s31, 16
          %s4272 = sadd.s32 %s4270, %s4271
          %s4273 = smul.addr %s4272, 64
          %s4274 = scalar_lea.hbm %s6, %s4273
          %s4275 = sshll.u32 %s4256, 4
          %s4276 = int_to_ptr.vmem [resolvable:$true] %s4275
          %4281 = dma.vmem_to_hbm [thread:$0]  %s4276, 256, %s4274, %s4253, 128, 256, 8
        $region128: #{tpu_custom_call.1} parent=111 // pred_fallthru
          _
        // Predicated region
        $region129: #{tpu_custom_call.1} parent=111 // pred_check
          %p4282 = pneg %p260
        $region130: #{tpu_custom_call.1} parent=111 // pred_check_branch
          %4284 = sbr.rel (%p4282) target = $region132
        $region131: #{tpu_custom_call.1} parent=111 // pred_region
          %s4285 = smul.u32 2, %s32
          %s4287 = ssub.s32 256, 256
          %4288 = vsyncadd %s4258, %s4287
          %s4289 = smul.addr %s30, 8
          %s4290 = sadd.s32 %s4285, %s4289
          %s4291 = smul.addr %s31, 16
          %s4292 = sadd.s32 %s4290, %s4291
          %s4293 = smul.addr %s4292, 64
          %s4294 = scalar_lea.hbm %s7, %s4293
          %s4295 = sshll.u32 %s4261, 4
          %s4296 = int_to_ptr.vmem [resolvable:$true] %s4295
          %4301 = dma.vmem_to_hbm [thread:$0]  %s4296, 256, %s4294, %s4258, 128, 256, 8
        $region132: #{tpu_custom_call.1} parent=111 // pred_fallthru
          _
      $region112: #{tpu_custom_call.1} parent=5 // pred_fallthru
        _
      %p4302 = scmp.le.s32.totalorder 2, %s20
      // Predicated region
      $region133: #{tpu_custom_call.1} parent=5 // pred_check
        %p4303 = pneg %p4302
      $region134: #{tpu_custom_call.1} parent=5 // pred_check_branch
        %4305 = sbr.rel (%p4303) target = $region136
      $region135: #{tpu_custom_call.1} parent=5 // pred_region
        %s4306 = ssub.s32 %s20, 2
        // Predicated region
        $region137: #{tpu_custom_call.1} parent=135 // pred_check
          %p4307 = pneg %p236
        $region138: #{tpu_custom_call.1} parent=135 // pred_check_branch
          %4309 = sbr.rel (%p4307) target = $region140
        $region139: #{tpu_custom_call.1} parent=135 // pred_region
          %s4310 = sand.u32 %s221, 1
          %s4311 = scalar_lea.sflag [#allocation6], %s4310
          %s4312 = sand.u32 %s221, 1
          %s4313 = smul.addr %s4312, 16
          %s4314 = scalar_lea.vmem [#allocation5], %s4313
          %4315 = dma.done %s4311, 256
        $region140: #{tpu_custom_call.1} parent=135 // pred_fallthru
          _
        // Predicated region
        $region141: #{tpu_custom_call.1} parent=135 // pred_check
          %p4316 = pneg %p266
        $region142: #{tpu_custom_call.1} parent=135 // pred_check_branch
          %4318 = sbr.rel (%p4316) target = $region144
        $region143: #{tpu_custom_call.1} parent=135 // pred_region
          %s4319 = sand.u32 %s251, 1
          %s4320 = scalar_lea.sflag [#allocation8], %s4319
          %s4321 = sand.u32 %s251, 1
          %s4322 = smul.addr %s4321, 16
          %s4323 = scalar_lea.vmem [#allocation7], %s4322
          %4324 = dma.done %s4320, 256
        $region144: #{tpu_custom_call.1} parent=135 // pred_fallthru
          _
      $region136: #{tpu_custom_call.1} parent=5 // pred_fallthru
        _
    $region6: #{tpu_custom_call.1} parent=1 // loop_footer
      %s24 = sadd.s32 1, %s20
    $region7: #{tpu_custom_call.1} parent=1 // loop_footer_branch
      %19 = sbr.rel target = $region3
    $region8: #{tpu_custom_call.1} parent=1 // loop_exit
      _
    %4325 = vsyncpa [#allocation6], 1
    %s4326 = scalar_lea.sflag [#allocation6], 1
    %4327 = vsyncpa %s4326, 1
    %4328 = vsyncpa [#allocation8], 1
    %s4329 = scalar_lea.sflag [#allocation8], 1
    %4330 = vsyncpa %s4329, 1

</llo_original>
